<compile_context>
chip_gen: v7x
topology: tpu7x:2x2x1
jax: 0.10.0
libtpu: 0.0.40
codegen_flags: <defaults>
</compile_context>

<pallas_src>
import functools

import jax
import jax.numpy as jnp
from jax.experimental import pallas as pl
from jax.experimental.pallas import tpu as pltpu


def _adapter_kernel(x_ref, w1_ref, w2_ref, o_ref, pad_ref, *,
                    D, H, W, C, K, residual, alpha):
    """Fused conv1 -> ReLU -> conv2 (-> + residual) for one batch element.

    x_ref   : (1, D, H, W*C)    input slab (W and C folded into the lane axis)
    w*_ref  : (K, K, W*C, W*C)  banded weights (kw taps + W padding folded in)
    o_ref   : (1, D, H, W*C)    output slab
    pad_ref : (Dp*Hp, W*C) f32 VMEM scratch = zero-padded volume, flattened
        over (depth, height) so every conv tap is a plain row shift.  Reused
        as the padded input of BOTH convolutions.
    """
    p = K // 2
    Hp = H + 2 * p
    WC = W * C
    rows = (D + 2 * p) * Hp            # scratch rows (padded volume)
    R = (D - 1) * Hp + H               # row-window count covering all outputs

    # ---- in-kernel 'same' padding of the input (no jnp.pad / extra HBM pass).
    # Zero every step: padding rows must be zero and scratch is not guaranteed
    # initialized on a core that never ran grid step 0 (megacore sharding).
    pad_ref[...] = jnp.zeros((rows, WC), jnp.float32)
    for d in range(D):
        pad_ref[pl.ds((d + p) * Hp + p, H), :] = (
            x_ref[0, d, :, :].astype(jnp.float32))

    def conv(w_ref):
        # out[r] = sum_{kd,kh} pad[r + kd*Hp + kh] @ Wb[kd, kh]
        # (kw taps and W-direction zero padding live inside Wb's band structure)
        acc = jnp.zeros((R, WC), jnp.float32)
        for kd in range(K):
            for kh in range(K):
                a = pad_ref[pl.ds(kd * Hp + kh, R), :]
                acc = acc + jnp.dot(a, w_ref[kd, kh],
                                    preferred_element_type=jnp.float32)
        return acc

    # ---- conv1; ReLU fused into the scatter back into the SAME scratch ----
    # (h1 is a fully materialized value before pad_ref is overwritten, and the
    #  padding rows of pad_ref stay zero, so reuse is safe.)
    h1 = conv(w1_ref)
    for d in range(D):
        pad_ref[pl.ds((d + p) * Hp + p, H), :] = jnp.maximum(
            h1[d * Hp:d * Hp + H, :], 0.0)

    # ---- conv2 (+ optional residual) straight to the output block ----
    out = conv(w2_ref)
    for d in range(D):
        res = out[d * Hp:d * Hp + H, :]
        if residual:
            if alpha != 1.0:
                res = res * alpha
            res = x_ref[0, d, :, :].astype(jnp.float32) + res
        o_ref[0, d, :, :] = res.astype(o_ref.dtype)


def _band_weights(w, W):
    """Fold the kw taps and the W-direction 'same' zero padding of a
    (K, K, K, Cin, Cout) conv weight into block-banded matrices of shape
    (K, K, W*Cin, W*Cout)."""
    K = w.shape[0]
    Ci, Co = w.shape[3], w.shape[4]
    p = K // 2
    wb = jnp.zeros((K, K, W * Ci, W * Co), dtype=w.dtype)
    for w_out in range(W):
        for kw in range(K):
            w_in = w_out + kw - p
            if 0 <= w_in < W:
                wb = wb.at[:, :, w_in * Ci:(w_in + 1) * Ci,
                           w_out * Co:(w_out + 1) * Co].set(w[:, :, kw])
    return wb


def spatial_adapter_forward(x_ncdhw, w1, w2, *, residual=False, alpha=1.0):
    """x_ncdhw: (N, C, D, H, W) PyTorch layout; w1/w2: (K, K, K, C, C) DHWIO."""
    N, C, D, H, W = x_ncdhw.shape
    K = w1.shape[0]
    p = K // 2
    WC = W * C

    # Channels-last, with W folded into the lane axis (lane-dense blocks).
    x = jnp.transpose(x_ncdhw, (0, 2, 3, 4, 1)).reshape(N, D, H, WC)
    w1b = _band_weights(w1, W)
    w2b = _band_weights(w2, W)

    rows = (D + 2 * p) * (H + 2 * p)
    kernel = functools.partial(_adapter_kernel, D=D, H=H, W=W, C=C, K=K,
                               residual=residual, alpha=float(alpha))

    # TODO(synk): for large volumes (e.g. 96^3 x 48) tile D with halo blocks
    # (and tile W for very wide rows, since the banded weight is O((W*C)^2))
    # instead of keeping the whole padded volume and banded weights resident
    # in VMEM; mandatory on v7x's 64 MiB VMEM.
    out = pl.pallas_call(
        kernel,
        out_shape=jax.ShapeDtypeStruct((N, D, H, WC), x_ncdhw.dtype),
        grid=(N,),
        in_specs=[
            pl.BlockSpec((1, D, H, WC), lambda n: (n, 0, 0, 0)),
            pl.BlockSpec((K, K, WC, WC), lambda n: (0, 0, 0, 0)),
            pl.BlockSpec((K, K, WC, WC), lambda n: (0, 0, 0, 0)),
        ],
        out_specs=pl.BlockSpec((1, D, H, WC), lambda n: (n, 0, 0, 0)),
        scratch_shapes=[
            pltpu.VMEM((rows, WC), jnp.float32),
        ],
        compiler_params=pltpu.CompilerParams(
            dimension_semantics=("parallel",)),
    )(x, w1b, w2b)

    out = out.reshape(N, D, H, W, C)
    return jnp.transpose(out, (0, 4, 1, 2, 3))


class SpatialAdapterPallas:
    """JAX/Pallas port of fseft SpatialAdapter (forward only)."""

    def __init__(self, feature_size=48, residual=False, adapter_kernel_size=3,
                 key=jax.random.PRNGKey(0)):
        self.feature_size = feature_size
        self.residual = residual
        self.alpha_residual = 1.0
        K = adapter_kernel_size
        # conv1: deterministic synthetic init (PyTorch uses kaiming-uniform);
        # conv2: zeros, exactly like torch.nn.init.zeros_.
        # Weight layout: (kD, kH, kW, Cin, Cout).
        self.w1 = 0.05 * jax.random.normal(
            key, (K, K, K, feature_size, feature_size), dtype=jnp.float32)
        self.w2 = jnp.zeros(
            (K, K, K, feature_size, feature_size), dtype=jnp.float32)

    def __call__(self, x_ncdhw):
        return spatial_adapter_forward(x_ncdhw, self.w1, self.w2,
                                       residual=self.residual,
                                       alpha=self.alpha_residual)


def _ref_conv(x_cl, w, relu=False):
    """Pure-JAX channels-last 'same' conv reference."""
    y = jax.lax.conv_general_dilated(
        x_cl, w, window_strides=(1, 1, 1), padding="SAME",
        dimension_numbers=("NDHWC", "DHWIO", "NDHWC"),
        precision=jax.lax.Precision.HIGHEST)
    return jnp.maximum(y, 0.0) if relu else y


if __name__ == "__main__":
    key = jax.random.PRNGKey(0)
    k_x, k_w1, k_w2 = jax.random.split(key, 3)

    # Small shapes: batch=2, channels=16 (so W*C = 128 = one lane tile),
    # spatial volume D=4, H=8, W=8. PyTorch layout (N, C, D, H, W).
    N, C, D, H, W = 2, 16, 4, 8, 8
    x = jax.random.normal(k_x, (N, C, D, H, W), dtype=jnp.float32)
    x_cl = jnp.transpose(x, (0, 2, 3, 4, 1))

    adapter = SpatialAdapterPallas(feature_size=C, residual=False,
                                   adapter_kernel_size=3, key=k_w1)

    # (1) Exercise the full fused path with a non-zero conv2 + residual.
    w2_rand = 0.05 * jax.random.normal(k_w2, adapter.w2.shape, jnp.float32)
    got = jax.block_until_ready(
        spatial_adapter_forward(x, adapter.w1, w2_rand,
                                residual=True, alpha=1.0))
    want_cl = x_cl + _ref_conv(_ref_conv(x_cl, adapter.w1, relu=True), w2_rand)
    want = jnp.transpose(want_cl, (0, 4, 1, 2, 3))
    assert got.shape == x.shape
    assert jnp.allclose(got, want, rtol=5e-2, atol=5e-2), "fused adapter mismatch"

    # (2) Module forward exactly as specified (conv2 is zero-initialized).
    out = jax.block_until_ready(adapter(x))
    ref = jnp.transpose(
        _ref_conv(_ref_conv(x_cl, adapter.w1, relu=True), adapter.w2),
        (0, 4, 1, 2, 3))
    assert out.shape == (N, C, D, H, W)
    assert jnp.allclose(out, ref, rtol=5e-2, atol=5e-2), "adapter mismatch"

    print("KERNEL_OK")
</pallas_src>

<mosaic_0001>
module attributes {stable_mosaic.version = 11 : i64} {
  func.func @_adapter_kernel(%arg0: i32, %arg1: memref<1x4x8x128xf32, #tpu.memory_space<vmem>>, %arg2: memref<3x3x128x128xf32, #tpu.memory_space<vmem>>, %arg3: memref<3x3x128x128xf32, #tpu.memory_space<vmem>>, %arg4: memref<1x4x8x128xf32, #tpu.memory_space<vmem>>, %arg5: memref<60x128xf32, #tpu.memory_space<vmem>>) attributes {dimension_semantics = [#tpu.dimension_semantics<parallel>], iteration_bounds = array<i64: 2>, scalar_prefetch = 0 : i64, scratch_operands = 1 : i64, tpu.core_type = #tpu.core_type<tc>, window_params = [{transform_indices = @transform_0, window_bounds = array<i64: 1, 4, 8, 128>}, {pipeline_mode = #tpu.pipeline_mode<synchronous>, transform_indices = @transform_1, window_bounds = array<i64: 3, 3, 128, 128>}, {pipeline_mode = #tpu.pipeline_mode<synchronous>, transform_indices = @transform_2, window_bounds = array<i64: 3, 3, 128, 128>}, {transform_indices = @transform_3, window_bounds = array<i64: 1, 4, 8, 128>}]} {
    %cst = arith.constant 0.000000e+00 : f32
    %0 = vector.broadcast %cst : f32 to vector<60x128xf32>
    %c0 = arith.constant 0 : index
    %c0_0 = arith.constant 0 : index
    %1 = vector.load %arg5[%c0, %c0_0] : memref<60x128xf32, #tpu.memory_space<vmem>>, vector<60x128xf32>
    tpu.vector_store %arg5[%c0, %c0_0], %0 {strides = array<i32>} : memref<60x128xf32, #tpu.memory_space<vmem>>, vector<60x128xf32>,
    %c0_1 = arith.constant 0 : index
    %c0_2 = arith.constant 0 : index
    %c0_3 = arith.constant 0 : index
    %c0_4 = arith.constant 0 : index
    %2 = vector.load %arg1[%c0_1, %c0_2, %c0_3, %c0_4] : memref<1x4x8x128xf32, #tpu.memory_space<vmem>>, vector<1x1x8x128xf32>
    %3 = vector.shape_cast %2 : vector<1x1x8x128xf32> to vector<8x128xf32>
    %c11 = arith.constant 11 : index
    %c0_5 = arith.constant 0 : index
    %4 = vector.load %arg5[%c11, %c0_5] : memref<60x128xf32, #tpu.memory_space<vmem>>, vector<8x128xf32>
    tpu.vector_store %arg5[%c11, %c0_5], %3 {strides = array<i32>} : memref<60x128xf32, #tpu.memory_space<vmem>>, vector<8x128xf32>,
    %c0_6 = arith.constant 0 : index
    %c1 = arith.constant 1 : index
    %c0_7 = arith.constant 0 : index
    %c0_8 = arith.constant 0 : index
    %5 = vector.load %arg1[%c0_6, %c1, %c0_7, %c0_8] : memref<1x4x8x128xf32, #tpu.memory_space<vmem>>, vector<1x1x8x128xf32>
    %6 = vector.shape_cast %5 : vector<1x1x8x128xf32> to vector<8x128xf32>
    %c21 = arith.constant 21 : index
    %c0_9 = arith.constant 0 : index
    %7 = vector.load %arg5[%c21, %c0_9] : memref<60x128xf32, #tpu.memory_space<vmem>>, vector<8x128xf32>
    tpu.vector_store %arg5[%c21, %c0_9], %6 {strides = array<i32>} : memref<60x128xf32, #tpu.memory_space<vmem>>, vector<8x128xf32>,
    %c0_10 = arith.constant 0 : index
    %c2 = arith.constant 2 : index
    %c0_11 = arith.constant 0 : index
    %c0_12 = arith.constant 0 : index
    %8 = vector.load %arg1[%c0_10, %c2, %c0_11, %c0_12] : memref<1x4x8x128xf32, #tpu.memory_space<vmem>>, vector<1x1x8x128xf32>
    %9 = vector.shape_cast %8 : vector<1x1x8x128xf32> to vector<8x128xf32>
    %c31 = arith.constant 31 : index
    %c0_13 = arith.constant 0 : index
    %10 = vector.load %arg5[%c31, %c0_13] : memref<60x128xf32, #tpu.memory_space<vmem>>, vector<8x128xf32>
    tpu.vector_store %arg5[%c31, %c0_13], %9 {strides = array<i32>} : memref<60x128xf32, #tpu.memory_space<vmem>>, vector<8x128xf32>,
    %c0_14 = arith.constant 0 : index
    %c3 = arith.constant 3 : index
    %c0_15 = arith.constant 0 : index
    %c0_16 = arith.constant 0 : index
    %11 = vector.load %arg1[%c0_14, %c3, %c0_15, %c0_16] : memref<1x4x8x128xf32, #tpu.memory_space<vmem>>, vector<1x1x8x128xf32>
    %12 = vector.shape_cast %11 : vector<1x1x8x128xf32> to vector<8x128xf32>
    %c41 = arith.constant 41 : index
    %c0_17 = arith.constant 0 : index
    %13 = vector.load %arg5[%c41, %c0_17] : memref<60x128xf32, #tpu.memory_space<vmem>>, vector<8x128xf32>
    tpu.vector_store %arg5[%c41, %c0_17], %12 {strides = array<i32>} : memref<60x128xf32, #tpu.memory_space<vmem>>, vector<8x128xf32>,
    %cst_18 = arith.constant 0.000000e+00 : f32
    %14 = vector.broadcast %cst_18 : f32 to vector<38x128xf32>
    %c0_19 = arith.constant 0 : index
    %c0_20 = arith.constant 0 : index
    %15 = vector.load %arg5[%c0_19, %c0_20] : memref<60x128xf32, #tpu.memory_space<vmem>>, vector<38x128xf32>
    %c0_21 = arith.constant 0 : index
    %c0_22 = arith.constant 0 : index
    %c0_23 = arith.constant 0 : index
    %c0_24 = arith.constant 0 : index
    %16 = vector.load %arg2[%c0_21, %c0_22, %c0_23, %c0_24] : memref<3x3x128x128xf32, #tpu.memory_space<vmem>>, vector<1x1x128x128xf32>
    %17 = vector.shape_cast %16 : vector<1x1x128x128xf32> to vector<128x128xf32>
    %cst_25 = arith.constant dense<0.000000e+00> : vector<38x128xf32>
    %18 = tpu.matmul %15, %17, %cst_25 {dimension_numbers = #tpu.dot_dimension_numbers<[1], [0], [0], [1], [0, 0, 1, 1], [], []>} : vector<38x128xf32>, vector<128x128xf32>, vector<38x128xf32> -> vector<38x128xf32>
    %19 = arith.addf %14, %18 : vector<38x128xf32>
    %c1_26 = arith.constant 1 : index
    %c0_27 = arith.constant 0 : index
    %20 = vector.load %arg5[%c1_26, %c0_27] : memref<60x128xf32, #tpu.memory_space<vmem>>, vector<38x128xf32>
    %c0_28 = arith.constant 0 : index
    %c1_29 = arith.constant 1 : index
    %c0_30 = arith.constant 0 : index
    %c0_31 = arith.constant 0 : index
    %21 = vector.load %arg2[%c0_28, %c1_29, %c0_30, %c0_31] : memref<3x3x128x128xf32, #tpu.memory_space<vmem>>, vector<1x1x128x128xf32>
    %22 = vector.shape_cast %21 : vector<1x1x128x128xf32> to vector<128x128xf32>
    %cst_32 = arith.constant dense<0.000000e+00> : vector<38x128xf32>
    %23 = tpu.matmul %20, %22, %cst_32 {dimension_numbers = #tpu.dot_dimension_numbers<[1], [0], [0], [1], [0, 0, 1, 1], [], []>} : vector<38x128xf32>, vector<128x128xf32>, vector<38x128xf32> -> vector<38x128xf32>
    %24 = arith.addf %19, %23 : vector<38x128xf32>
    %c2_33 = arith.constant 2 : index
    %c0_34 = arith.constant 0 : index
    %25 = vector.load %arg5[%c2_33, %c0_34] : memref<60x128xf32, #tpu.memory_space<vmem>>, vector<38x128xf32>
    %c0_35 = arith.constant 0 : index
    %c2_36 = arith.constant 2 : index
    %c0_37 = arith.constant 0 : index
    %c0_38 = arith.constant 0 : index
    %26 = vector.load %arg2[%c0_35, %c2_36, %c0_37, %c0_38] : memref<3x3x128x128xf32, #tpu.memory_space<vmem>>, vector<1x1x128x128xf32>
    %27 = vector.shape_cast %26 : vector<1x1x128x128xf32> to vector<128x128xf32>
    %cst_39 = arith.constant dense<0.000000e+00> : vector<38x128xf32>
    %28 = tpu.matmul %25, %27, %cst_39 {dimension_numbers = #tpu.dot_dimension_numbers<[1], [0], [0], [1], [0, 0, 1, 1], [], []>} : vector<38x128xf32>, vector<128x128xf32>, vector<38x128xf32> -> vector<38x128xf32>
    %29 = arith.addf %24, %28 : vector<38x128xf32>
    %c10 = arith.constant 10 : index
    %c0_40 = arith.constant 0 : index
    %30 = vector.load %arg5[%c10, %c0_40] : memref<60x128xf32, #tpu.memory_space<vmem>>, vector<38x128xf32>
    %c1_41 = arith.constant 1 : index
    %c0_42 = arith.constant 0 : index
    %c0_43 = arith.constant 0 : index
    %c0_44 = arith.constant 0 : index
    %31 = vector.load %arg2[%c1_41, %c0_42, %c0_43, %c0_44] : memref<3x3x128x128xf32, #tpu.memory_space<vmem>>, vector<1x1x128x128xf32>
    %32 = vector.shape_cast %31 : vector<1x1x128x128xf32> to vector<128x128xf32>
    %cst_45 = arith.constant dense<0.000000e+00> : vector<38x128xf32>
    %33 = tpu.matmul %30, %32, %cst_45 {dimension_numbers = #tpu.dot_dimension_numbers<[1], [0], [0], [1], [0, 0, 1, 1], [], []>} : vector<38x128xf32>, vector<128x128xf32>, vector<38x128xf32> -> vector<38x128xf32>
    %34 = arith.addf %29, %33 : vector<38x128xf32>
    %c11_46 = arith.constant 11 : index
    %c0_47 = arith.constant 0 : index
    %35 = vector.load %arg5[%c11_46, %c0_47] : memref<60x128xf32, #tpu.memory_space<vmem>>, vector<38x128xf32>
    %c1_48 = arith.constant 1 : index
    %c1_49 = arith.constant 1 : index
    %c0_50 = arith.constant 0 : index
    %c0_51 = arith.constant 0 : index
    %36 = vector.load %arg2[%c1_48, %c1_49, %c0_50, %c0_51] : memref<3x3x128x128xf32, #tpu.memory_space<vmem>>, vector<1x1x128x128xf32>
    %37 = vector.shape_cast %36 : vector<1x1x128x128xf32> to vector<128x128xf32>
    %cst_52 = arith.constant dense<0.000000e+00> : vector<38x128xf32>
    %38 = tpu.matmul %35, %37, %cst_52 {dimension_numbers = #tpu.dot_dimension_numbers<[1], [0], [0], [1], [0, 0, 1, 1], [], []>} : vector<38x128xf32>, vector<128x128xf32>, vector<38x128xf32> -> vector<38x128xf32>
    %39 = arith.addf %34, %38 : vector<38x128xf32>
    %c12 = arith.constant 12 : index
    %c0_53 = arith.constant 0 : index
    %40 = vector.load %arg5[%c12, %c0_53] : memref<60x128xf32, #tpu.memory_space<vmem>>, vector<38x128xf32>
    %c1_54 = arith.constant 1 : index
    %c2_55 = arith.constant 2 : index
    %c0_56 = arith.constant 0 : index
    %c0_57 = arith.constant 0 : index
    %41 = vector.load %arg2[%c1_54, %c2_55, %c0_56, %c0_57] : memref<3x3x128x128xf32, #tpu.memory_space<vmem>>, vector<1x1x128x128xf32>
    %42 = vector.shape_cast %41 : vector<1x1x128x128xf32> to vector<128x128xf32>
    %cst_58 = arith.constant dense<0.000000e+00> : vector<38x128xf32>
    %43 = tpu.matmul %40, %42, %cst_58 {dimension_numbers = #tpu.dot_dimension_numbers<[1], [0], [0], [1], [0, 0, 1, 1], [], []>} : vector<38x128xf32>, vector<128x128xf32>, vector<38x128xf32> -> vector<38x128xf32>
    %44 = arith.addf %39, %43 : vector<38x128xf32>
    %c20 = arith.constant 20 : index
    %c0_59 = arith.constant 0 : index
    %45 = vector.load %arg5[%c20, %c0_59] : memref<60x128xf32, #tpu.memory_space<vmem>>, vector<38x128xf32>
    %c2_60 = arith.constant 2 : index
    %c0_61 = arith.constant 0 : index
    %c0_62 = arith.constant 0 : index
    %c0_63 = arith.constant 0 : index
    %46 = vector.load %arg2[%c2_60, %c0_61, %c0_62, %c0_63] : memref<3x3x128x128xf32, #tpu.memory_space<vmem>>, vector<1x1x128x128xf32>
    %47 = vector.shape_cast %46 : vector<1x1x128x128xf32> to vector<128x128xf32>
    %cst_64 = arith.constant dense<0.000000e+00> : vector<38x128xf32>
    %48 = tpu.matmul %45, %47, %cst_64 {dimension_numbers = #tpu.dot_dimension_numbers<[1], [0], [0], [1], [0, 0, 1, 1], [], []>} : vector<38x128xf32>, vector<128x128xf32>, vector<38x128xf32> -> vector<38x128xf32>
    %49 = arith.addf %44, %48 : vector<38x128xf32>
    %c21_65 = arith.constant 21 : index
    %c0_66 = arith.constant 0 : index
    %50 = vector.load %arg5[%c21_65, %c0_66] : memref<60x128xf32, #tpu.memory_space<vmem>>, vector<38x128xf32>
    %c2_67 = arith.constant 2 : index
    %c1_68 = arith.constant 1 : index
    %c0_69 = arith.constant 0 : index
    %c0_70 = arith.constant 0 : index
    %51 = vector.load %arg2[%c2_67, %c1_68, %c0_69, %c0_70] : memref<3x3x128x128xf32, #tpu.memory_space<vmem>>, vector<1x1x128x128xf32>
    %52 = vector.shape_cast %51 : vector<1x1x128x128xf32> to vector<128x128xf32>
    %cst_71 = arith.constant dense<0.000000e+00> : vector<38x128xf32>
    %53 = tpu.matmul %50, %52, %cst_71 {dimension_numbers = #tpu.dot_dimension_numbers<[1], [0], [0], [1], [0, 0, 1, 1], [], []>} : vector<38x128xf32>, vector<128x128xf32>, vector<38x128xf32> -> vector<38x128xf32>
    %54 = arith.addf %49, %53 : vector<38x128xf32>
    %c22 = arith.constant 22 : index
    %c0_72 = arith.constant 0 : index
    %55 = vector.load %arg5[%c22, %c0_72] : memref<60x128xf32, #tpu.memory_space<vmem>>, vector<38x128xf32>
    %c2_73 = arith.constant 2 : index
    %c2_74 = arith.constant 2 : index
    %c0_75 = arith.constant 0 : index
    %c0_76 = arith.constant 0 : index
    %56 = vector.load %arg2[%c2_73, %c2_74, %c0_75, %c0_76] : memref<3x3x128x128xf32, #tpu.memory_space<vmem>>, vector<1x1x128x128xf32>
    %57 = vector.shape_cast %56 : vector<1x1x128x128xf32> to vector<128x128xf32>
    %cst_77 = arith.constant dense<0.000000e+00> : vector<38x128xf32>
    %58 = tpu.matmul %55, %57, %cst_77 {dimension_numbers = #tpu.dot_dimension_numbers<[1], [0], [0], [1], [0, 0, 1, 1], [], []>} : vector<38x128xf32>, vector<128x128xf32>, vector<38x128xf32> -> vector<38x128xf32>
    %59 = arith.addf %54, %58 : vector<38x128xf32>
    %60 = vector.extract_strided_slice %59 {offsets = [0, 0], sizes = [8, 128], strides = [1, 1]} : vector<38x128xf32> to vector<8x128xf32>
    %cst_78 = arith.constant 0.000000e+00 : f32
    %61 = vector.broadcast %cst_78 : f32 to vector<8x128xf32>
    %62 = arith.maximumf %60, %61 : vector<8x128xf32>
    %c11_79 = arith.constant 11 : index
    %c0_80 = arith.constant 0 : index
    %63 = vector.load %arg5[%c11_79, %c0_80] : memref<60x128xf32, #tpu.memory_space<vmem>>, vector<8x128xf32>
    tpu.vector_store %arg5[%c11_79, %c0_80], %62 {strides = array<i32>} : memref<60x128xf32, #tpu.memory_space<vmem>>, vector<8x128xf32>,
    %64 = vector.extract_strided_slice %59 {offsets = [10, 0], sizes = [8, 128], strides = [1, 1]} : vector<38x128xf32> to vector<8x128xf32>
    %cst_81 = arith.constant 0.000000e+00 : f32
    %65 = vector.broadcast %cst_81 : f32 to vector<8x128xf32>
    %66 = arith.maximumf %64, %65 : vector<8x128xf32>
    %c21_82 = arith.constant 21 : index
    %c0_83 = arith.constant 0 : index
    %67 = vector.load %arg5[%c21_82, %c0_83] : memref<60x128xf32, #tpu.memory_space<vmem>>, vector<8x128xf32>
    tpu.vector_store %arg5[%c21_82, %c0_83], %66 {strides = array<i32>} : memref<60x128xf32, #tpu.memory_space<vmem>>, vector<8x128xf32>,
    %68 = vector.extract_strided_slice %59 {offsets = [20, 0], sizes = [8, 128], strides = [1, 1]} : vector<38x128xf32> to vector<8x128xf32>
    %cst_84 = arith.constant 0.000000e+00 : f32
    %69 = vector.broadcast %cst_84 : f32 to vector<8x128xf32>
    %70 = arith.maximumf %68, %69 : vector<8x128xf32>
    %c31_85 = arith.constant 31 : index
    %c0_86 = arith.constant 0 : index
    %71 = vector.load %arg5[%c31_85, %c0_86] : memref<60x128xf32, #tpu.memory_space<vmem>>, vector<8x128xf32>
    tpu.vector_store %arg5[%c31_85, %c0_86], %70 {strides = array<i32>} : memref<60x128xf32, #tpu.memory_space<vmem>>, vector<8x128xf32>,
    %72 = vector.extract_strided_slice %59 {offsets = [30, 0], sizes = [8, 128], strides = [1, 1]} : vector<38x128xf32> to vector<8x128xf32>
    %cst_87 = arith.constant 0.000000e+00 : f32
    %73 = vector.broadcast %cst_87 : f32 to vector<8x128xf32>
    %74 = arith.maximumf %72, %73 : vector<8x128xf32>
    %c41_88 = arith.constant 41 : index
    %c0_89 = arith.constant 0 : index
    %75 = vector.load %arg5[%c41_88, %c0_89] : memref<60x128xf32, #tpu.memory_space<vmem>>, vector<8x128xf32>
    tpu.vector_store %arg5[%c41_88, %c0_89], %74 {strides = array<i32>} : memref<60x128xf32, #tpu.memory_space<vmem>>, vector<8x128xf32>,
    %cst_90 = arith.constant 0.000000e+00 : f32
    %76 = vector.broadcast %cst_90 : f32 to vector<38x128xf32>
    %c0_91 = arith.constant 0 : index
    %c0_92 = arith.constant 0 : index
    %77 = vector.load %arg5[%c0_91, %c0_92] : memref<60x128xf32, #tpu.memory_space<vmem>>, vector<38x128xf32>
    %c0_93 = arith.constant 0 : index
    %c0_94 = arith.constant 0 : index
    %c0_95 = arith.constant 0 : index
    %c0_96 = arith.constant 0 : index
    %78 = vector.load %arg3[%c0_93, %c0_94, %c0_95, %c0_96] : memref<3x3x128x128xf32, #tpu.memory_space<vmem>>, vector<1x1x128x128xf32>
    %79 = vector.shape_cast %78 : vector<1x1x128x128xf32> to vector<128x128xf32>
    %cst_97 = arith.constant dense<0.000000e+00> : vector<38x128xf32>
    %80 = tpu.matmul %77, %79, %cst_97 {dimension_numbers = #tpu.dot_dimension_numbers<[1], [0], [0], [1], [0, 0, 1, 1], [], []>} : vector<38x128xf32>, vector<128x128xf32>, vector<38x128xf32> -> vector<38x128xf32>
    %81 = arith.addf %76, %80 : vector<38x128xf32>
    %c1_98 = arith.constant 1 : index
    %c0_99 = arith.constant 0 : index
    %82 = vector.load %arg5[%c1_98, %c0_99] : memref<60x128xf32, #tpu.memory_space<vmem>>, vector<38x128xf32>
    %c0_100 = arith.constant 0 : index
    %c1_101 = arith.constant 1 : index
    %c0_102 = arith.constant 0 : index
    %c0_103 = arith.constant 0 : index
    %83 = vector.load %arg3[%c0_100, %c1_101, %c0_102, %c0_103] : memref<3x3x128x128xf32, #tpu.memory_space<vmem>>, vector<1x1x128x128xf32>
    %84 = vector.shape_cast %83 : vector<1x1x128x128xf32> to vector<128x128xf32>
    %cst_104 = arith.constant dense<0.000000e+00> : vector<38x128xf32>
    %85 = tpu.matmul %82, %84, %cst_104 {dimension_numbers = #tpu.dot_dimension_numbers<[1], [0], [0], [1], [0, 0, 1, 1], [], []>} : vector<38x128xf32>, vector<128x128xf32>, vector<38x128xf32> -> vector<38x128xf32>
    %86 = arith.addf %81, %85 : vector<38x128xf32>
    %c2_105 = arith.constant 2 : index
    %c0_106 = arith.constant 0 : index
    %87 = vector.load %arg5[%c2_105, %c0_106] : memref<60x128xf32, #tpu.memory_space<vmem>>, vector<38x128xf32>
    %c0_107 = arith.constant 0 : index
    %c2_108 = arith.constant 2 : index
    %c0_109 = arith.constant 0 : index
    %c0_110 = arith.constant 0 : index
    %88 = vector.load %arg3[%c0_107, %c2_108, %c0_109, %c0_110] : memref<3x3x128x128xf32, #tpu.memory_space<vmem>>, vector<1x1x128x128xf32>
    %89 = vector.shape_cast %88 : vector<1x1x128x128xf32> to vector<128x128xf32>
    %cst_111 = arith.constant dense<0.000000e+00> : vector<38x128xf32>
    %90 = tpu.matmul %87, %89, %cst_111 {dimension_numbers = #tpu.dot_dimension_numbers<[1], [0], [0], [1], [0, 0, 1, 1], [], []>} : vector<38x128xf32>, vector<128x128xf32>, vector<38x128xf32> -> vector<38x128xf32>
    %91 = arith.addf %86, %90 : vector<38x128xf32>
    %c10_112 = arith.constant 10 : index
    %c0_113 = arith.constant 0 : index
    %92 = vector.load %arg5[%c10_112, %c0_113] : memref<60x128xf32, #tpu.memory_space<vmem>>, vector<38x128xf32>
    %c1_114 = arith.constant 1 : index
    %c0_115 = arith.constant 0 : index
    %c0_116 = arith.constant 0 : index
    %c0_117 = arith.constant 0 : index
    %93 = vector.load %arg3[%c1_114, %c0_115, %c0_116, %c0_117] : memref<3x3x128x128xf32, #tpu.memory_space<vmem>>, vector<1x1x128x128xf32>
    %94 = vector.shape_cast %93 : vector<1x1x128x128xf32> to vector<128x128xf32>
    %cst_118 = arith.constant dense<0.000000e+00> : vector<38x128xf32>
    %95 = tpu.matmul %92, %94, %cst_118 {dimension_numbers = #tpu.dot_dimension_numbers<[1], [0], [0], [1], [0, 0, 1, 1], [], []>} : vector<38x128xf32>, vector<128x128xf32>, vector<38x128xf32> -> vector<38x128xf32>
    %96 = arith.addf %91, %95 : vector<38x128xf32>
    %c11_119 = arith.constant 11 : index
    %c0_120 = arith.constant 0 : index
    %97 = vector.load %arg5[%c11_119, %c0_120] : memref<60x128xf32, #tpu.memory_space<vmem>>, vector<38x128xf32>
    %c1_121 = arith.constant 1 : index
    %c1_122 = arith.constant 1 : index
    %c0_123 = arith.constant 0 : index
    %c0_124 = arith.constant 0 : index
    %98 = vector.load %arg3[%c1_121, %c1_122, %c0_123, %c0_124] : memref<3x3x128x128xf32, #tpu.memory_space<vmem>>, vector<1x1x128x128xf32>
    %99 = vector.shape_cast %98 : vector<1x1x128x128xf32> to vector<128x128xf32>
    %cst_125 = arith.constant dense<0.000000e+00> : vector<38x128xf32>
    %100 = tpu.matmul %97, %99, %cst_125 {dimension_numbers = #tpu.dot_dimension_numbers<[1], [0], [0], [1], [0, 0, 1, 1], [], []>} : vector<38x128xf32>, vector<128x128xf32>, vector<38x128xf32> -> vector<38x128xf32>
    %101 = arith.addf %96, %100 : vector<38x128xf32>
    %c12_126 = arith.constant 12 : index
    %c0_127 = arith.constant 0 : index
    %102 = vector.load %arg5[%c12_126, %c0_127] : memref<60x128xf32, #tpu.memory_space<vmem>>, vector<38x128xf32>
    %c1_128 = arith.constant 1 : index
    %c2_129 = arith.constant 2 : index
    %c0_130 = arith.constant 0 : index
    %c0_131 = arith.constant 0 : index
    %103 = vector.load %arg3[%c1_128, %c2_129, %c0_130, %c0_131] : memref<3x3x128x128xf32, #tpu.memory_space<vmem>>, vector<1x1x128x128xf32>
    %104 = vector.shape_cast %103 : vector<1x1x128x128xf32> to vector<128x128xf32>
    %cst_132 = arith.constant dense<0.000000e+00> : vector<38x128xf32>
    %105 = tpu.matmul %102, %104, %cst_132 {dimension_numbers = #tpu.dot_dimension_numbers<[1], [0], [0], [1], [0, 0, 1, 1], [], []>} : vector<38x128xf32>, vector<128x128xf32>, vector<38x128xf32> -> vector<38x128xf32>
    %106 = arith.addf %101, %105 : vector<38x128xf32>
    %c20_133 = arith.constant 20 : index
    %c0_134 = arith.constant 0 : index
    %107 = vector.load %arg5[%c20_133, %c0_134] : memref<60x128xf32, #tpu.memory_space<vmem>>, vector<38x128xf32>
    %c2_135 = arith.constant 2 : index
    %c0_136 = arith.constant 0 : index
    %c0_137 = arith.constant 0 : index
    %c0_138 = arith.constant 0 : index
    %108 = vector.load %arg3[%c2_135, %c0_136, %c0_137, %c0_138] : memref<3x3x128x128xf32, #tpu.memory_space<vmem>>, vector<1x1x128x128xf32>
    %109 = vector.shape_cast %108 : vector<1x1x128x128xf32> to vector<128x128xf32>
    %cst_139 = arith.constant dense<0.000000e+00> : vector<38x128xf32>
    %110 = tpu.matmul %107, %109, %cst_139 {dimension_numbers = #tpu.dot_dimension_numbers<[1], [0], [0], [1], [0, 0, 1, 1], [], []>} : vector<38x128xf32>, vector<128x128xf32>, vector<38x128xf32> -> vector<38x128xf32>
    %111 = arith.addf %106, %110 : vector<38x128xf32>
    %c21_140 = arith.constant 21 : index
    %c0_141 = arith.constant 0 : index
    %112 = vector.load %arg5[%c21_140, %c0_141] : memref<60x128xf32, #tpu.memory_space<vmem>>, vector<38x128xf32>
    %c2_142 = arith.constant 2 : index
    %c1_143 = arith.constant 1 : index
    %c0_144 = arith.constant 0 : index
    %c0_145 = arith.constant 0 : index
    %113 = vector.load %arg3[%c2_142, %c1_143, %c0_144, %c0_145] : memref<3x3x128x128xf32, #tpu.memory_space<vmem>>, vector<1x1x128x128xf32>
    %114 = vector.shape_cast %113 : vector<1x1x128x128xf32> to vector<128x128xf32>
    %cst_146 = arith.constant dense<0.000000e+00> : vector<38x128xf32>
    %115 = tpu.matmul %112, %114, %cst_146 {dimension_numbers = #tpu.dot_dimension_numbers<[1], [0], [0], [1], [0, 0, 1, 1], [], []>} : vector<38x128xf32>, vector<128x128xf32>, vector<38x128xf32> -> vector<38x128xf32>
    %116 = arith.addf %111, %115 : vector<38x128xf32>
    %c22_147 = arith.constant 22 : index
    %c0_148 = arith.constant 0 : index
    %117 = vector.load %arg5[%c22_147, %c0_148] : memref<60x128xf32, #tpu.memory_space<vmem>>, vector<38x128xf32>
    %c2_149 = arith.constant 2 : index
    %c2_150 = arith.constant 2 : index
    %c0_151 = arith.constant 0 : index
    %c0_152 = arith.constant 0 : index
    %118 = vector.load %arg3[%c2_149, %c2_150, %c0_151, %c0_152] : memref<3x3x128x128xf32, #tpu.memory_space<vmem>>, vector<1x1x128x128xf32>
    %119 = vector.shape_cast %118 : vector<1x1x128x128xf32> to vector<128x128xf32>
    %cst_153 = arith.constant dense<0.000000e+00> : vector<38x128xf32>
    %120 = tpu.matmul %117, %119, %cst_153 {dimension_numbers = #tpu.dot_dimension_numbers<[1], [0], [0], [1], [0, 0, 1, 1], [], []>} : vector<38x128xf32>, vector<128x128xf32>, vector<38x128xf32> -> vector<38x128xf32>
    %121 = arith.addf %116, %120 : vector<38x128xf32>
    %122 = vector.extract_strided_slice %121 {offsets = [0, 0], sizes = [8, 128], strides = [1, 1]} : vector<38x128xf32> to vector<8x128xf32>
    %c0_154 = arith.constant 0 : index
    %c0_155 = arith.constant 0 : index
    %c0_156 = arith.constant 0 : index
    %c0_157 = arith.constant 0 : index
    %123 = vector.load %arg1[%c0_154, %c0_155, %c0_156, %c0_157] : memref<1x4x8x128xf32, #tpu.memory_space<vmem>>, vector<1x1x8x128xf32>
    %124 = vector.shape_cast %123 : vector<1x1x8x128xf32> to vector<8x128xf32>
    %125 = arith.addf %124, %122 : vector<8x128xf32>
    %c0_158 = arith.constant 0 : index
    %c0_159 = arith.constant 0 : index
    %c0_160 = arith.constant 0 : index
    %c0_161 = arith.constant 0 : index
    %126 = vector.load %arg4[%c0_158, %c0_159, %c0_160, %c0_161] : memref<1x4x8x128xf32, #tpu.memory_space<vmem>>, vector<1x1x8x128xf32>
    %127 = vector.shape_cast %126 : vector<1x1x8x128xf32> to vector<8x128xf32>
    %128 = vector.shape_cast %125 : vector<8x128xf32> to vector<1x1x8x128xf32>
    tpu.vector_store %arg4[%c0_158, %c0_159, %c0_160, %c0_161], %128 {strides = array<i32>} : memref<1x4x8x128xf32, #tpu.memory_space<vmem>>, vector<1x1x8x128xf32>,
    %129 = vector.extract_strided_slice %121 {offsets = [10, 0], sizes = [8, 128], strides = [1, 1]} : vector<38x128xf32> to vector<8x128xf32>
    %c0_162 = arith.constant 0 : index
    %c1_163 = arith.constant 1 : index
    %c0_164 = arith.constant 0 : index
    %c0_165 = arith.constant 0 : index
    %130 = vector.load %arg1[%c0_162, %c1_163, %c0_164, %c0_165] : memref<1x4x8x128xf32, #tpu.memory_space<vmem>>, vector<1x1x8x128xf32>
    %131 = vector.shape_cast %130 : vector<1x1x8x128xf32> to vector<8x128xf32>
    %132 = arith.addf %131, %129 : vector<8x128xf32>
    %c0_166 = arith.constant 0 : index
    %c1_167 = arith.constant 1 : index
    %c0_168 = arith.constant 0 : index
    %c0_169 = arith.constant 0 : index
    %133 = vector.load %arg4[%c0_166, %c1_167, %c0_168, %c0_169] : memref<1x4x8x128xf32, #tpu.memory_space<vmem>>, vector<1x1x8x128xf32>
    %134 = vector.shape_cast %133 : vector<1x1x8x128xf32> to vector<8x128xf32>
    %135 = vector.shape_cast %132 : vector<8x128xf32> to vector<1x1x8x128xf32>
    tpu.vector_store %arg4[%c0_166, %c1_167, %c0_168, %c0_169], %135 {strides = array<i32>} : memref<1x4x8x128xf32, #tpu.memory_space<vmem>>, vector<1x1x8x128xf32>,
    %136 = vector.extract_strided_slice %121 {offsets = [20, 0], sizes = [8, 128], strides = [1, 1]} : vector<38x128xf32> to vector<8x128xf32>
    %c0_170 = arith.constant 0 : index
    %c2_171 = arith.constant 2 : index
    %c0_172 = arith.constant 0 : index
    %c0_173 = arith.constant 0 : index
    %137 = vector.load %arg1[%c0_170, %c2_171, %c0_172, %c0_173] : memref<1x4x8x128xf32, #tpu.memory_space<vmem>>, vector<1x1x8x128xf32>
    %138 = vector.shape_cast %137 : vector<1x1x8x128xf32> to vector<8x128xf32>
    %139 = arith.addf %138, %136 : vector<8x128xf32>
    %c0_174 = arith.constant 0 : index
    %c2_175 = arith.constant 2 : index
    %c0_176 = arith.constant 0 : index
    %c0_177 = arith.constant 0 : index
    %140 = vector.load %arg4[%c0_174, %c2_175, %c0_176, %c0_177] : memref<1x4x8x128xf32, #tpu.memory_space<vmem>>, vector<1x1x8x128xf32>
    %141 = vector.shape_cast %140 : vector<1x1x8x128xf32> to vector<8x128xf32>
    %142 = vector.shape_cast %139 : vector<8x128xf32> to vector<1x1x8x128xf32>
    tpu.vector_store %arg4[%c0_174, %c2_175, %c0_176, %c0_177], %142 {strides = array<i32>} : memref<1x4x8x128xf32, #tpu.memory_space<vmem>>, vector<1x1x8x128xf32>,
    %143 = vector.extract_strided_slice %121 {offsets = [30, 0], sizes = [8, 128], strides = [1, 1]} : vector<38x128xf32> to vector<8x128xf32>
    %c0_178 = arith.constant 0 : index
    %c3_179 = arith.constant 3 : index
    %c0_180 = arith.constant 0 : index
    %c0_181 = arith.constant 0 : index
    %144 = vector.load %arg1[%c0_178, %c3_179, %c0_180, %c0_181] : memref<1x4x8x128xf32, #tpu.memory_space<vmem>>, vector<1x1x8x128xf32>
    %145 = vector.shape_cast %144 : vector<1x1x8x128xf32> to vector<8x128xf32>
    %146 = arith.addf %145, %143 : vector<8x128xf32>
    %c0_182 = arith.constant 0 : index
    %c3_183 = arith.constant 3 : index
    %c0_184 = arith.constant 0 : index
    %c0_185 = arith.constant 0 : index
    %147 = vector.load %arg4[%c0_182, %c3_183, %c0_184, %c0_185] : memref<1x4x8x128xf32, #tpu.memory_space<vmem>>, vector<1x1x8x128xf32>
    %148 = vector.shape_cast %147 : vector<1x1x8x128xf32> to vector<8x128xf32>
    %149 = vector.shape_cast %146 : vector<8x128xf32> to vector<1x1x8x128xf32>
    tpu.vector_store %arg4[%c0_182, %c3_183, %c0_184, %c0_185], %149 {strides = array<i32>} : memref<1x4x8x128xf32, #tpu.memory_space<vmem>>, vector<1x1x8x128xf32>,
    return
  }
  func.func @transform_0(%arg0: i32) -> (i32, i32, i32, i32) {
    %c0_i32 = arith.constant 0 : i32
    %c0_i32_0 = arith.constant 0 : i32
    %c0_i32_1 = arith.constant 0 : i32
    %c0_i32_2 = arith.constant 0 : i32
    return %arg0, %c0_i32, %c0_i32_0, %c0_i32_1 : i32, i32, i32, i32
  }
  func.func @transform_1(%arg0: i32) -> (i32, i32, i32, i32) {
    %c0_i32 = arith.constant 0 : i32
    %c0_i32_0 = arith.constant 0 : i32
    %c0_i32_1 = arith.constant 0 : i32
    %c0_i32_2 = arith.constant 0 : i32
    %c0_i32_3 = arith.constant 0 : i32
    return %c0_i32, %c0_i32_0, %c0_i32_1, %c0_i32_2 : i32, i32, i32, i32
  }
  func.func @transform_2(%arg0: i32) -> (i32, i32, i32, i32) {
    %c0_i32 = arith.constant 0 : i32
    %c0_i32_0 = arith.constant 0 : i32
    %c0_i32_1 = arith.constant 0 : i32
    %c0_i32_2 = arith.constant 0 : i32
    %c0_i32_3 = arith.constant 0 : i32
    return %c0_i32, %c0_i32_0, %c0_i32_1, %c0_i32_2 : i32, i32, i32, i32
  }
  func.func @transform_3(%arg0: i32) -> (i32, i32, i32, i32) {
    %c0_i32 = arith.constant 0 : i32
    %c0_i32_0 = arith.constant 0 : i32
    %c0_i32_1 = arith.constant 0 : i32
    %c0_i32_2 = arith.constant 0 : i32
    return %arg0, %c0_i32, %c0_i32_0, %c0_i32_1 : i32, i32, i32, i32
  }
}

</mosaic_0001>

<llo_original>
// kernel: tpu_custom_call.1
$region0: #{tpu_custom_call.1}
  #allocation0 [shape = 'u32[]', space=smem, size = 0x4, offset = 0x4, fixed_abs, tag = 'smem constant byte address 0x4 - core index']
  #allocation1 [shape = 'u32[144,128]{1,0:T(1,128)}', space=vmem, size = 0x12000, scoped, tag = 'internal scratch']
  #allocation2 [shape = 'f32[60,128]{1,0:T(8,128)}', space=vmem, size = 0x8000, scoped, tag = 'scratch operand']
  %s0 = inlined_call_operand.hbm [shape: f32[2,4,8,128], index: 0, kind: input, shape index: {}]
  %s1 = inlined_call_operand.hbm [shape: f32[3,3,128,128], index: 1, kind: input, shape index: {}]
  %s2 = inlined_call_operand.hbm [shape: f32[3,3,128,128], index: 2, kind: input, shape index: {}]
  %s3 = inlined_call_operand.hbm [shape: f32[2,4,8,128], index: 3, kind: output, shape index: {}]
  %s4 = sld [smem:[#allocation0]]
  $region57: #{tpu_custom_call.1} parent=0
    _
  %s6 = ssub.s32 1, %s4
  %s7 = scalar_select 0, %s6, %s4
  $region1: #{tpu_custom_call.1} parent=0
    #allocation3 [shape = 'u8[32768]{0}', space=vmem, size = 0x8000, scoped, tag = 'input window, operand 0']
    #allocation4 [shape = 's32[2]{0}', space=sflag, size = 0x8, scoped, tag = 'scoped memory for tpu_custom_call.1']
    #allocation5 [shape = 's32[2]{0}', space=sflag, size = 0x8, scoped, tag = 'scoped memory for tpu_custom_call.1']
    #allocation6 [shape = 'u8[589824]{0}', space=vmem, size = 0x90000, scoped, tag = 'input window, operand 1, single buffered']
    #allocation7 [shape = 's32[1]{0}', space=sflag, size = 0x4, scoped, tag = 'scoped memory for tpu_custom_call.1']
    #allocation8 [shape = 'u8[589824]{0}', space=vmem, size = 0x90000, scoped, tag = 'input window, operand 2, single buffered']
    #allocation9 [shape = 'u8[32768]{0}', space=vmem, size = 0x8000, scoped, tag = 'output window, operand 0']
    %8 = vsyncpa [#allocation4], 0
    %s9 = scalar_lea.sflag [#allocation4], 1
    %10 = vsyncpa %s9, 0
    %11 = vsyncpa [#allocation7], 0
    %12 = vsyncpa [#allocation5], 0
    %s13 = scalar_lea.sflag [#allocation5], 1
    %14 = vsyncpa %s13, 0
    loop: start=0, step=1, limit=4
    $region2: #{tpu_custom_call.1} parent=1 // loop_pre_header
      _
    $region3: #{tpu_custom_call.1} parent=1 // loop_header
      %s16 = sphi 0, %s20
      %p17 = scmp.ge.s32.totalorder %s16, 4
      %s26 = sphi 0, %s28
      %s29 = sphi 0, %s26
      %s30 = sphi 0, %s29
      %s46 = sphi 0, %s30
      %s50 = sphi 0, %s50
      %s52 = sphi 0, %s50
      %s53 = sphi 0, %s52
      %s67 = sphi 0, %s53
      %s71 = sphi 0, %s71
      %s73 = sphi 0, %s71
      %s74 = sphi 0, %s73
      %s88 = sphi 0, %s74
      %s94 = sphi 0, %s96
      %s97 = sphi 0, %s94
      %s98 = sphi 0, %s97
      %s114 = sphi 0, %s98
    $region4: #{tpu_custom_call.1} parent=1 // loop_header_branch
      %19 = sbr.rel (%p17) target = $region8
    $region5: #{tpu_custom_call.1} parent=1 // loop_body
      %s21 = ssub.s32 %s16, 1
      %s22 = ssub.s32 %s16, 2
      %s23 = sadd.s32 %s16, 1
      %s24 = ssub.s32 %s16, %s23
      %p25 = scmp.eq.s32.totalorder %s24, 0
      %s27 = sadd.s32 %s26, 1
      %s28 = scalar_select %p25, %s26, %s27
      %p31 = pneg %p25
      %p32 = scmp.eq.s32.totalorder %s16, 1
      %p33 = por %p31, %p32
      %p34 = scmp.ne.s32.totalorder %s26, %s29
      %p35 = scmp.eq.s32.totalorder %s16, 0
      %p36 = por %p34, %p35
      %p37 = scmp.ne.s32.totalorder %s26, %s29
      %p38 = scmp.eq.s32.totalorder %s21, 1
      %p39 = por %p37, %p38
      %p40 = scmp.ne.s32.totalorder %s29, %s30
      %p41 = scmp.eq.s32.totalorder %s21, 0
      %p42 = por %p40, %p41
      %p43 = scmp.ne.s32.totalorder %s29, %s30
      %p44 = scmp.eq.s32.totalorder %s22, 1
      %p45 = por %p43, %p44
      %p47 = scmp.ne.s32.totalorder %s30, %s46
      %p48 = scmp.eq.s32.totalorder %s22, 0
      %p49 = por %p47, %p48
      %s51 = sadd.s32 %s50, 1
      %p54 = scmp.eq.s32.totalorder %s16, 1
      %p55 = scmp.ne.s32.totalorder %s50, %s52
      %p56 = scmp.eq.s32.totalorder %s16, 0
      %p57 = por %p55, %p56
      %p58 = scmp.ne.s32.totalorder %s50, %s52
      %p59 = scmp.eq.s32.totalorder %s21, 1
      %p60 = por %p58, %p59
      %p61 = scmp.ne.s32.totalorder %s52, %s53
      %p62 = scmp.eq.s32.totalorder %s21, 0
      %p63 = por %p61, %p62
      %p64 = scmp.ne.s32.totalorder %s52, %s53
      %p65 = scmp.eq.s32.totalorder %s22, 1
      %p66 = por %p64, %p65
      %p68 = scmp.ne.s32.totalorder %s53, %s67
      %p69 = scmp.eq.s32.totalorder %s22, 0
      %p70 = por %p68, %p69
      %s72 = sadd.s32 %s71, 1
      %p75 = scmp.eq.s32.totalorder %s16, 1
      %p76 = scmp.ne.s32.totalorder %s71, %s73
      %p77 = scmp.eq.s32.totalorder %s16, 0
      %p78 = por %p76, %p77
      %p79 = scmp.ne.s32.totalorder %s71, %s73
      %p80 = scmp.eq.s32.totalorder %s21, 1
      %p81 = por %p79, %p80
      %p82 = scmp.ne.s32.totalorder %s73, %s74
      %p83 = scmp.eq.s32.totalorder %s21, 0
      %p84 = por %p82, %p83
      %p85 = scmp.ne.s32.totalorder %s73, %s74
      %p86 = scmp.eq.s32.totalorder %s22, 1
      %p87 = por %p85, %p86
      %p89 = scmp.ne.s32.totalorder %s74, %s88
      %p90 = scmp.eq.s32.totalorder %s22, 0
      %p91 = por %p89, %p90
      %s92 = ssub.s32 %s16, %s23
      %p93 = scmp.eq.s32.totalorder %s92, 0
      %s95 = sadd.s32 %s94, 1
      %s96 = scalar_select %p93, %s94, %s95
      %p99 = pneg %p93
      %p100 = scmp.eq.s32.totalorder %s16, 1
      %p101 = por %p99, %p100
      %p102 = scmp.ne.s32.totalorder %s94, %s97
      %p103 = scmp.eq.s32.totalorder %s16, 0
      %p104 = por %p102, %p103
      %p105 = scmp.ne.s32.totalorder %s94, %s97
      %p106 = scmp.eq.s32.totalorder %s21, 1
      %p107 = por %p105, %p106
      %p108 = scmp.ne.s32.totalorder %s97, %s98
      %p109 = scmp.eq.s32.totalorder %s21, 0
      %p110 = por %p108, %p109
      %p111 = scmp.ne.s32.totalorder %s97, %s98
      %p112 = scmp.eq.s32.totalorder %s22, 1
      %p113 = por %p111, %p112
      %p115 = scmp.ne.s32.totalorder %s98, %s114
      %p116 = scmp.eq.s32.totalorder %s22, 0
      %p117 = por %p115, %p116
      %p118 = scmp.le.s32.totalorder 1, %s16
      %p119 = scmp.lt.s32.totalorder %s16, 3
      %p120 = pnand %p118, %p119
      %p121 = pneg %p120
      // Predicated region
      $region9: #{tpu_custom_call.1} parent=5 // pred_check
        _
      $region10: #{tpu_custom_call.1} parent=5 // pred_check_branch
        %123 = sbr.rel (%p120) target = $region12
      $region11: #{tpu_custom_call.1} parent=5 // pred_region
        %s124 = ssub.s32 %s16, 1
        // Predicated region
        $region13: #{tpu_custom_call.1} parent=11 // pred_check
          %p125 = pneg %p63
        $region14: #{tpu_custom_call.1} parent=11 // pred_check_branch
          %127 = sbr.rel (%p125) target = $region16
        $region15: #{tpu_custom_call.1} parent=11 // pred_region
          %s129 = ssub.s32 18432, 18432
          %130 = vsyncadd [#allocation7], %s129
          %s131 = sshll.u32 [#allocation6], 4
          %s132 = int_to_ptr.vmem [resolvable:$true] %s131
          %137 = dma.hbm_to_vmem [thread:$0]  %s1, 18432, %s132, [#allocation7], 128, 128, 8
        $region16: #{tpu_custom_call.1} parent=11 // pred_fallthru
          _
        // Predicated region
        $region17: #{tpu_custom_call.1} parent=11 // pred_check
          %p138 = pneg %p84
        $region18: #{tpu_custom_call.1} parent=11 // pred_check_branch
          %140 = sbr.rel (%p138) target = $region20
        $region19: #{tpu_custom_call.1} parent=11 // pred_region
          %s142 = ssub.s32 18432, 18432
          %143 = vsyncadd [#allocation7], %s142
          %s144 = sshll.u32 [#allocation8], 4
          %s145 = int_to_ptr.vmem [resolvable:$true] %s144
          %150 = dma.hbm_to_vmem [thread:$0]  %s2, 18432, %s145, [#allocation7], 128, 128, 8
        $region20: #{tpu_custom_call.1} parent=11 // pred_fallthru
          _
      $region12: #{tpu_custom_call.1} parent=5 // pred_fallthru
        _
      %p151 = scmp.lt.s32.totalorder %s16, 2
      // Predicated region
      $region21: #{tpu_custom_call.1} parent=5 // pred_check
        %p152 = pneg %p151
      $region22: #{tpu_custom_call.1} parent=5 // pred_check_branch
        %154 = sbr.rel (%p152) target = $region24
      $region23: #{tpu_custom_call.1} parent=5 // pred_region
        // Predicated region
        $region25: #{tpu_custom_call.1} parent=23 // pred_check
          %p155 = pneg %p36
        $region26: #{tpu_custom_call.1} parent=23 // pred_check_branch
          %157 = sbr.rel (%p155) target = $region28
        $region27: #{tpu_custom_call.1} parent=23 // pred_region
          %s158 = sand.u32 %s26, 1
          %s159 = scalar_lea.sflag [#allocation4], %s158
          %s160 = sand.u32 %s26, 1
          %s161 = smul.addr %s160, 32
          %s162 = scalar_lea.vmem [#allocation3], %s161
          %s164 = ssub.s32 512, 512
          %165 = vsyncadd %s159, %s164
          %s166 = smul.addr %s16, 4
          %s167 = smul.addr %s166, 128
          %s168 = scalar_lea.hbm %s0, %s167
          %s169 = sshll.u32 %s162, 4
          %s170 = int_to_ptr.vmem [resolvable:$true] %s169
          %175 = dma.hbm_to_vmem [thread:$0]  %s168, 512, %s170, %s159, 128, 128, 8
        $region28: #{tpu_custom_call.1} parent=23 // pred_fallthru
          _
      $region24: #{tpu_custom_call.1} parent=5 // pred_fallthru
        _
      %p176 = scmp.le.s32.totalorder 1, %s16
      %p177 = scmp.lt.s32.totalorder %s16, 3
      %p178 = pnand %p176, %p177
      %p179 = pneg %p178
      // Predicated region
      $region29: #{tpu_custom_call.1} parent=5 // pred_check
        _
      $region30: #{tpu_custom_call.1} parent=5 // pred_check_branch
        %181 = sbr.rel (%p178) target = $region32
      $region31: #{tpu_custom_call.1} parent=5 // pred_region
        %s182 = ssub.s32 %s16, 1
        %s183 = sand.u32 %s29, 1
        %s184 = scalar_lea.sflag [#allocation4], %s183
        %s185 = sand.u32 %s29, 1
        %s186 = smul.addr %s185, 32
        %s187 = scalar_lea.vmem [#allocation3], %s186
        // Predicated region
        $region33: #{tpu_custom_call.1} parent=31 // pred_check
          %p188 = pneg %p42
        $region34: #{tpu_custom_call.1} parent=31 // pred_check_branch
          %190 = sbr.rel (%p188) target = $region36
        $region35: #{tpu_custom_call.1} parent=31 // pred_region
          %191 = dma.done %s184, 512
        $region36: #{tpu_custom_call.1} parent=31 // pred_fallthru
          _
        // Predicated region
        $region37: #{tpu_custom_call.1} parent=31 // pred_check
          %p192 = pneg %p63
        $region38: #{tpu_custom_call.1} parent=31 // pred_check_branch
          %194 = sbr.rel (%p192) target = $region40
        $region39: #{tpu_custom_call.1} parent=31 // pred_region
          %195 = dma.done [#allocation7], 18432
        $region40: #{tpu_custom_call.1} parent=31 // pred_fallthru
          _
        // Predicated region
        $region41: #{tpu_custom_call.1} parent=31 // pred_check
          %p196 = pneg %p84
        $region42: #{tpu_custom_call.1} parent=31 // pred_check_branch
          %198 = sbr.rel (%p196) target = $region44
        $region43: #{tpu_custom_call.1} parent=31 // pred_region
          %199 = dma.done [#allocation7], 18432
        $region44: #{tpu_custom_call.1} parent=31 // pred_fallthru
          _
        %s200 = sand.u32 %s29, 1
        %s201 = scalar_lea.sflag [#allocation4], %s200
        %s202 = sand.u32 %s29, 1
        %s203 = smul.addr %s202, 32
        %s204 = scalar_lea.vmem [#allocation3], %s203
        %p205 = pneg %p42
        %p206 = pneg %p39
        %p207 = pneg %p63
        %p208 = pneg %p60
        %p209 = pneg %p84
        %p210 = pneg %p81
        %p211 = pneg %p110
        %p212 = pneg %p107
        %s213 = sand.u32 %s97, 1
        %s214 = scalar_lea.sflag [#allocation5], %s213
        %s215 = sand.u32 %s97, 1
        %s216 = smul.addr %s215, 32
        %s217 = scalar_lea.vmem [#allocation9], %s216
        %218 = vst [vmem:[#allocation2] sm:$0xff] 0.0
        %219 = vst [vmem:[#allocation2 + $0x8] sm:$0xff] 0.0
        %220 = vst [vmem:[#allocation2 + $0x10] sm:$0xff] 0.0
        %221 = vst [vmem:[#allocation2 + $0x18] sm:$0xff] 0.0
        %222 = vst [vmem:[#allocation2 + $0x20] sm:$0xff] 0.0
        %223 = vst [vmem:[#allocation2 + $0x28] sm:$0xff] 0.0
        %224 = vst [vmem:[#allocation2 + $0x30] sm:$0xff] 0.0
        %225 = vst [vmem:[#allocation2 + $0x38] sm:$0xf] 0.0
        %v226 = vld [vmem:[%s187] sm:$0xff]
        %227 = vst [vmem:[#allocation2 + $0xb] sm:$0xff] %v226
        %s228 = scalar_lea.vmem %s187, 8 [#allocation3]
        %v229 = vld [vmem:[%s228] sm:$0xff]
        %230 = vst [vmem:[#allocation2 + $0x15] sm:$0xff] %v229
        %s231 = scalar_lea.vmem %s187, 16 [#allocation3]
        %v232 = vld [vmem:[%s231] sm:$0xff]
        %233 = vst [vmem:[#allocation2 + $0x1f] sm:$0xff] %v232
        %s234 = scalar_lea.vmem %s187, 24 [#allocation3]
        %v235 = vld [vmem:[%s234] sm:$0xff]
        %236 = vst [vmem:[#allocation2 + $0x29] sm:$0xff] %v235
        %v237 = vld [vmem:[#allocation2] sm:$0xff]
        %v238 = vld [vmem:[#allocation2 + $0x8] sm:$0xff]
        %v239 = vld [vmem:[#allocation2 + $0x10] sm:$0xff]
        %v240 = vld [vmem:[#allocation2 + $0x18] sm:$0xff]
        %v241 = vld [vmem:[#allocation2 + $0x20] sm:$0x3f]
        %v242 = vld [vmem:[#allocation6] sm:$0xff]
        %v243 = vld [vmem:[#allocation6 + $0x8] sm:$0xff]
        %v244 = vld [vmem:[#allocation6 + $0x10] sm:$0xff]
        %v245 = vld [vmem:[#allocation6 + $0x18] sm:$0xff]
        %v246 = vld [vmem:[#allocation6 + $0x20] sm:$0xff]
        %v247 = vld [vmem:[#allocation6 + $0x28] sm:$0xff]
        %v248 = vld [vmem:[#allocation6 + $0x30] sm:$0xff]
        %v249 = vld [vmem:[#allocation6 + $0x38] sm:$0xff]
        %v250 = vld [vmem:[#allocation6 + $0x40] sm:$0xff]
        %v251 = vld [vmem:[#allocation6 + $0x48] sm:$0xff]
        %v252 = vld [vmem:[#allocation6 + $0x50] sm:$0xff]
        %v253 = vld [vmem:[#allocation6 + $0x58] sm:$0xff]
        %v254 = vld [vmem:[#allocation6 + $0x60] sm:$0xff]
        %v255 = vld [vmem:[#allocation6 + $0x68] sm:$0xff]
        %v256 = vld [vmem:[#allocation6 + $0x70] sm:$0xff]
        %v257 = vld [vmem:[#allocation6 + $0x78] sm:$0xff]
        %v258 = vld [vmem:[#allocation2 + $0x1] sm:$0xff]
        %v259 = vld [vmem:[#allocation2 + $0x9] sm:$0xff]
        %v260 = vld [vmem:[#allocation2 + $0x11] sm:$0xff]
        %v261 = vld [vmem:[#allocation2 + $0x19] sm:$0xff]
        %v262 = vld [vmem:[#allocation2 + $0x21] sm:$0x3f]
        %s263 = scalar_lea.vmem [#allocation6], 128
        %v264 = vld [vmem:[%s263] sm:$0xff]
        %v265 = vld [vmem:[%s263 + $0x8] sm:$0xff]
        %v266 = vld [vmem:[%s263 + $0x10] sm:$0xff]
        %v267 = vld [vmem:[%s263 + $0x18] sm:$0xff]
        %v268 = vld [vmem:[%s263 + $0x20] sm:$0xff]
        %v269 = vld [vmem:[%s263 + $0x28] sm:$0xff]
        %v270 = vld [vmem:[%s263 + $0x30] sm:$0xff]
        %v271 = vld [vmem:[%s263 + $0x38] sm:$0xff]
        %v272 = vld [vmem:[%s263 + $0x40] sm:$0xff]
        %v273 = vld [vmem:[%s263 + $0x48] sm:$0xff]
        %v274 = vld [vmem:[%s263 + $0x50] sm:$0xff]
        %v275 = vld [vmem:[%s263 + $0x58] sm:$0xff]
        %v276 = vld [vmem:[%s263 + $0x60] sm:$0xff]
        %v277 = vld [vmem:[%s263 + $0x68] sm:$0xff]
        %v278 = vld [vmem:[%s263 + $0x70] sm:$0xff]
        %v279 = vld [vmem:[%s263 + $0x78] sm:$0xff]
        %280 = vmatprep.subr.mxu0 0.0
        %281 = vmatpush1.msra.mxu0 %v264
        %282 = vmatprep.subr.mxu0 0.0
        %283 = vmatpush1.msra.mxu0 %v265
        %284 = vmatprep.subr.mxu0 0.0
        %285 = vmatpush1.msra.mxu0 %v266
        %286 = vmatprep.subr.mxu0 0.0
        %287 = vmatpush1.msra.mxu0 %v267
        %288 = vmatprep.subr.mxu0 0.0
        %289 = vmatpush1.msra.mxu0 %v268
        %290 = vmatprep.subr.mxu0 0.0
        %291 = vmatpush1.msra.mxu0 %v269
        %292 = vmatprep.subr.mxu0 0.0
        %293 = vmatpush1.msra.mxu0 %v270
        %294 = vmatprep.subr.mxu0 0.0
        %295 = vmatpush1.msra.mxu0 %v271
        %296 = vmatprep.subr.mxu0 0.0
        %297 = vmatpush1.msra.mxu0 %v272
        %298 = vmatprep.subr.mxu0 0.0
        %299 = vmatpush1.msra.mxu0 %v273
        %300 = vmatprep.subr.mxu0 0.0
        %301 = vmatpush1.msra.mxu0 %v274
        %302 = vmatprep.subr.mxu0 0.0
        %303 = vmatpush1.msra.mxu0 %v275
        %304 = vmatprep.subr.mxu0 0.0
        %305 = vmatpush1.msra.mxu0 %v276
        %306 = vmatprep.subr.mxu0 0.0
        %307 = vmatpush1.msra.mxu0 %v277
        %308 = vmatprep.subr.mxu0 0.0
        %309 = vmatpush1.msra.mxu0 %v278
        %310 = vmatprep.subr.mxu0 0.0
        %311 = vmatpush1.msra.mxu0 %v279
        %312 = vmatprep.subr.mxu0 0.0
        %313 = vmatpush1.msra.mxu0 0.0
        %314 = vmatprep.subr.mxu0 0.0
        %315 = vmatpush1.msra.mxu0 0.0
        %316 = vmatprep.subr.mxu0 0.0
        %317 = vmatpush1.msra.mxu0 0.0
        %318 = vmatprep.subr.mxu0 0.0
        %319 = vmatpush1.msra.mxu0 0.0
        %320 = vmatprep.subr.mxu0 0.0
        %321 = vmatpush1.msra.mxu0 0.0
        %322 = vmatprep.subr.mxu0 0.0
        %323 = vmatpush1.msra.mxu0 0.0
        %324 = vmatprep.subr.mxu0 0.0
        %325 = vmatpush1.msra.mxu0 0.0
        %326 = vmatprep.subr.mxu0 0.0
        %327 = vmatpush1.msra.mxu0 0.0
        %328 = vmatprep.subr.mxu0 0.0
        %329 = vmatpush1.msra.mxu0 0.0
        %330 = vmatprep.subr.mxu0 0.0
        %331 = vmatpush1.msra.mxu0 0.0
        %332 = vmatprep.subr.mxu0 0.0
        %333 = vmatpush1.msra.mxu0 0.0
        %334 = vmatprep.subr.mxu0 0.0
        %335 = vmatpush1.msra.mxu0 0.0
        %336 = vmatprep.subr.mxu0 0.0
        %337 = vmatpush1.msra.mxu0 0.0
        %338 = vmatprep.subr.mxu0 0.0
        %339 = vmatpush1.msra.mxu0 0.0
        %340 = vmatprep.subr.mxu0 0.0
        %341 = vmatpush1.msra.mxu0 0.0
        %342 = vmatprep.subr.mxu0 0.0
        %343 = vmatpush1.msra.mxu0 0.0
        %344 = vmatprep.mubr.f32.mxu0 0.0
        %345 = vmatmul.mubr.f32.gmra.mrb[0].mxu0 %v258
        %v346 = vpop.f32.mrb[0].mxu0
        %v347 = vadd.f32 0.0, %v346
        %v348 = vpop.f32.mrb[0].mxu0
        %349 = vmatprep.mubr.f32.mxu0 0.0
        %350 = vmatmul.mubr.f32.gmra.mrb[0].mxu0 %v259
        %v351 = vpop.f32.mrb[0].mxu0
        %v352 = vadd.f32 0.0, %v351
        %v353 = vpop.f32.mrb[0].mxu0
        %354 = vmatprep.mubr.f32.mxu0 0.0
        %355 = vmatmul.mubr.f32.gmra.mrb[0].mxu0 %v260
        %v356 = vpop.f32.mrb[0].mxu0
        %v357 = vadd.f32 0.0, %v356
        %v358 = vpop.f32.mrb[0].mxu0
        %359 = vmatprep.mubr.f32.mxu0 0.0
        %360 = vmatmul.mubr.f32.gmra.mrb[0].mxu0 %v261
        %v361 = vpop.f32.mrb[0].mxu0
        %v362 = vadd.f32 0.0, %v361
        %v363 = vpop.f32.mrb[0].mxu0
        %364 = vmatprep.mubr.f32.mxu0 0.0
        %365 = vmatmul.mubr.f32.gmra.mrb[0].mxu0 %v262
        %v366 = vpop.f32.mrb[0].mxu0
        %v367 = vadd.f32 0.0, %v366
        %v368 = vpop.f32.mrb[0].mxu0
        %369 = vdwg.mxu0
        %370 = vmatprep.subr.mxu0 0.0
        %371 = vmatpush1.msra.mxu0 %v242
        %372 = vmatprep.subr.mxu0 0.0
        %373 = vmatpush1.msra.mxu0 %v243
        %374 = vmatprep.subr.mxu0 0.0
        %375 = vmatpush1.msra.mxu0 %v244
        %376 = vmatprep.subr.mxu0 0.0
        %377 = vmatpush1.msra.mxu0 %v245
        %378 = vmatprep.subr.mxu0 0.0
        %379 = vmatpush1.msra.mxu0 %v246
        %380 = vmatprep.subr.mxu0 0.0
        %381 = vmatpush1.msra.mxu0 %v247
        %382 = vmatprep.subr.mxu0 0.0
        %383 = vmatpush1.msra.mxu0 %v248
        %384 = vmatprep.subr.mxu0 0.0
        %385 = vmatpush1.msra.mxu0 %v249
        %386 = vmatprep.subr.mxu0 0.0
        %387 = vmatpush1.msra.mxu0 %v250
        %388 = vmatprep.subr.mxu0 0.0
        %389 = vmatpush1.msra.mxu0 %v251
        %390 = vmatprep.subr.mxu0 0.0
        %391 = vmatpush1.msra.mxu0 %v252
        %392 = vmatprep.subr.mxu0 0.0
        %393 = vmatpush1.msra.mxu0 %v253
        %394 = vmatprep.subr.mxu0 0.0
        %395 = vmatpush1.msra.mxu0 %v254
        %396 = vmatprep.subr.mxu0 0.0
        %397 = vmatpush1.msra.mxu0 %v255
        %398 = vmatprep.subr.mxu0 0.0
        %399 = vmatpush1.msra.mxu0 %v256
        %400 = vmatprep.subr.mxu0 0.0
        %401 = vmatpush1.msra.mxu0 %v257
        %402 = vmatprep.subr.mxu0 0.0
        %403 = vmatpush1.msra.mxu0 0.0
        %404 = vmatprep.subr.mxu0 0.0
        %405 = vmatpush1.msra.mxu0 0.0
        %406 = vmatprep.subr.mxu0 0.0
        %407 = vmatpush1.msra.mxu0 0.0
        %408 = vmatprep.subr.mxu0 0.0
        %409 = vmatpush1.msra.mxu0 0.0
        %410 = vmatprep.subr.mxu0 0.0
        %411 = vmatpush1.msra.mxu0 0.0
        %412 = vmatprep.subr.mxu0 0.0
        %413 = vmatpush1.msra.mxu0 0.0
        %414 = vmatprep.subr.mxu0 0.0
        %415 = vmatpush1.msra.mxu0 0.0
        %416 = vmatprep.subr.mxu0 0.0
        %417 = vmatpush1.msra.mxu0 0.0
        %418 = vmatprep.subr.mxu0 0.0
        %419 = vmatpush1.msra.mxu0 0.0
        %420 = vmatprep.subr.mxu0 0.0
        %421 = vmatpush1.msra.mxu0 0.0
        %422 = vmatprep.subr.mxu0 0.0
        %423 = vmatpush1.msra.mxu0 0.0
        %424 = vmatprep.subr.mxu0 0.0
        %425 = vmatpush1.msra.mxu0 0.0
        %426 = vmatprep.subr.mxu0 0.0
        %427 = vmatpush1.msra.mxu0 0.0
        %428 = vmatprep.subr.mxu0 0.0
        %429 = vmatpush1.msra.mxu0 0.0
        %430 = vmatprep.subr.mxu0 0.0
        %431 = vmatpush1.msra.mxu0 0.0
        %432 = vmatprep.subr.mxu0 0.0
        %433 = vmatpush1.msra.mxu0 0.0
        %434 = vmatprep.mubr.f32.mxu0 0.0
        %435 = vmatmul.mubr.f32.gmra.mrb[0].mxu0 %v237
        %v436 = vpop.f32.mrb[0].mxu0
        %v437 = vadd.f32 %v347, %v436
        %v438 = vpop.f32.mrb[0].mxu0
        %439 = vmatprep.mubr.f32.mxu0 0.0
        %440 = vmatmul.mubr.f32.gmra.mrb[0].mxu0 %v238
        %v441 = vpop.f32.mrb[0].mxu0
        %v442 = vadd.f32 %v352, %v441
        %v443 = vpop.f32.mrb[0].mxu0
        %444 = vmatprep.mubr.f32.mxu0 0.0
        %445 = vmatmul.mubr.f32.gmra.mrb[0].mxu0 %v239
        %v446 = vpop.f32.mrb[0].mxu0
        %v447 = vadd.f32 %v357, %v446
        %v448 = vpop.f32.mrb[0].mxu0
        %449 = vmatprep.mubr.f32.mxu0 0.0
        %450 = vmatmul.mubr.f32.gmra.mrb[0].mxu0 %v240
        %v451 = vpop.f32.mrb[0].mxu0
        %v452 = vadd.f32 %v362, %v451
        %v453 = vpop.f32.mrb[0].mxu0
        %454 = vmatprep.mubr.f32.mxu0 0.0
        %455 = vmatmul.mubr.f32.gmra.mrb[0].mxu0 %v241
        %v456 = vpop.f32.mrb[0].mxu0
        %v457 = vadd.f32 %v367, %v456
        %v458 = vpop.f32.mrb[0].mxu0
        %459 = vdwg.mxu0
        %v460 = vld [vmem:[#allocation2 + $0x2] sm:$0xff]
        %v461 = vld [vmem:[#allocation2 + $0xa] sm:$0xff]
        %v462 = vld [vmem:[#allocation2 + $0x12] sm:$0xff]
        %v463 = vld [vmem:[#allocation2 + $0x1a] sm:$0xff]
        %v464 = vld [vmem:[#allocation2 + $0x22] sm:$0x3f]
        %s465 = scalar_lea.vmem [#allocation6], 256
        %v466 = vld [vmem:[%s465] sm:$0xff]
        %v467 = vld [vmem:[%s465 + $0x8] sm:$0xff]
        %v468 = vld [vmem:[%s465 + $0x10] sm:$0xff]
        %v469 = vld [vmem:[%s465 + $0x18] sm:$0xff]
        %v470 = vld [vmem:[%s465 + $0x20] sm:$0xff]
        %v471 = vld [vmem:[%s465 + $0x28] sm:$0xff]
        %v472 = vld [vmem:[%s465 + $0x30] sm:$0xff]
        %v473 = vld [vmem:[%s465 + $0x38] sm:$0xff]
        %v474 = vld [vmem:[%s465 + $0x40] sm:$0xff]
        %v475 = vld [vmem:[%s465 + $0x48] sm:$0xff]
        %v476 = vld [vmem:[%s465 + $0x50] sm:$0xff]
        %v477 = vld [vmem:[%s465 + $0x58] sm:$0xff]
        %v478 = vld [vmem:[%s465 + $0x60] sm:$0xff]
        %v479 = vld [vmem:[%s465 + $0x68] sm:$0xff]
        %v480 = vld [vmem:[%s465 + $0x70] sm:$0xff]
        %v481 = vld [vmem:[%s465 + $0x78] sm:$0xff]
        %482 = vmatprep.subr.mxu0 0.0
        %483 = vmatpush1.msra.mxu0 %v466
        %484 = vmatprep.subr.mxu0 0.0
        %485 = vmatpush1.msra.mxu0 %v467
        %486 = vmatprep.subr.mxu0 0.0
        %487 = vmatpush1.msra.mxu0 %v468
        %488 = vmatprep.subr.mxu0 0.0
        %489 = vmatpush1.msra.mxu0 %v469
        %490 = vmatprep.subr.mxu0 0.0
        %491 = vmatpush1.msra.mxu0 %v470
        %492 = vmatprep.subr.mxu0 0.0
        %493 = vmatpush1.msra.mxu0 %v471
        %494 = vmatprep.subr.mxu0 0.0
        %495 = vmatpush1.msra.mxu0 %v472
        %496 = vmatprep.subr.mxu0 0.0
        %497 = vmatpush1.msra.mxu0 %v473
        %498 = vmatprep.subr.mxu0 0.0
        %499 = vmatpush1.msra.mxu0 %v474
        %500 = vmatprep.subr.mxu0 0.0
        %501 = vmatpush1.msra.mxu0 %v475
        %502 = vmatprep.subr.mxu0 0.0
        %503 = vmatpush1.msra.mxu0 %v476
        %504 = vmatprep.subr.mxu0 0.0
        %505 = vmatpush1.msra.mxu0 %v477
        %506 = vmatprep.subr.mxu0 0.0
        %507 = vmatpush1.msra.mxu0 %v478
        %508 = vmatprep.subr.mxu0 0.0
        %509 = vmatpush1.msra.mxu0 %v479
        %510 = vmatprep.subr.mxu0 0.0
        %511 = vmatpush1.msra.mxu0 %v480
        %512 = vmatprep.subr.mxu0 0.0
        %513 = vmatpush1.msra.mxu0 %v481
        %514 = vmatprep.subr.mxu0 0.0
        %515 = vmatpush1.msra.mxu0 0.0
        %516 = vmatprep.subr.mxu0 0.0
        %517 = vmatpush1.msra.mxu0 0.0
        %518 = vmatprep.subr.mxu0 0.0
        %519 = vmatpush1.msra.mxu0 0.0
        %520 = vmatprep.subr.mxu0 0.0
        %521 = vmatpush1.msra.mxu0 0.0
        %522 = vmatprep.subr.mxu0 0.0
        %523 = vmatpush1.msra.mxu0 0.0
        %524 = vmatprep.subr.mxu0 0.0
        %525 = vmatpush1.msra.mxu0 0.0
        %526 = vmatprep.subr.mxu0 0.0
        %527 = vmatpush1.msra.mxu0 0.0
        %528 = vmatprep.subr.mxu0 0.0
        %529 = vmatpush1.msra.mxu0 0.0
        %530 = vmatprep.subr.mxu0 0.0
        %531 = vmatpush1.msra.mxu0 0.0
        %532 = vmatprep.subr.mxu0 0.0
        %533 = vmatpush1.msra.mxu0 0.0
        %534 = vmatprep.subr.mxu0 0.0
        %535 = vmatpush1.msra.mxu0 0.0
        %536 = vmatprep.subr.mxu0 0.0
        %537 = vmatpush1.msra.mxu0 0.0
        %538 = vmatprep.subr.mxu0 0.0
        %539 = vmatpush1.msra.mxu0 0.0
        %540 = vmatprep.subr.mxu0 0.0
        %541 = vmatpush1.msra.mxu0 0.0
        %542 = vmatprep.subr.mxu0 0.0
        %543 = vmatpush1.msra.mxu0 0.0
        %544 = vmatprep.subr.mxu0 0.0
        %545 = vmatpush1.msra.mxu0 0.0
        %546 = vmatprep.mubr.f32.mxu0 0.0
        %547 = vmatmul.mubr.f32.gmra.mrb[0].mxu0 %v460
        %v548 = vpop.f32.mrb[0].mxu0
        %v549 = vadd.f32 0.0, %v548
        %v550 = vpop.f32.mrb[0].mxu0
        %551 = vmatprep.mubr.f32.mxu0 0.0
        %552 = vmatmul.mubr.f32.gmra.mrb[0].mxu0 %v461
        %v553 = vpop.f32.mrb[0].mxu0
        %v554 = vadd.f32 0.0, %v553
        %v555 = vpop.f32.mrb[0].mxu0
        %556 = vmatprep.mubr.f32.mxu0 0.0
        %557 = vmatmul.mubr.f32.gmra.mrb[0].mxu0 %v462
        %v558 = vpop.f32.mrb[0].mxu0
        %v559 = vadd.f32 0.0, %v558
        %v560 = vpop.f32.mrb[0].mxu0
        %561 = vmatprep.mubr.f32.mxu0 0.0
        %562 = vmatmul.mubr.f32.gmra.mrb[0].mxu0 %v463
        %v563 = vpop.f32.mrb[0].mxu0
        %v564 = vadd.f32 0.0, %v563
        %v565 = vpop.f32.mrb[0].mxu0
        %566 = vmatprep.mubr.f32.mxu0 0.0
        %567 = vmatmul.mubr.f32.gmra.mrb[0].mxu0 %v464
        %v568 = vpop.f32.mrb[0].mxu0
        %v569 = vadd.f32 0.0, %v568
        %v570 = vpop.f32.mrb[0].mxu0
        %571 = vdwg.mxu0
        %v572 = vadd.f32 %v437, %v549
        %v573 = vadd.f32 %v442, %v554
        %v574 = vadd.f32 %v447, %v559
        %v575 = vadd.f32 %v452, %v564
        %v576 = vadd.f32 %v457, %v569
        %v577 = vld [vmem:[#allocation2 + $0xa] sm:$0xff]
        %v578 = vld [vmem:[#allocation2 + $0x12] sm:$0xff]
        %v579 = vld [vmem:[#allocation2 + $0x1a] sm:$0xff]
        %v580 = vld [vmem:[#allocation2 + $0x22] sm:$0xff]
        %v581 = vld [vmem:[#allocation2 + $0x2a] sm:$0x3f]
        %s582 = scalar_lea.vmem [#allocation6], 384
        %v583 = vld [vmem:[%s582] sm:$0xff]
        %v584 = vld [vmem:[%s582 + $0x8] sm:$0xff]
        %v585 = vld [vmem:[%s582 + $0x10] sm:$0xff]
        %v586 = vld [vmem:[%s582 + $0x18] sm:$0xff]
        %v587 = vld [vmem:[%s582 + $0x20] sm:$0xff]
        %v588 = vld [vmem:[%s582 + $0x28] sm:$0xff]
        %v589 = vld [vmem:[%s582 + $0x30] sm:$0xff]
        %v590 = vld [vmem:[%s582 + $0x38] sm:$0xff]
        %v591 = vld [vmem:[%s582 + $0x40] sm:$0xff]
        %v592 = vld [vmem:[%s582 + $0x48] sm:$0xff]
        %v593 = vld [vmem:[%s582 + $0x50] sm:$0xff]
        %v594 = vld [vmem:[%s582 + $0x58] sm:$0xff]
        %v595 = vld [vmem:[%s582 + $0x60] sm:$0xff]
        %v596 = vld [vmem:[%s582 + $0x68] sm:$0xff]
        %v597 = vld [vmem:[%s582 + $0x70] sm:$0xff]
        %v598 = vld [vmem:[%s582 + $0x78] sm:$0xff]
        %599 = vmatprep.subr.mxu0 0.0
        %600 = vmatpush1.msra.mxu0 %v583
        %601 = vmatprep.subr.mxu0 0.0
        %602 = vmatpush1.msra.mxu0 %v584
        %603 = vmatprep.subr.mxu0 0.0
        %604 = vmatpush1.msra.mxu0 %v585
        %605 = vmatprep.subr.mxu0 0.0
        %606 = vmatpush1.msra.mxu0 %v586
        %607 = vmatprep.subr.mxu0 0.0
        %608 = vmatpush1.msra.mxu0 %v587
        %609 = vmatprep.subr.mxu0 0.0
        %610 = vmatpush1.msra.mxu0 %v588
        %611 = vmatprep.subr.mxu0 0.0
        %612 = vmatpush1.msra.mxu0 %v589
        %613 = vmatprep.subr.mxu0 0.0
        %614 = vmatpush1.msra.mxu0 %v590
        %615 = vmatprep.subr.mxu0 0.0
        %616 = vmatpush1.msra.mxu0 %v591
        %617 = vmatprep.subr.mxu0 0.0
        %618 = vmatpush1.msra.mxu0 %v592
        %619 = vmatprep.subr.mxu0 0.0
        %620 = vmatpush1.msra.mxu0 %v593
        %621 = vmatprep.subr.mxu0 0.0
        %622 = vmatpush1.msra.mxu0 %v594
        %623 = vmatprep.subr.mxu0 0.0
        %624 = vmatpush1.msra.mxu0 %v595
        %625 = vmatprep.subr.mxu0 0.0
        %626 = vmatpush1.msra.mxu0 %v596
        %627 = vmatprep.subr.mxu0 0.0
        %628 = vmatpush1.msra.mxu0 %v597
        %629 = vmatprep.subr.mxu0 0.0
        %630 = vmatpush1.msra.mxu0 %v598
        %631 = vmatprep.subr.mxu0 0.0
        %632 = vmatpush1.msra.mxu0 0.0
        %633 = vmatprep.subr.mxu0 0.0
        %634 = vmatpush1.msra.mxu0 0.0
        %635 = vmatprep.subr.mxu0 0.0
        %636 = vmatpush1.msra.mxu0 0.0
        %637 = vmatprep.subr.mxu0 0.0
        %638 = vmatpush1.msra.mxu0 0.0
        %639 = vmatprep.subr.mxu0 0.0
        %640 = vmatpush1.msra.mxu0 0.0
        %641 = vmatprep.subr.mxu0 0.0
        %642 = vmatpush1.msra.mxu0 0.0
        %643 = vmatprep.subr.mxu0 0.0
        %644 = vmatpush1.msra.mxu0 0.0
        %645 = vmatprep.subr.mxu0 0.0
        %646 = vmatpush1.msra.mxu0 0.0
        %647 = vmatprep.subr.mxu0 0.0
        %648 = vmatpush1.msra.mxu0 0.0
        %649 = vmatprep.subr.mxu0 0.0
        %650 = vmatpush1.msra.mxu0 0.0
        %651 = vmatprep.subr.mxu0 0.0
        %652 = vmatpush1.msra.mxu0 0.0
        %653 = vmatprep.subr.mxu0 0.0
        %654 = vmatpush1.msra.mxu0 0.0
        %655 = vmatprep.subr.mxu0 0.0
        %656 = vmatpush1.msra.mxu0 0.0
        %657 = vmatprep.subr.mxu0 0.0
        %658 = vmatpush1.msra.mxu0 0.0
        %659 = vmatprep.subr.mxu0 0.0
        %660 = vmatpush1.msra.mxu0 0.0
        %661 = vmatprep.subr.mxu0 0.0
        %662 = vmatpush1.msra.mxu0 0.0
        %663 = vmatprep.mubr.f32.mxu0 0.0
        %664 = vmatmul.mubr.f32.gmra.mrb[0].mxu0 %v577
        %v665 = vpop.f32.mrb[0].mxu0
        %v666 = vadd.f32 0.0, %v665
        %v667 = vpop.f32.mrb[0].mxu0
        %668 = vmatprep.mubr.f32.mxu0 0.0
        %669 = vmatmul.mubr.f32.gmra.mrb[0].mxu0 %v578
        %v670 = vpop.f32.mrb[0].mxu0
        %v671 = vadd.f32 0.0, %v670
        %v672 = vpop.f32.mrb[0].mxu0
        %673 = vmatprep.mubr.f32.mxu0 0.0
        %674 = vmatmul.mubr.f32.gmra.mrb[0].mxu0 %v579
        %v675 = vpop.f32.mrb[0].mxu0
        %v676 = vadd.f32 0.0, %v675
        %v677 = vpop.f32.mrb[0].mxu0
        %678 = vmatprep.mubr.f32.mxu0 0.0
        %679 = vmatmul.mubr.f32.gmra.mrb[0].mxu0 %v580
        %v680 = vpop.f32.mrb[0].mxu0
        %v681 = vadd.f32 0.0, %v680
        %v682 = vpop.f32.mrb[0].mxu0
        %683 = vmatprep.mubr.f32.mxu0 0.0
        %684 = vmatmul.mubr.f32.gmra.mrb[0].mxu0 %v581
        %v685 = vpop.f32.mrb[0].mxu0
        %v686 = vadd.f32 0.0, %v685
        %v687 = vpop.f32.mrb[0].mxu0
        %688 = vdwg.mxu0
        %v689 = vadd.f32 %v572, %v666
        %v690 = vadd.f32 %v573, %v671
        %v691 = vadd.f32 %v574, %v676
        %v692 = vadd.f32 %v575, %v681
        %v693 = vadd.f32 %v576, %v686
        %v694 = vld [vmem:[#allocation2 + $0xb] sm:$0xff]
        %v695 = vld [vmem:[#allocation2 + $0x13] sm:$0xff]
        %v696 = vld [vmem:[#allocation2 + $0x1b] sm:$0xff]
        %v697 = vld [vmem:[#allocation2 + $0x23] sm:$0xff]
        %v698 = vld [vmem:[#allocation2 + $0x2b] sm:$0x3f]
        %s699 = scalar_lea.vmem [#allocation6], 512
        %v700 = vld [vmem:[%s699] sm:$0xff]
        %v701 = vld [vmem:[%s699 + $0x8] sm:$0xff]
        %v702 = vld [vmem:[%s699 + $0x10] sm:$0xff]
        %v703 = vld [vmem:[%s699 + $0x18] sm:$0xff]
        %v704 = vld [vmem:[%s699 + $0x20] sm:$0xff]
        %v705 = vld [vmem:[%s699 + $0x28] sm:$0xff]
        %v706 = vld [vmem:[%s699 + $0x30] sm:$0xff]
        %v707 = vld [vmem:[%s699 + $0x38] sm:$0xff]
        %v708 = vld [vmem:[%s699 + $0x40] sm:$0xff]
        %v709 = vld [vmem:[%s699 + $0x48] sm:$0xff]
        %v710 = vld [vmem:[%s699 + $0x50] sm:$0xff]
        %v711 = vld [vmem:[%s699 + $0x58] sm:$0xff]
        %v712 = vld [vmem:[%s699 + $0x60] sm:$0xff]
        %v713 = vld [vmem:[%s699 + $0x68] sm:$0xff]
        %v714 = vld [vmem:[%s699 + $0x70] sm:$0xff]
        %v715 = vld [vmem:[%s699 + $0x78] sm:$0xff]
        %716 = vmatprep.subr.mxu0 0.0
        %717 = vmatpush1.msra.mxu0 %v700
        %718 = vmatprep.subr.mxu0 0.0
        %719 = vmatpush1.msra.mxu0 %v701
        %720 = vmatprep.subr.mxu0 0.0
        %721 = vmatpush1.msra.mxu0 %v702
        %722 = vmatprep.subr.mxu0 0.0
        %723 = vmatpush1.msra.mxu0 %v703
        %724 = vmatprep.subr.mxu0 0.0
        %725 = vmatpush1.msra.mxu0 %v704
        %726 = vmatprep.subr.mxu0 0.0
        %727 = vmatpush1.msra.mxu0 %v705
        %728 = vmatprep.subr.mxu0 0.0
        %729 = vmatpush1.msra.mxu0 %v706
        %730 = vmatprep.subr.mxu0 0.0
        %731 = vmatpush1.msra.mxu0 %v707
        %732 = vmatprep.subr.mxu0 0.0
        %733 = vmatpush1.msra.mxu0 %v708
        %734 = vmatprep.subr.mxu0 0.0
        %735 = vmatpush1.msra.mxu0 %v709
        %736 = vmatprep.subr.mxu0 0.0
        %737 = vmatpush1.msra.mxu0 %v710
        %738 = vmatprep.subr.mxu0 0.0
        %739 = vmatpush1.msra.mxu0 %v711
        %740 = vmatprep.subr.mxu0 0.0
        %741 = vmatpush1.msra.mxu0 %v712
        %742 = vmatprep.subr.mxu0 0.0
        %743 = vmatpush1.msra.mxu0 %v713
        %744 = vmatprep.subr.mxu0 0.0
        %745 = vmatpush1.msra.mxu0 %v714
        %746 = vmatprep.subr.mxu0 0.0
        %747 = vmatpush1.msra.mxu0 %v715
        %748 = vmatprep.subr.mxu0 0.0
        %749 = vmatpush1.msra.mxu0 0.0
        %750 = vmatprep.subr.mxu0 0.0
        %751 = vmatpush1.msra.mxu0 0.0
        %752 = vmatprep.subr.mxu0 0.0
        %753 = vmatpush1.msra.mxu0 0.0
        %754 = vmatprep.subr.mxu0 0.0
        %755 = vmatpush1.msra.mxu0 0.0
        %756 = vmatprep.subr.mxu0 0.0
        %757 = vmatpush1.msra.mxu0 0.0
        %758 = vmatprep.subr.mxu0 0.0
        %759 = vmatpush1.msra.mxu0 0.0
        %760 = vmatprep.subr.mxu0 0.0
        %761 = vmatpush1.msra.mxu0 0.0
        %762 = vmatprep.subr.mxu0 0.0
        %763 = vmatpush1.msra.mxu0 0.0
        %764 = vmatprep.subr.mxu0 0.0
        %765 = vmatpush1.msra.mxu0 0.0
        %766 = vmatprep.subr.mxu0 0.0
        %767 = vmatpush1.msra.mxu0 0.0
        %768 = vmatprep.subr.mxu0 0.0
        %769 = vmatpush1.msra.mxu0 0.0
        %770 = vmatprep.subr.mxu0 0.0
        %771 = vmatpush1.msra.mxu0 0.0
        %772 = vmatprep.subr.mxu0 0.0
        %773 = vmatpush1.msra.mxu0 0.0
        %774 = vmatprep.subr.mxu0 0.0
        %775 = vmatpush1.msra.mxu0 0.0
        %776 = vmatprep.subr.mxu0 0.0
        %777 = vmatpush1.msra.mxu0 0.0
        %778 = vmatprep.subr.mxu0 0.0
        %779 = vmatpush1.msra.mxu0 0.0
        %780 = vmatprep.mubr.f32.mxu0 0.0
        %781 = vmatmul.mubr.f32.gmra.mrb[0].mxu0 %v694
        %v782 = vpop.f32.mrb[0].mxu0
        %v783 = vadd.f32 0.0, %v782
        %v784 = vpop.f32.mrb[0].mxu0
        %785 = vmatprep.mubr.f32.mxu0 0.0
        %786 = vmatmul.mubr.f32.gmra.mrb[0].mxu0 %v695
        %v787 = vpop.f32.mrb[0].mxu0
        %v788 = vadd.f32 0.0, %v787
        %v789 = vpop.f32.mrb[0].mxu0
        %790 = vmatprep.mubr.f32.mxu0 0.0
        %791 = vmatmul.mubr.f32.gmra.mrb[0].mxu0 %v696
        %v792 = vpop.f32.mrb[0].mxu0
        %v793 = vadd.f32 0.0, %v792
        %v794 = vpop.f32.mrb[0].mxu0
        %795 = vmatprep.mubr.f32.mxu0 0.0
        %796 = vmatmul.mubr.f32.gmra.mrb[0].mxu0 %v697
        %v797 = vpop.f32.mrb[0].mxu0
        %v798 = vadd.f32 0.0, %v797
        %v799 = vpop.f32.mrb[0].mxu0
        %800 = vmatprep.mubr.f32.mxu0 0.0
        %801 = vmatmul.mubr.f32.gmra.mrb[0].mxu0 %v698
        %v802 = vpop.f32.mrb[0].mxu0
        %v803 = vadd.f32 0.0, %v802
        %v804 = vpop.f32.mrb[0].mxu0
        %805 = vdwg.mxu0
        %v806 = vadd.f32 %v689, %v783
        %v807 = vadd.f32 %v690, %v788
        %v808 = vadd.f32 %v691, %v793
        %v809 = vadd.f32 %v692, %v798
        %v810 = vadd.f32 %v693, %v803
        %v811 = vld [vmem:[#allocation2 + $0xc] sm:$0xff]
        %v812 = vld [vmem:[#allocation2 + $0x14] sm:$0xff]
        %v813 = vld [vmem:[#allocation2 + $0x1c] sm:$0xff]
        %v814 = vld [vmem:[#allocation2 + $0x24] sm:$0xff]
        %v815 = vld [vmem:[#allocation2 + $0x2c] sm:$0x3f]
        %s816 = scalar_lea.vmem [#allocation6], 640
        %v817 = vld [vmem:[%s816] sm:$0xff]
        %v818 = vld [vmem:[%s816 + $0x8] sm:$0xff]
        %v819 = vld [vmem:[%s816 + $0x10] sm:$0xff]
        %v820 = vld [vmem:[%s816 + $0x18] sm:$0xff]
        %v821 = vld [vmem:[%s816 + $0x20] sm:$0xff]
        %v822 = vld [vmem:[%s816 + $0x28] sm:$0xff]
        %v823 = vld [vmem:[%s816 + $0x30] sm:$0xff]
        %v824 = vld [vmem:[%s816 + $0x38] sm:$0xff]
        %v825 = vld [vmem:[%s816 + $0x40] sm:$0xff]
        %v826 = vld [vmem:[%s816 + $0x48] sm:$0xff]
        %v827 = vld [vmem:[%s816 + $0x50] sm:$0xff]
        %v828 = vld [vmem:[%s816 + $0x58] sm:$0xff]
        %v829 = vld [vmem:[%s816 + $0x60] sm:$0xff]
        %v830 = vld [vmem:[%s816 + $0x68] sm:$0xff]
        %v831 = vld [vmem:[%s816 + $0x70] sm:$0xff]
        %v832 = vld [vmem:[%s816 + $0x78] sm:$0xff]
        %833 = vmatprep.subr.mxu0 0.0
        %834 = vmatpush1.msra.mxu0 %v817
        %835 = vmatprep.subr.mxu0 0.0
        %836 = vmatpush1.msra.mxu0 %v818
        %837 = vmatprep.subr.mxu0 0.0
        %838 = vmatpush1.msra.mxu0 %v819
        %839 = vmatprep.subr.mxu0 0.0
        %840 = vmatpush1.msra.mxu0 %v820
        %841 = vmatprep.subr.mxu0 0.0
        %842 = vmatpush1.msra.mxu0 %v821
        %843 = vmatprep.subr.mxu0 0.0
        %844 = vmatpush1.msra.mxu0 %v822
        %845 = vmatprep.subr.mxu0 0.0
        %846 = vmatpush1.msra.mxu0 %v823
        %847 = vmatprep.subr.mxu0 0.0
        %848 = vmatpush1.msra.mxu0 %v824
        %849 = vmatprep.subr.mxu0 0.0
        %850 = vmatpush1.msra.mxu0 %v825
        %851 = vmatprep.subr.mxu0 0.0
        %852 = vmatpush1.msra.mxu0 %v826
        %853 = vmatprep.subr.mxu0 0.0
        %854 = vmatpush1.msra.mxu0 %v827
        %855 = vmatprep.subr.mxu0 0.0
        %856 = vmatpush1.msra.mxu0 %v828
        %857 = vmatprep.subr.mxu0 0.0
        %858 = vmatpush1.msra.mxu0 %v829
        %859 = vmatprep.subr.mxu0 0.0
        %860 = vmatpush1.msra.mxu0 %v830
        %861 = vmatprep.subr.mxu0 0.0
        %862 = vmatpush1.msra.mxu0 %v831
        %863 = vmatprep.subr.mxu0 0.0
        %864 = vmatpush1.msra.mxu0 %v832
        %865 = vmatprep.subr.mxu0 0.0
        %866 = vmatpush1.msra.mxu0 0.0
        %867 = vmatprep.subr.mxu0 0.0
        %868 = vmatpush1.msra.mxu0 0.0
        %869 = vmatprep.subr.mxu0 0.0
        %870 = vmatpush1.msra.mxu0 0.0
        %871 = vmatprep.subr.mxu0 0.0
        %872 = vmatpush1.msra.mxu0 0.0
        %873 = vmatprep.subr.mxu0 0.0
        %874 = vmatpush1.msra.mxu0 0.0
        %875 = vmatprep.subr.mxu0 0.0
        %876 = vmatpush1.msra.mxu0 0.0
        %877 = vmatprep.subr.mxu0 0.0
        %878 = vmatpush1.msra.mxu0 0.0
        %879 = vmatprep.subr.mxu0 0.0
        %880 = vmatpush1.msra.mxu0 0.0
        %881 = vmatprep.subr.mxu0 0.0
        %882 = vmatpush1.msra.mxu0 0.0
        %883 = vmatprep.subr.mxu0 0.0
        %884 = vmatpush1.msra.mxu0 0.0
        %885 = vmatprep.subr.mxu0 0.0
        %886 = vmatpush1.msra.mxu0 0.0
        %887 = vmatprep.subr.mxu0 0.0
        %888 = vmatpush1.msra.mxu0 0.0
        %889 = vmatprep.subr.mxu0 0.0
        %890 = vmatpush1.msra.mxu0 0.0
        %891 = vmatprep.subr.mxu0 0.0
        %892 = vmatpush1.msra.mxu0 0.0
        %893 = vmatprep.subr.mxu0 0.0
        %894 = vmatpush1.msra.mxu0 0.0
        %895 = vmatprep.subr.mxu0 0.0
        %896 = vmatpush1.msra.mxu0 0.0
        %897 = vmatprep.mubr.f32.mxu0 0.0
        %898 = vmatmul.mubr.f32.gmra.mrb[0].mxu0 %v811
        %v899 = vpop.f32.mrb[0].mxu0
        %v900 = vadd.f32 0.0, %v899
        %v901 = vpop.f32.mrb[0].mxu0
        %902 = vmatprep.mubr.f32.mxu0 0.0
        %903 = vmatmul.mubr.f32.gmra.mrb[0].mxu0 %v812
        %v904 = vpop.f32.mrb[0].mxu0
        %v905 = vadd.f32 0.0, %v904
        %v906 = vpop.f32.mrb[0].mxu0
        %907 = vmatprep.mubr.f32.mxu0 0.0
        %908 = vmatmul.mubr.f32.gmra.mrb[0].mxu0 %v813
        %v909 = vpop.f32.mrb[0].mxu0
        %v910 = vadd.f32 0.0, %v909
        %v911 = vpop.f32.mrb[0].mxu0
        %912 = vmatprep.mubr.f32.mxu0 0.0
        %913 = vmatmul.mubr.f32.gmra.mrb[0].mxu0 %v814
        %v914 = vpop.f32.mrb[0].mxu0
        %v915 = vadd.f32 0.0, %v914
        %v916 = vpop.f32.mrb[0].mxu0
        %917 = vmatprep.mubr.f32.mxu0 0.0
        %918 = vmatmul.mubr.f32.gmra.mrb[0].mxu0 %v815
        %v919 = vpop.f32.mrb[0].mxu0
        %v920 = vadd.f32 0.0, %v919
        %v921 = vpop.f32.mrb[0].mxu0
        %922 = vdwg.mxu0
        %v923 = vadd.f32 %v806, %v900
        %v924 = vadd.f32 %v807, %v905
        %v925 = vadd.f32 %v808, %v910
        %v926 = vadd.f32 %v809, %v915
        %v927 = vadd.f32 %v810, %v920
        %v928 = vld [vmem:[#allocation2 + $0x14] sm:$0xff]
        %v929 = vld [vmem:[#allocation2 + $0x1c] sm:$0xff]
        %v930 = vld [vmem:[#allocation2 + $0x24] sm:$0xff]
        %v931 = vld [vmem:[#allocation2 + $0x2c] sm:$0xff]
        %v932 = vld [vmem:[#allocation2 + $0x34] sm:$0x3f]
        %s933 = scalar_lea.vmem [#allocation6], 768
        %v934 = vld [vmem:[%s933] sm:$0xff]
        %v935 = vld [vmem:[%s933 + $0x8] sm:$0xff]
        %v936 = vld [vmem:[%s933 + $0x10] sm:$0xff]
        %v937 = vld [vmem:[%s933 + $0x18] sm:$0xff]
        %v938 = vld [vmem:[%s933 + $0x20] sm:$0xff]
        %v939 = vld [vmem:[%s933 + $0x28] sm:$0xff]
        %v940 = vld [vmem:[%s933 + $0x30] sm:$0xff]
        %v941 = vld [vmem:[%s933 + $0x38] sm:$0xff]
        %v942 = vld [vmem:[%s933 + $0x40] sm:$0xff]
        %v943 = vld [vmem:[%s933 + $0x48] sm:$0xff]
        %v944 = vld [vmem:[%s933 + $0x50] sm:$0xff]
        %v945 = vld [vmem:[%s933 + $0x58] sm:$0xff]
        %v946 = vld [vmem:[%s933 + $0x60] sm:$0xff]
        %v947 = vld [vmem:[%s933 + $0x68] sm:$0xff]
        %v948 = vld [vmem:[%s933 + $0x70] sm:$0xff]
        %v949 = vld [vmem:[%s933 + $0x78] sm:$0xff]
        %950 = vmatprep.subr.mxu0 0.0
        %951 = vmatpush1.msra.mxu0 %v934
        %952 = vmatprep.subr.mxu0 0.0
        %953 = vmatpush1.msra.mxu0 %v935
        %954 = vmatprep.subr.mxu0 0.0
        %955 = vmatpush1.msra.mxu0 %v936
        %956 = vmatprep.subr.mxu0 0.0
        %957 = vmatpush1.msra.mxu0 %v937
        %958 = vmatprep.subr.mxu0 0.0
        %959 = vmatpush1.msra.mxu0 %v938
        %960 = vmatprep.subr.mxu0 0.0
        %961 = vmatpush1.msra.mxu0 %v939
        %962 = vmatprep.subr.mxu0 0.0
        %963 = vmatpush1.msra.mxu0 %v940
        %964 = vmatprep.subr.mxu0 0.0
        %965 = vmatpush1.msra.mxu0 %v941
        %966 = vmatprep.subr.mxu0 0.0
        %967 = vmatpush1.msra.mxu0 %v942
        %968 = vmatprep.subr.mxu0 0.0
        %969 = vmatpush1.msra.mxu0 %v943
        %970 = vmatprep.subr.mxu0 0.0
        %971 = vmatpush1.msra.mxu0 %v944
        %972 = vmatprep.subr.mxu0 0.0
        %973 = vmatpush1.msra.mxu0 %v945
        %974 = vmatprep.subr.mxu0 0.0
        %975 = vmatpush1.msra.mxu0 %v946
        %976 = vmatprep.subr.mxu0 0.0
        %977 = vmatpush1.msra.mxu0 %v947
        %978 = vmatprep.subr.mxu0 0.0
        %979 = vmatpush1.msra.mxu0 %v948
        %980 = vmatprep.subr.mxu0 0.0
        %981 = vmatpush1.msra.mxu0 %v949
        %982 = vmatprep.subr.mxu0 0.0
        %983 = vmatpush1.msra.mxu0 0.0
        %984 = vmatprep.subr.mxu0 0.0
        %985 = vmatpush1.msra.mxu0 0.0
        %986 = vmatprep.subr.mxu0 0.0
        %987 = vmatpush1.msra.mxu0 0.0
        %988 = vmatprep.subr.mxu0 0.0
        %989 = vmatpush1.msra.mxu0 0.0
        %990 = vmatprep.subr.mxu0 0.0
        %991 = vmatpush1.msra.mxu0 0.0
        %992 = vmatprep.subr.mxu0 0.0
        %993 = vmatpush1.msra.mxu0 0.0
        %994 = vmatprep.subr.mxu0 0.0
        %995 = vmatpush1.msra.mxu0 0.0
        %996 = vmatprep.subr.mxu0 0.0
        %997 = vmatpush1.msra.mxu0 0.0
        %998 = vmatprep.subr.mxu0 0.0
        %999 = vmatpush1.msra.mxu0 0.0
        %1000 = vmatprep.subr.mxu0 0.0
        %1001 = vmatpush1.msra.mxu0 0.0
        %1002 = vmatprep.subr.mxu0 0.0
        %1003 = vmatpush1.msra.mxu0 0.0
        %1004 = vmatprep.subr.mxu0 0.0
        %1005 = vmatpush1.msra.mxu0 0.0
        %1006 = vmatprep.subr.mxu0 0.0
        %1007 = vmatpush1.msra.mxu0 0.0
        %1008 = vmatprep.subr.mxu0 0.0
        %1009 = vmatpush1.msra.mxu0 0.0
        %1010 = vmatprep.subr.mxu0 0.0
        %1011 = vmatpush1.msra.mxu0 0.0
        %1012 = vmatprep.subr.mxu0 0.0
        %1013 = vmatpush1.msra.mxu0 0.0
        %1014 = vmatprep.mubr.f32.mxu0 0.0
        %1015 = vmatmul.mubr.f32.gmra.mrb[0].mxu0 %v928
        %v1016 = vpop.f32.mrb[0].mxu0
        %v1017 = vadd.f32 0.0, %v1016
        %v1018 = vpop.f32.mrb[0].mxu0
        %1019 = vmatprep.mubr.f32.mxu0 0.0
        %1020 = vmatmul.mubr.f32.gmra.mrb[0].mxu0 %v929
        %v1021 = vpop.f32.mrb[0].mxu0
        %v1022 = vadd.f32 0.0, %v1021
        %v1023 = vpop.f32.mrb[0].mxu0
        %1024 = vmatprep.mubr.f32.mxu0 0.0
        %1025 = vmatmul.mubr.f32.gmra.mrb[0].mxu0 %v930
        %v1026 = vpop.f32.mrb[0].mxu0
        %v1027 = vadd.f32 0.0, %v1026
        %v1028 = vpop.f32.mrb[0].mxu0
        %1029 = vmatprep.mubr.f32.mxu0 0.0
        %1030 = vmatmul.mubr.f32.gmra.mrb[0].mxu0 %v931
        %v1031 = vpop.f32.mrb[0].mxu0
        %v1032 = vadd.f32 0.0, %v1031
        %v1033 = vpop.f32.mrb[0].mxu0
        %1034 = vmatprep.mubr.f32.mxu0 0.0
        %1035 = vmatmul.mubr.f32.gmra.mrb[0].mxu0 %v932
        %v1036 = vpop.f32.mrb[0].mxu0
        %v1037 = vadd.f32 0.0, %v1036
        %v1038 = vpop.f32.mrb[0].mxu0
        %1039 = vdwg.mxu0
        %v1040 = vadd.f32 %v923, %v1017
        %v1041 = vadd.f32 %v924, %v1022
        %v1042 = vadd.f32 %v925, %v1027
        %v1043 = vadd.f32 %v926, %v1032
        %v1044 = vadd.f32 %v927, %v1037
        %v1045 = vld [vmem:[#allocation2 + $0x15] sm:$0xff]
        %v1046 = vld [vmem:[#allocation2 + $0x1d] sm:$0xff]
        %v1047 = vld [vmem:[#allocation2 + $0x25] sm:$0xff]
        %v1048 = vld [vmem:[#allocation2 + $0x2d] sm:$0xff]
        %v1049 = vld [vmem:[#allocation2 + $0x35] sm:$0x3f]
        %s1050 = scalar_lea.vmem [#allocation6], 896
        %v1051 = vld [vmem:[%s1050] sm:$0xff]
        %v1052 = vld [vmem:[%s1050 + $0x8] sm:$0xff]
        %v1053 = vld [vmem:[%s1050 + $0x10] sm:$0xff]
        %v1054 = vld [vmem:[%s1050 + $0x18] sm:$0xff]
        %v1055 = vld [vmem:[%s1050 + $0x20] sm:$0xff]
        %v1056 = vld [vmem:[%s1050 + $0x28] sm:$0xff]
        %v1057 = vld [vmem:[%s1050 + $0x30] sm:$0xff]
        %v1058 = vld [vmem:[%s1050 + $0x38] sm:$0xff]
        %v1059 = vld [vmem:[%s1050 + $0x40] sm:$0xff]
        %v1060 = vld [vmem:[%s1050 + $0x48] sm:$0xff]
        %v1061 = vld [vmem:[%s1050 + $0x50] sm:$0xff]
        %v1062 = vld [vmem:[%s1050 + $0x58] sm:$0xff]
        %v1063 = vld [vmem:[%s1050 + $0x60] sm:$0xff]
        %v1064 = vld [vmem:[%s1050 + $0x68] sm:$0xff]
        %v1065 = vld [vmem:[%s1050 + $0x70] sm:$0xff]
        %v1066 = vld [vmem:[%s1050 + $0x78] sm:$0xff]
        %1067 = vmatprep.subr.mxu0 0.0
        %1068 = vmatpush1.msra.mxu0 %v1051
        %1069 = vmatprep.subr.mxu0 0.0
        %1070 = vmatpush1.msra.mxu0 %v1052
        %1071 = vmatprep.subr.mxu0 0.0
        %1072 = vmatpush1.msra.mxu0 %v1053
        %1073 = vmatprep.subr.mxu0 0.0
        %1074 = vmatpush1.msra.mxu0 %v1054
        %1075 = vmatprep.subr.mxu0 0.0
        %1076 = vmatpush1.msra.mxu0 %v1055
        %1077 = vmatprep.subr.mxu0 0.0
        %1078 = vmatpush1.msra.mxu0 %v1056
        %1079 = vmatprep.subr.mxu0 0.0
        %1080 = vmatpush1.msra.mxu0 %v1057
        %1081 = vmatprep.subr.mxu0 0.0
        %1082 = vmatpush1.msra.mxu0 %v1058
        %1083 = vmatprep.subr.mxu0 0.0
        %1084 = vmatpush1.msra.mxu0 %v1059
        %1085 = vmatprep.subr.mxu0 0.0
        %1086 = vmatpush1.msra.mxu0 %v1060
        %1087 = vmatprep.subr.mxu0 0.0
        %1088 = vmatpush1.msra.mxu0 %v1061
        %1089 = vmatprep.subr.mxu0 0.0
        %1090 = vmatpush1.msra.mxu0 %v1062
        %1091 = vmatprep.subr.mxu0 0.0
        %1092 = vmatpush1.msra.mxu0 %v1063
        %1093 = vmatprep.subr.mxu0 0.0
        %1094 = vmatpush1.msra.mxu0 %v1064
        %1095 = vmatprep.subr.mxu0 0.0
        %1096 = vmatpush1.msra.mxu0 %v1065
        %1097 = vmatprep.subr.mxu0 0.0
        %1098 = vmatpush1.msra.mxu0 %v1066
        %1099 = vmatprep.subr.mxu0 0.0
        %1100 = vmatpush1.msra.mxu0 0.0
        %1101 = vmatprep.subr.mxu0 0.0
        %1102 = vmatpush1.msra.mxu0 0.0
        %1103 = vmatprep.subr.mxu0 0.0
        %1104 = vmatpush1.msra.mxu0 0.0
        %1105 = vmatprep.subr.mxu0 0.0
        %1106 = vmatpush1.msra.mxu0 0.0
        %1107 = vmatprep.subr.mxu0 0.0
        %1108 = vmatpush1.msra.mxu0 0.0
        %1109 = vmatprep.subr.mxu0 0.0
        %1110 = vmatpush1.msra.mxu0 0.0
        %1111 = vmatprep.subr.mxu0 0.0
        %1112 = vmatpush1.msra.mxu0 0.0
        %1113 = vmatprep.subr.mxu0 0.0
        %1114 = vmatpush1.msra.mxu0 0.0
        %1115 = vmatprep.subr.mxu0 0.0
        %1116 = vmatpush1.msra.mxu0 0.0
        %1117 = vmatprep.subr.mxu0 0.0
        %1118 = vmatpush1.msra.mxu0 0.0
        %1119 = vmatprep.subr.mxu0 0.0
        %1120 = vmatpush1.msra.mxu0 0.0
        %1121 = vmatprep.subr.mxu0 0.0
        %1122 = vmatpush1.msra.mxu0 0.0
        %1123 = vmatprep.subr.mxu0 0.0
        %1124 = vmatpush1.msra.mxu0 0.0
        %1125 = vmatprep.subr.mxu0 0.0
        %1126 = vmatpush1.msra.mxu0 0.0
        %1127 = vmatprep.subr.mxu0 0.0
        %1128 = vmatpush1.msra.mxu0 0.0
        %1129 = vmatprep.subr.mxu0 0.0
        %1130 = vmatpush1.msra.mxu0 0.0
        %1131 = vmatprep.mubr.f32.mxu0 0.0
        %1132 = vmatmul.mubr.f32.gmra.mrb[0].mxu0 %v1045
        %v1133 = vpop.f32.mrb[0].mxu0
        %v1134 = vadd.f32 0.0, %v1133
        %v1135 = vpop.f32.mrb[0].mxu0
        %1136 = vmatprep.mubr.f32.mxu0 0.0
        %1137 = vmatmul.mubr.f32.gmra.mrb[0].mxu0 %v1046
        %v1138 = vpop.f32.mrb[0].mxu0
        %v1139 = vadd.f32 0.0, %v1138
        %v1140 = vpop.f32.mrb[0].mxu0
        %1141 = vmatprep.mubr.f32.mxu0 0.0
        %1142 = vmatmul.mubr.f32.gmra.mrb[0].mxu0 %v1047
        %v1143 = vpop.f32.mrb[0].mxu0
        %v1144 = vadd.f32 0.0, %v1143
        %v1145 = vpop.f32.mrb[0].mxu0
        %1146 = vmatprep.mubr.f32.mxu0 0.0
        %1147 = vmatmul.mubr.f32.gmra.mrb[0].mxu0 %v1048
        %v1148 = vpop.f32.mrb[0].mxu0
        %v1149 = vadd.f32 0.0, %v1148
        %v1150 = vpop.f32.mrb[0].mxu0
        %1151 = vmatprep.mubr.f32.mxu0 0.0
        %1152 = vmatmul.mubr.f32.gmra.mrb[0].mxu0 %v1049
        %v1153 = vpop.f32.mrb[0].mxu0
        %v1154 = vadd.f32 0.0, %v1153
        %v1155 = vpop.f32.mrb[0].mxu0
        %1156 = vdwg.mxu0
        %v1157 = vadd.f32 %v1040, %v1134
        %v1158 = vadd.f32 %v1041, %v1139
        %v1159 = vadd.f32 %v1042, %v1144
        %v1160 = vadd.f32 %v1043, %v1149
        %v1161 = vadd.f32 %v1044, %v1154
        %v1162 = vld [vmem:[#allocation2 + $0x16] sm:$0xff]
        %v1163 = vld [vmem:[#allocation2 + $0x1e] sm:$0xff]
        %v1164 = vld [vmem:[#allocation2 + $0x26] sm:$0xff]
        %v1165 = vld [vmem:[#allocation2 + $0x2e] sm:$0xff]
        %v1166 = vld [vmem:[#allocation2 + $0x36] sm:$0x3f]
        %s1167 = scalar_lea.vmem [#allocation6], 1024
        %v1168 = vld [vmem:[%s1167] sm:$0xff]
        %v1169 = vld [vmem:[%s1167 + $0x8] sm:$0xff]
        %v1170 = vld [vmem:[%s1167 + $0x10] sm:$0xff]
        %v1171 = vld [vmem:[%s1167 + $0x18] sm:$0xff]
        %v1172 = vld [vmem:[%s1167 + $0x20] sm:$0xff]
        %v1173 = vld [vmem:[%s1167 + $0x28] sm:$0xff]
        %v1174 = vld [vmem:[%s1167 + $0x30] sm:$0xff]
        %v1175 = vld [vmem:[%s1167 + $0x38] sm:$0xff]
        %v1176 = vld [vmem:[%s1167 + $0x40] sm:$0xff]
        %v1177 = vld [vmem:[%s1167 + $0x48] sm:$0xff]
        %v1178 = vld [vmem:[%s1167 + $0x50] sm:$0xff]
        %v1179 = vld [vmem:[%s1167 + $0x58] sm:$0xff]
        %v1180 = vld [vmem:[%s1167 + $0x60] sm:$0xff]
        %v1181 = vld [vmem:[%s1167 + $0x68] sm:$0xff]
        %v1182 = vld [vmem:[%s1167 + $0x70] sm:$0xff]
        %v1183 = vld [vmem:[%s1167 + $0x78] sm:$0xff]
        %1184 = vmatprep.subr.mxu0 0.0
        %1185 = vmatpush1.msra.mxu0 %v1168
        %1186 = vmatprep.subr.mxu0 0.0
        %1187 = vmatpush1.msra.mxu0 %v1169
        %1188 = vmatprep.subr.mxu0 0.0
        %1189 = vmatpush1.msra.mxu0 %v1170
        %1190 = vmatprep.subr.mxu0 0.0
        %1191 = vmatpush1.msra.mxu0 %v1171
        %1192 = vmatprep.subr.mxu0 0.0
        %1193 = vmatpush1.msra.mxu0 %v1172
        %1194 = vmatprep.subr.mxu0 0.0
        %1195 = vmatpush1.msra.mxu0 %v1173
        %1196 = vmatprep.subr.mxu0 0.0
        %1197 = vmatpush1.msra.mxu0 %v1174
        %1198 = vmatprep.subr.mxu0 0.0
        %1199 = vmatpush1.msra.mxu0 %v1175
        %1200 = vmatprep.subr.mxu0 0.0
        %1201 = vmatpush1.msra.mxu0 %v1176
        %1202 = vmatprep.subr.mxu0 0.0
        %1203 = vmatpush1.msra.mxu0 %v1177
        %1204 = vmatprep.subr.mxu0 0.0
        %1205 = vmatpush1.msra.mxu0 %v1178
        %1206 = vmatprep.subr.mxu0 0.0
        %1207 = vmatpush1.msra.mxu0 %v1179
        %1208 = vmatprep.subr.mxu0 0.0
        %1209 = vmatpush1.msra.mxu0 %v1180
        %1210 = vmatprep.subr.mxu0 0.0
        %1211 = vmatpush1.msra.mxu0 %v1181
        %1212 = vmatprep.subr.mxu0 0.0
        %1213 = vmatpush1.msra.mxu0 %v1182
        %1214 = vmatprep.subr.mxu0 0.0
        %1215 = vmatpush1.msra.mxu0 %v1183
        %1216 = vmatprep.subr.mxu0 0.0
        %1217 = vmatpush1.msra.mxu0 0.0
        %1218 = vmatprep.subr.mxu0 0.0
        %1219 = vmatpush1.msra.mxu0 0.0
        %1220 = vmatprep.subr.mxu0 0.0
        %1221 = vmatpush1.msra.mxu0 0.0
        %1222 = vmatprep.subr.mxu0 0.0
        %1223 = vmatpush1.msra.mxu0 0.0
        %1224 = vmatprep.subr.mxu0 0.0
        %1225 = vmatpush1.msra.mxu0 0.0
        %1226 = vmatprep.subr.mxu0 0.0
        %1227 = vmatpush1.msra.mxu0 0.0
        %1228 = vmatprep.subr.mxu0 0.0
        %1229 = vmatpush1.msra.mxu0 0.0
        %1230 = vmatprep.subr.mxu0 0.0
        %1231 = vmatpush1.msra.mxu0 0.0
        %1232 = vmatprep.subr.mxu0 0.0
        %1233 = vmatpush1.msra.mxu0 0.0
        %1234 = vmatprep.subr.mxu0 0.0
        %1235 = vmatpush1.msra.mxu0 0.0
        %1236 = vmatprep.subr.mxu0 0.0
        %1237 = vmatpush1.msra.mxu0 0.0
        %1238 = vmatprep.subr.mxu0 0.0
        %1239 = vmatpush1.msra.mxu0 0.0
        %1240 = vmatprep.subr.mxu0 0.0
        %1241 = vmatpush1.msra.mxu0 0.0
        %1242 = vmatprep.subr.mxu0 0.0
        %1243 = vmatpush1.msra.mxu0 0.0
        %1244 = vmatprep.subr.mxu0 0.0
        %1245 = vmatpush1.msra.mxu0 0.0
        %1246 = vmatprep.subr.mxu0 0.0
        %1247 = vmatpush1.msra.mxu0 0.0
        %1248 = vmatprep.mubr.f32.mxu0 0.0
        %1249 = vmatmul.mubr.f32.gmra.mrb[0].mxu0 %v1162
        %v1250 = vpop.f32.mrb[0].mxu0
        %v1251 = vadd.f32 0.0, %v1250
        %v1252 = vpop.f32.mrb[0].mxu0
        %1253 = vmatprep.mubr.f32.mxu0 0.0
        %1254 = vmatmul.mubr.f32.gmra.mrb[0].mxu0 %v1163
        %v1255 = vpop.f32.mrb[0].mxu0
        %v1256 = vadd.f32 0.0, %v1255
        %v1257 = vpop.f32.mrb[0].mxu0
        %1258 = vmatprep.mubr.f32.mxu0 0.0
        %1259 = vmatmul.mubr.f32.gmra.mrb[0].mxu0 %v1164
        %v1260 = vpop.f32.mrb[0].mxu0
        %v1261 = vadd.f32 0.0, %v1260
        %v1262 = vpop.f32.mrb[0].mxu0
        %1263 = vmatprep.mubr.f32.mxu0 0.0
        %1264 = vmatmul.mubr.f32.gmra.mrb[0].mxu0 %v1165
        %v1265 = vpop.f32.mrb[0].mxu0
        %v1266 = vadd.f32 0.0, %v1265
        %v1267 = vpop.f32.mrb[0].mxu0
        %1268 = vmatprep.mubr.f32.mxu0 0.0
        %1269 = vmatmul.mubr.f32.gmra.mrb[0].mxu0 %v1166
        %v1270 = vpop.f32.mrb[0].mxu0
        %v1271 = vadd.f32 0.0, %v1270
        %v1272 = vpop.f32.mrb[0].mxu0
        %1273 = vdwg.mxu0
        %v1274 = vadd.f32 %v1157, %v1251
        %v1275 = vadd.f32 %v1158, %v1256
        %v1276 = vadd.f32 %v1159, %v1261
        %v1277 = vadd.f32 %v1160, %v1266
        %v1278 = vadd.f32 %v1161, %v1271
        %v1279 = vmax.f32 %v1274, 0.0
        %1280 = vst [vmem:[#allocation2 + $0xb] sm:$0xff] %v1279
        %v1281 = vmax.f32 %v1275, 0.0
        %v1282 = vmax.f32 %v1276, 0.0
        %1283 = vst [vmem:[#allocation2 + $0x13] sm:$0xfc] %v1281
        %1284 = vst [vmem:[#allocation2 + $0x1b] sm:$0x3] %v1282
        %v1285 = vmax.f32 %v1277, 0.0
        %1286 = vst [vmem:[#allocation2 + $0x1b] sm:$0xf0] %v1282
        %1287 = vst [vmem:[#allocation2 + $0x23] sm:$0xf] %v1285
        %v1288 = vmax.f32 %v1278, 0.0
        %1289 = vst [vmem:[#allocation2 + $0x23] sm:$0xc0] %v1285
        %1290 = vst [vmem:[#allocation2 + $0x2b] sm:$0x3f] %v1288
        %v1291 = vld [vmem:[#allocation2] sm:$0xff]
        %v1292 = vld [vmem:[#allocation2 + $0x8] sm:$0xff]
        %v1293 = vld [vmem:[#allocation2 + $0x10] sm:$0xff]
        %v1294 = vld [vmem:[#allocation2 + $0x18] sm:$0xff]
        %v1295 = vld [vmem:[#allocation2 + $0x20] sm:$0x3f]
        %v1296 = vld [vmem:[#allocation8] sm:$0xff]
        %v1297 = vld [vmem:[#allocation8 + $0x8] sm:$0xff]
        %v1298 = vld [vmem:[#allocation8 + $0x10] sm:$0xff]
        %v1299 = vld [vmem:[#allocation8 + $0x18] sm:$0xff]
        %v1300 = vld [vmem:[#allocation8 + $0x20] sm:$0xff]
        %v1301 = vld [vmem:[#allocation8 + $0x28] sm:$0xff]
        %v1302 = vld [vmem:[#allocation8 + $0x30] sm:$0xff]
        %v1303 = vld [vmem:[#allocation8 + $0x38] sm:$0xff]
        %v1304 = vld [vmem:[#allocation8 + $0x40] sm:$0xff]
        %v1305 = vld [vmem:[#allocation8 + $0x48] sm:$0xff]
        %v1306 = vld [vmem:[#allocation8 + $0x50] sm:$0xff]
        %v1307 = vld [vmem:[#allocation8 + $0x58] sm:$0xff]
        %v1308 = vld [vmem:[#allocation8 + $0x60] sm:$0xff]
        %v1309 = vld [vmem:[#allocation8 + $0x68] sm:$0xff]
        %v1310 = vld [vmem:[#allocation8 + $0x70] sm:$0xff]
        %v1311 = vld [vmem:[#allocation8 + $0x78] sm:$0xff]
        %v1312 = vld [vmem:[#allocation2 + $0x1] sm:$0xff]
        %v1313 = vld [vmem:[#allocation2 + $0x9] sm:$0xff]
        %v1314 = vld [vmem:[#allocation2 + $0x11] sm:$0xff]
        %v1315 = vld [vmem:[#allocation2 + $0x19] sm:$0xff]
        %v1316 = vld [vmem:[#allocation2 + $0x21] sm:$0x3f]
        %s1317 = scalar_lea.vmem [#allocation8], 128
        %v1318 = vld [vmem:[%s1317] sm:$0xff]
        %v1319 = vld [vmem:[%s1317 + $0x8] sm:$0xff]
        %v1320 = vld [vmem:[%s1317 + $0x10] sm:$0xff]
        %v1321 = vld [vmem:[%s1317 + $0x18] sm:$0xff]
        %v1322 = vld [vmem:[%s1317 + $0x20] sm:$0xff]
        %v1323 = vld [vmem:[%s1317 + $0x28] sm:$0xff]
        %v1324 = vld [vmem:[%s1317 + $0x30] sm:$0xff]
        %v1325 = vld [vmem:[%s1317 + $0x38] sm:$0xff]
        %v1326 = vld [vmem:[%s1317 + $0x40] sm:$0xff]
        %v1327 = vld [vmem:[%s1317 + $0x48] sm:$0xff]
        %v1328 = vld [vmem:[%s1317 + $0x50] sm:$0xff]
        %v1329 = vld [vmem:[%s1317 + $0x58] sm:$0xff]
        %v1330 = vld [vmem:[%s1317 + $0x60] sm:$0xff]
        %v1331 = vld [vmem:[%s1317 + $0x68] sm:$0xff]
        %v1332 = vld [vmem:[%s1317 + $0x70] sm:$0xff]
        %v1333 = vld [vmem:[%s1317 + $0x78] sm:$0xff]
        %1334 = vmatprep.subr.mxu0 0.0
        %1335 = vmatpush1.msra.mxu0 %v1318
        %1336 = vmatprep.subr.mxu0 0.0
        %1337 = vmatpush1.msra.mxu0 %v1319
        %1338 = vmatprep.subr.mxu0 0.0
        %1339 = vmatpush1.msra.mxu0 %v1320
        %1340 = vmatprep.subr.mxu0 0.0
        %1341 = vmatpush1.msra.mxu0 %v1321
        %1342 = vmatprep.subr.mxu0 0.0
        %1343 = vmatpush1.msra.mxu0 %v1322
        %1344 = vmatprep.subr.mxu0 0.0
        %1345 = vmatpush1.msra.mxu0 %v1323
        %1346 = vmatprep.subr.mxu0 0.0
        %1347 = vmatpush1.msra.mxu0 %v1324
        %1348 = vmatprep.subr.mxu0 0.0
        %1349 = vmatpush1.msra.mxu0 %v1325
        %1350 = vmatprep.subr.mxu0 0.0
        %1351 = vmatpush1.msra.mxu0 %v1326
        %1352 = vmatprep.subr.mxu0 0.0
        %1353 = vmatpush1.msra.mxu0 %v1327
        %1354 = vmatprep.subr.mxu0 0.0
        %1355 = vmatpush1.msra.mxu0 %v1328
        %1356 = vmatprep.subr.mxu0 0.0
        %1357 = vmatpush1.msra.mxu0 %v1329
        %1358 = vmatprep.subr.mxu0 0.0
        %1359 = vmatpush1.msra.mxu0 %v1330
        %1360 = vmatprep.subr.mxu0 0.0
        %1361 = vmatpush1.msra.mxu0 %v1331
        %1362 = vmatprep.subr.mxu0 0.0
        %1363 = vmatpush1.msra.mxu0 %v1332
        %1364 = vmatprep.subr.mxu0 0.0
        %1365 = vmatpush1.msra.mxu0 %v1333
        %1366 = vmatprep.subr.mxu0 0.0
        %1367 = vmatpush1.msra.mxu0 0.0
        %1368 = vmatprep.subr.mxu0 0.0
        %1369 = vmatpush1.msra.mxu0 0.0
        %1370 = vmatprep.subr.mxu0 0.0
        %1371 = vmatpush1.msra.mxu0 0.0
        %1372 = vmatprep.subr.mxu0 0.0
        %1373 = vmatpush1.msra.mxu0 0.0
        %1374 = vmatprep.subr.mxu0 0.0
        %1375 = vmatpush1.msra.mxu0 0.0
        %1376 = vmatprep.subr.mxu0 0.0
        %1377 = vmatpush1.msra.mxu0 0.0
        %1378 = vmatprep.subr.mxu0 0.0
        %1379 = vmatpush1.msra.mxu0 0.0
        %1380 = vmatprep.subr.mxu0 0.0
        %1381 = vmatpush1.msra.mxu0 0.0
        %1382 = vmatprep.subr.mxu0 0.0
        %1383 = vmatpush1.msra.mxu0 0.0
        %1384 = vmatprep.subr.mxu0 0.0
        %1385 = vmatpush1.msra.mxu0 0.0
        %1386 = vmatprep.subr.mxu0 0.0
        %1387 = vmatpush1.msra.mxu0 0.0
        %1388 = vmatprep.subr.mxu0 0.0
        %1389 = vmatpush1.msra.mxu0 0.0
        %1390 = vmatprep.subr.mxu0 0.0
        %1391 = vmatpush1.msra.mxu0 0.0
        %1392 = vmatprep.subr.mxu0 0.0
        %1393 = vmatpush1.msra.mxu0 0.0
        %1394 = vmatprep.subr.mxu0 0.0
        %1395 = vmatpush1.msra.mxu0 0.0
        %1396 = vmatprep.subr.mxu0 0.0
        %1397 = vmatpush1.msra.mxu0 0.0
        %1398 = vmatprep.mubr.f32.mxu0 0.0
        %1399 = vmatmul.mubr.f32.gmra.mrb[0].mxu0 %v1312
        %v1400 = vpop.f32.mrb[0].mxu0
        %v1401 = vadd.f32 0.0, %v1400
        %v1402 = vpop.f32.mrb[0].mxu0
        %1403 = vmatprep.mubr.f32.mxu0 0.0
        %1404 = vmatmul.mubr.f32.gmra.mrb[0].mxu0 %v1313
        %v1405 = vpop.f32.mrb[0].mxu0
        %v1406 = vadd.f32 0.0, %v1405
        %v1407 = vpop.f32.mrb[0].mxu0
        %1408 = vmatprep.mubr.f32.mxu0 0.0
        %1409 = vmatmul.mubr.f32.gmra.mrb[0].mxu0 %v1314
        %v1410 = vpop.f32.mrb[0].mxu0
        %v1411 = vadd.f32 0.0, %v1410
        %v1412 = vpop.f32.mrb[0].mxu0
        %1413 = vmatprep.mubr.f32.mxu0 0.0
        %1414 = vmatmul.mubr.f32.gmra.mrb[0].mxu0 %v1315
        %v1415 = vpop.f32.mrb[0].mxu0
        %v1416 = vadd.f32 0.0, %v1415
        %v1417 = vpop.f32.mrb[0].mxu0
        %1418 = vmatprep.mubr.f32.mxu0 0.0
        %1419 = vmatmul.mubr.f32.gmra.mrb[0].mxu0 %v1316
        %v1420 = vpop.f32.mrb[0].mxu0
        %v1421 = vadd.f32 0.0, %v1420
        %v1422 = vpop.f32.mrb[0].mxu0
        %1423 = vdwg.mxu0
        %1424 = vmatprep.subr.mxu0 0.0
        %1425 = vmatpush1.msra.mxu0 %v1296
        %1426 = vmatprep.subr.mxu0 0.0
        %1427 = vmatpush1.msra.mxu0 %v1297
        %1428 = vmatprep.subr.mxu0 0.0
        %1429 = vmatpush1.msra.mxu0 %v1298
        %1430 = vmatprep.subr.mxu0 0.0
        %1431 = vmatpush1.msra.mxu0 %v1299
        %1432 = vmatprep.subr.mxu0 0.0
        %1433 = vmatpush1.msra.mxu0 %v1300
        %1434 = vmatprep.subr.mxu0 0.0
        %1435 = vmatpush1.msra.mxu0 %v1301
        %1436 = vmatprep.subr.mxu0 0.0
        %1437 = vmatpush1.msra.mxu0 %v1302
        %1438 = vmatprep.subr.mxu0 0.0
        %1439 = vmatpush1.msra.mxu0 %v1303
        %1440 = vmatprep.subr.mxu0 0.0
        %1441 = vmatpush1.msra.mxu0 %v1304
        %1442 = vmatprep.subr.mxu0 0.0
        %1443 = vmatpush1.msra.mxu0 %v1305
        %1444 = vmatprep.subr.mxu0 0.0
        %1445 = vmatpush1.msra.mxu0 %v1306
        %1446 = vmatprep.subr.mxu0 0.0
        %1447 = vmatpush1.msra.mxu0 %v1307
        %1448 = vmatprep.subr.mxu0 0.0
        %1449 = vmatpush1.msra.mxu0 %v1308
        %1450 = vmatprep.subr.mxu0 0.0
        %1451 = vmatpush1.msra.mxu0 %v1309
        %1452 = vmatprep.subr.mxu0 0.0
        %1453 = vmatpush1.msra.mxu0 %v1310
        %1454 = vmatprep.subr.mxu0 0.0
        %1455 = vmatpush1.msra.mxu0 %v1311
        %1456 = vmatprep.subr.mxu0 0.0
        %1457 = vmatpush1.msra.mxu0 0.0
        %1458 = vmatprep.subr.mxu0 0.0
        %1459 = vmatpush1.msra.mxu0 0.0
        %1460 = vmatprep.subr.mxu0 0.0
        %1461 = vmatpush1.msra.mxu0 0.0
        %1462 = vmatprep.subr.mxu0 0.0
        %1463 = vmatpush1.msra.mxu0 0.0
        %1464 = vmatprep.subr.mxu0 0.0
        %1465 = vmatpush1.msra.mxu0 0.0
        %1466 = vmatprep.subr.mxu0 0.0
        %1467 = vmatpush1.msra.mxu0 0.0
        %1468 = vmatprep.subr.mxu0 0.0
        %1469 = vmatpush1.msra.mxu0 0.0
        %1470 = vmatprep.subr.mxu0 0.0
        %1471 = vmatpush1.msra.mxu0 0.0
        %1472 = vmatprep.subr.mxu0 0.0
        %1473 = vmatpush1.msra.mxu0 0.0
        %1474 = vmatprep.subr.mxu0 0.0
        %1475 = vmatpush1.msra.mxu0 0.0
        %1476 = vmatprep.subr.mxu0 0.0
        %1477 = vmatpush1.msra.mxu0 0.0
        %1478 = vmatprep.subr.mxu0 0.0
        %1479 = vmatpush1.msra.mxu0 0.0
        %1480 = vmatprep.subr.mxu0 0.0
        %1481 = vmatpush1.msra.mxu0 0.0
        %1482 = vmatprep.subr.mxu0 0.0
        %1483 = vmatpush1.msra.mxu0 0.0
        %1484 = vmatprep.subr.mxu0 0.0
        %1485 = vmatpush1.msra.mxu0 0.0
        %1486 = vmatprep.subr.mxu0 0.0
        %1487 = vmatpush1.msra.mxu0 0.0
        %1488 = vmatprep.mubr.f32.mxu0 0.0
        %1489 = vmatmul.mubr.f32.gmra.mrb[0].mxu0 %v1291
        %v1490 = vpop.f32.mrb[0].mxu0
        %v1491 = vadd.f32 %v1401, %v1490
        %v1492 = vpop.f32.mrb[0].mxu0
        %1493 = vmatprep.mubr.f32.mxu0 0.0
        %1494 = vmatmul.mubr.f32.gmra.mrb[0].mxu0 %v1292
        %v1495 = vpop.f32.mrb[0].mxu0
        %v1496 = vadd.f32 %v1406, %v1495
        %v1497 = vpop.f32.mrb[0].mxu0
        %1498 = vmatprep.mubr.f32.mxu0 0.0
        %1499 = vmatmul.mubr.f32.gmra.mrb[0].mxu0 %v1293
        %v1500 = vpop.f32.mrb[0].mxu0
        %v1501 = vadd.f32 %v1411, %v1500
        %v1502 = vpop.f32.mrb[0].mxu0
        %1503 = vmatprep.mubr.f32.mxu0 0.0
        %1504 = vmatmul.mubr.f32.gmra.mrb[0].mxu0 %v1294
        %v1505 = vpop.f32.mrb[0].mxu0
        %v1506 = vadd.f32 %v1416, %v1505
        %v1507 = vpop.f32.mrb[0].mxu0
        %1508 = vmatprep.mubr.f32.mxu0 0.0
        %1509 = vmatmul.mubr.f32.gmra.mrb[0].mxu0 %v1295
        %v1510 = vpop.f32.mrb[0].mxu0
        %v1511 = vadd.f32 %v1421, %v1510
        %v1512 = vpop.f32.mrb[0].mxu0
        %1513 = vdwg.mxu0
        %v1514 = vld [vmem:[#allocation2 + $0x2] sm:$0xff]
        %v1515 = vld [vmem:[#allocation2 + $0xa] sm:$0xff]
        %v1516 = vld [vmem:[#allocation2 + $0x12] sm:$0xff]
        %v1517 = vld [vmem:[#allocation2 + $0x1a] sm:$0xff]
        %v1518 = vld [vmem:[#allocation2 + $0x22] sm:$0x3f]
        %s1519 = scalar_lea.vmem [#allocation8], 256
        %v1520 = vld [vmem:[%s1519] sm:$0xff]
        %v1521 = vld [vmem:[%s1519 + $0x8] sm:$0xff]
        %v1522 = vld [vmem:[%s1519 + $0x10] sm:$0xff]
        %v1523 = vld [vmem:[%s1519 + $0x18] sm:$0xff]
        %v1524 = vld [vmem:[%s1519 + $0x20] sm:$0xff]
        %v1525 = vld [vmem:[%s1519 + $0x28] sm:$0xff]
        %v1526 = vld [vmem:[%s1519 + $0x30] sm:$0xff]
        %v1527 = vld [vmem:[%s1519 + $0x38] sm:$0xff]
        %v1528 = vld [vmem:[%s1519 + $0x40] sm:$0xff]
        %v1529 = vld [vmem:[%s1519 + $0x48] sm:$0xff]
        %v1530 = vld [vmem:[%s1519 + $0x50] sm:$0xff]
        %v1531 = vld [vmem:[%s1519 + $0x58] sm:$0xff]
        %v1532 = vld [vmem:[%s1519 + $0x60] sm:$0xff]
        %v1533 = vld [vmem:[%s1519 + $0x68] sm:$0xff]
        %v1534 = vld [vmem:[%s1519 + $0x70] sm:$0xff]
        %v1535 = vld [vmem:[%s1519 + $0x78] sm:$0xff]
        %1536 = vmatprep.subr.mxu0 0.0
        %1537 = vmatpush1.msra.mxu0 %v1520
        %1538 = vmatprep.subr.mxu0 0.0
        %1539 = vmatpush1.msra.mxu0 %v1521
        %1540 = vmatprep.subr.mxu0 0.0
        %1541 = vmatpush1.msra.mxu0 %v1522
        %1542 = vmatprep.subr.mxu0 0.0
        %1543 = vmatpush1.msra.mxu0 %v1523
        %1544 = vmatprep.subr.mxu0 0.0
        %1545 = vmatpush1.msra.mxu0 %v1524
        %1546 = vmatprep.subr.mxu0 0.0
        %1547 = vmatpush1.msra.mxu0 %v1525
        %1548 = vmatprep.subr.mxu0 0.0
        %1549 = vmatpush1.msra.mxu0 %v1526
        %1550 = vmatprep.subr.mxu0 0.0
        %1551 = vmatpush1.msra.mxu0 %v1527
        %1552 = vmatprep.subr.mxu0 0.0
        %1553 = vmatpush1.msra.mxu0 %v1528
        %1554 = vmatprep.subr.mxu0 0.0
        %1555 = vmatpush1.msra.mxu0 %v1529
        %1556 = vmatprep.subr.mxu0 0.0
        %1557 = vmatpush1.msra.mxu0 %v1530
        %1558 = vmatprep.subr.mxu0 0.0
        %1559 = vmatpush1.msra.mxu0 %v1531
        %1560 = vmatprep.subr.mxu0 0.0
        %1561 = vmatpush1.msra.mxu0 %v1532
        %1562 = vmatprep.subr.mxu0 0.0
        %1563 = vmatpush1.msra.mxu0 %v1533
        %1564 = vmatprep.subr.mxu0 0.0
        %1565 = vmatpush1.msra.mxu0 %v1534
        %1566 = vmatprep.subr.mxu0 0.0
        %1567 = vmatpush1.msra.mxu0 %v1535
        %1568 = vmatprep.subr.mxu0 0.0
        %1569 = vmatpush1.msra.mxu0 0.0
        %1570 = vmatprep.subr.mxu0 0.0
        %1571 = vmatpush1.msra.mxu0 0.0
        %1572 = vmatprep.subr.mxu0 0.0
        %1573 = vmatpush1.msra.mxu0 0.0
        %1574 = vmatprep.subr.mxu0 0.0
        %1575 = vmatpush1.msra.mxu0 0.0
        %1576 = vmatprep.subr.mxu0 0.0
        %1577 = vmatpush1.msra.mxu0 0.0
        %1578 = vmatprep.subr.mxu0 0.0
        %1579 = vmatpush1.msra.mxu0 0.0
        %1580 = vmatprep.subr.mxu0 0.0
        %1581 = vmatpush1.msra.mxu0 0.0
        %1582 = vmatprep.subr.mxu0 0.0
        %1583 = vmatpush1.msra.mxu0 0.0
        %1584 = vmatprep.subr.mxu0 0.0
        %1585 = vmatpush1.msra.mxu0 0.0
        %1586 = vmatprep.subr.mxu0 0.0
        %1587 = vmatpush1.msra.mxu0 0.0
        %1588 = vmatprep.subr.mxu0 0.0
        %1589 = vmatpush1.msra.mxu0 0.0
        %1590 = vmatprep.subr.mxu0 0.0
        %1591 = vmatpush1.msra.mxu0 0.0
        %1592 = vmatprep.subr.mxu0 0.0
        %1593 = vmatpush1.msra.mxu0 0.0
        %1594 = vmatprep.subr.mxu0 0.0
        %1595 = vmatpush1.msra.mxu0 0.0
        %1596 = vmatprep.subr.mxu0 0.0
        %1597 = vmatpush1.msra.mxu0 0.0
        %1598 = vmatprep.subr.mxu0 0.0
        %1599 = vmatpush1.msra.mxu0 0.0
        %1600 = vmatprep.mubr.f32.mxu0 0.0
        %1601 = vmatmul.mubr.f32.gmra.mrb[0].mxu0 %v1514
        %v1602 = vpop.f32.mrb[0].mxu0
        %v1603 = vadd.f32 0.0, %v1602
        %v1604 = vpop.f32.mrb[0].mxu0
        %1605 = vmatprep.mubr.f32.mxu0 0.0
        %1606 = vmatmul.mubr.f32.gmra.mrb[0].mxu0 %v1515
        %v1607 = vpop.f32.mrb[0].mxu0
        %v1608 = vadd.f32 0.0, %v1607
        %v1609 = vpop.f32.mrb[0].mxu0
        %1610 = vmatprep.mubr.f32.mxu0 0.0
        %1611 = vmatmul.mubr.f32.gmra.mrb[0].mxu0 %v1516
        %v1612 = vpop.f32.mrb[0].mxu0
        %v1613 = vadd.f32 0.0, %v1612
        %v1614 = vpop.f32.mrb[0].mxu0
        %1615 = vmatprep.mubr.f32.mxu0 0.0
        %1616 = vmatmul.mubr.f32.gmra.mrb[0].mxu0 %v1517
        %v1617 = vpop.f32.mrb[0].mxu0
        %v1618 = vadd.f32 0.0, %v1617
        %v1619 = vpop.f32.mrb[0].mxu0
        %1620 = vmatprep.mubr.f32.mxu0 0.0
        %1621 = vmatmul.mubr.f32.gmra.mrb[0].mxu0 %v1518
        %v1622 = vpop.f32.mrb[0].mxu0
        %v1623 = vadd.f32 0.0, %v1622
        %v1624 = vpop.f32.mrb[0].mxu0
        %1625 = vdwg.mxu0
        %v1626 = vadd.f32 %v1491, %v1603
        %v1627 = vadd.f32 %v1496, %v1608
        %v1628 = vadd.f32 %v1501, %v1613
        %v1629 = vadd.f32 %v1506, %v1618
        %v1630 = vadd.f32 %v1511, %v1623
        %v1631 = vld [vmem:[#allocation2 + $0xa] sm:$0xff]
        %v1632 = vld [vmem:[#allocation2 + $0x12] sm:$0xff]
        %v1633 = vld [vmem:[#allocation2 + $0x1a] sm:$0xff]
        %v1634 = vld [vmem:[#allocation2 + $0x22] sm:$0xff]
        %v1635 = vld [vmem:[#allocation2 + $0x2a] sm:$0x3f]
        %s1636 = scalar_lea.vmem [#allocation8], 384
        %v1637 = vld [vmem:[%s1636] sm:$0xff]
        %v1638 = vld [vmem:[%s1636 + $0x8] sm:$0xff]
        %v1639 = vld [vmem:[%s1636 + $0x10] sm:$0xff]
        %v1640 = vld [vmem:[%s1636 + $0x18] sm:$0xff]
        %v1641 = vld [vmem:[%s1636 + $0x20] sm:$0xff]
        %v1642 = vld [vmem:[%s1636 + $0x28] sm:$0xff]
        %v1643 = vld [vmem:[%s1636 + $0x30] sm:$0xff]
        %v1644 = vld [vmem:[%s1636 + $0x38] sm:$0xff]
        %v1645 = vld [vmem:[%s1636 + $0x40] sm:$0xff]
        %v1646 = vld [vmem:[%s1636 + $0x48] sm:$0xff]
        %v1647 = vld [vmem:[%s1636 + $0x50] sm:$0xff]
        %v1648 = vld [vmem:[%s1636 + $0x58] sm:$0xff]
        %v1649 = vld [vmem:[%s1636 + $0x60] sm:$0xff]
        %v1650 = vld [vmem:[%s1636 + $0x68] sm:$0xff]
        %v1651 = vld [vmem:[%s1636 + $0x70] sm:$0xff]
        %v1652 = vld [vmem:[%s1636 + $0x78] sm:$0xff]
        %1653 = vmatprep.subr.mxu0 0.0
        %1654 = vmatpush1.msra.mxu0 %v1637
        %1655 = vmatprep.subr.mxu0 0.0
        %1656 = vmatpush1.msra.mxu0 %v1638
        %1657 = vmatprep.subr.mxu0 0.0
        %1658 = vmatpush1.msra.mxu0 %v1639
        %1659 = vmatprep.subr.mxu0 0.0
        %1660 = vmatpush1.msra.mxu0 %v1640
        %1661 = vmatprep.subr.mxu0 0.0
        %1662 = vmatpush1.msra.mxu0 %v1641
        %1663 = vmatprep.subr.mxu0 0.0
        %1664 = vmatpush1.msra.mxu0 %v1642
        %1665 = vmatprep.subr.mxu0 0.0
        %1666 = vmatpush1.msra.mxu0 %v1643
        %1667 = vmatprep.subr.mxu0 0.0
        %1668 = vmatpush1.msra.mxu0 %v1644
        %1669 = vmatprep.subr.mxu0 0.0
        %1670 = vmatpush1.msra.mxu0 %v1645
        %1671 = vmatprep.subr.mxu0 0.0
        %1672 = vmatpush1.msra.mxu0 %v1646
        %1673 = vmatprep.subr.mxu0 0.0
        %1674 = vmatpush1.msra.mxu0 %v1647
        %1675 = vmatprep.subr.mxu0 0.0
        %1676 = vmatpush1.msra.mxu0 %v1648
        %1677 = vmatprep.subr.mxu0 0.0
        %1678 = vmatpush1.msra.mxu0 %v1649
        %1679 = vmatprep.subr.mxu0 0.0
        %1680 = vmatpush1.msra.mxu0 %v1650
        %1681 = vmatprep.subr.mxu0 0.0
        %1682 = vmatpush1.msra.mxu0 %v1651
        %1683 = vmatprep.subr.mxu0 0.0
        %1684 = vmatpush1.msra.mxu0 %v1652
        %1685 = vmatprep.subr.mxu0 0.0
        %1686 = vmatpush1.msra.mxu0 0.0
        %1687 = vmatprep.subr.mxu0 0.0
        %1688 = vmatpush1.msra.mxu0 0.0
        %1689 = vmatprep.subr.mxu0 0.0
        %1690 = vmatpush1.msra.mxu0 0.0
        %1691 = vmatprep.subr.mxu0 0.0
        %1692 = vmatpush1.msra.mxu0 0.0
        %1693 = vmatprep.subr.mxu0 0.0
        %1694 = vmatpush1.msra.mxu0 0.0
        %1695 = vmatprep.subr.mxu0 0.0
        %1696 = vmatpush1.msra.mxu0 0.0
        %1697 = vmatprep.subr.mxu0 0.0
        %1698 = vmatpush1.msra.mxu0 0.0
        %1699 = vmatprep.subr.mxu0 0.0
        %1700 = vmatpush1.msra.mxu0 0.0
        %1701 = vmatprep.subr.mxu0 0.0
        %1702 = vmatpush1.msra.mxu0 0.0
        %1703 = vmatprep.subr.mxu0 0.0
        %1704 = vmatpush1.msra.mxu0 0.0
        %1705 = vmatprep.subr.mxu0 0.0
        %1706 = vmatpush1.msra.mxu0 0.0
        %1707 = vmatprep.subr.mxu0 0.0
        %1708 = vmatpush1.msra.mxu0 0.0
        %1709 = vmatprep.subr.mxu0 0.0
        %1710 = vmatpush1.msra.mxu0 0.0
        %1711 = vmatprep.subr.mxu0 0.0
        %1712 = vmatpush1.msra.mxu0 0.0
        %1713 = vmatprep.subr.mxu0 0.0
        %1714 = vmatpush1.msra.mxu0 0.0
        %1715 = vmatprep.subr.mxu0 0.0
        %1716 = vmatpush1.msra.mxu0 0.0
        %1717 = vmatprep.mubr.f32.mxu0 0.0
        %1718 = vmatmul.mubr.f32.gmra.mrb[0].mxu0 %v1631
        %v1719 = vpop.f32.mrb[0].mxu0
        %v1720 = vadd.f32 0.0, %v1719
        %v1721 = vpop.f32.mrb[0].mxu0
        %1722 = vmatprep.mubr.f32.mxu0 0.0
        %1723 = vmatmul.mubr.f32.gmra.mrb[0].mxu0 %v1632
        %v1724 = vpop.f32.mrb[0].mxu0
        %v1725 = vadd.f32 0.0, %v1724
        %v1726 = vpop.f32.mrb[0].mxu0
        %1727 = vmatprep.mubr.f32.mxu0 0.0
        %1728 = vmatmul.mubr.f32.gmra.mrb[0].mxu0 %v1633
        %v1729 = vpop.f32.mrb[0].mxu0
        %v1730 = vadd.f32 0.0, %v1729
        %v1731 = vpop.f32.mrb[0].mxu0
        %1732 = vmatprep.mubr.f32.mxu0 0.0
        %1733 = vmatmul.mubr.f32.gmra.mrb[0].mxu0 %v1634
        %v1734 = vpop.f32.mrb[0].mxu0
        %v1735 = vadd.f32 0.0, %v1734
        %v1736 = vpop.f32.mrb[0].mxu0
        %1737 = vmatprep.mubr.f32.mxu0 0.0
        %1738 = vmatmul.mubr.f32.gmra.mrb[0].mxu0 %v1635
        %v1739 = vpop.f32.mrb[0].mxu0
        %v1740 = vadd.f32 0.0, %v1739
        %v1741 = vpop.f32.mrb[0].mxu0
        %1742 = vdwg.mxu0
        %v1743 = vadd.f32 %v1626, %v1720
        %v1744 = vadd.f32 %v1627, %v1725
        %v1745 = vadd.f32 %v1628, %v1730
        %v1746 = vadd.f32 %v1629, %v1735
        %v1747 = vadd.f32 %v1630, %v1740
        %v1748 = vld [vmem:[#allocation2 + $0xb] sm:$0xff]
        %v1749 = vld [vmem:[#allocation2 + $0x13] sm:$0xff]
        %v1750 = vld [vmem:[#allocation2 + $0x1b] sm:$0xff]
        %v1751 = vld [vmem:[#allocation2 + $0x23] sm:$0xff]
        %v1752 = vld [vmem:[#allocation2 + $0x2b] sm:$0x3f]
        %s1753 = scalar_lea.vmem [#allocation8], 512
        %v1754 = vld [vmem:[%s1753] sm:$0xff]
        %v1755 = vld [vmem:[%s1753 + $0x8] sm:$0xff]
        %v1756 = vld [vmem:[%s1753 + $0x10] sm:$0xff]
        %v1757 = vld [vmem:[%s1753 + $0x18] sm:$0xff]
        %v1758 = vld [vmem:[%s1753 + $0x20] sm:$0xff]
        %v1759 = vld [vmem:[%s1753 + $0x28] sm:$0xff]
        %v1760 = vld [vmem:[%s1753 + $0x30] sm:$0xff]
        %v1761 = vld [vmem:[%s1753 + $0x38] sm:$0xff]
        %v1762 = vld [vmem:[%s1753 + $0x40] sm:$0xff]
        %v1763 = vld [vmem:[%s1753 + $0x48] sm:$0xff]
        %v1764 = vld [vmem:[%s1753 + $0x50] sm:$0xff]
        %v1765 = vld [vmem:[%s1753 + $0x58] sm:$0xff]
        %v1766 = vld [vmem:[%s1753 + $0x60] sm:$0xff]
        %v1767 = vld [vmem:[%s1753 + $0x68] sm:$0xff]
        %v1768 = vld [vmem:[%s1753 + $0x70] sm:$0xff]
        %v1769 = vld [vmem:[%s1753 + $0x78] sm:$0xff]
        %1770 = vmatprep.subr.mxu0 0.0
        %1771 = vmatpush1.msra.mxu0 %v1754
        %1772 = vmatprep.subr.mxu0 0.0
        %1773 = vmatpush1.msra.mxu0 %v1755
        %1774 = vmatprep.subr.mxu0 0.0
        %1775 = vmatpush1.msra.mxu0 %v1756
        %1776 = vmatprep.subr.mxu0 0.0
        %1777 = vmatpush1.msra.mxu0 %v1757
        %1778 = vmatprep.subr.mxu0 0.0
        %1779 = vmatpush1.msra.mxu0 %v1758
        %1780 = vmatprep.subr.mxu0 0.0
        %1781 = vmatpush1.msra.mxu0 %v1759
        %1782 = vmatprep.subr.mxu0 0.0
        %1783 = vmatpush1.msra.mxu0 %v1760
        %1784 = vmatprep.subr.mxu0 0.0
        %1785 = vmatpush1.msra.mxu0 %v1761
        %1786 = vmatprep.subr.mxu0 0.0
        %1787 = vmatpush1.msra.mxu0 %v1762
        %1788 = vmatprep.subr.mxu0 0.0
        %1789 = vmatpush1.msra.mxu0 %v1763
        %1790 = vmatprep.subr.mxu0 0.0
        %1791 = vmatpush1.msra.mxu0 %v1764
        %1792 = vmatprep.subr.mxu0 0.0
        %1793 = vmatpush1.msra.mxu0 %v1765
        %1794 = vmatprep.subr.mxu0 0.0
        %1795 = vmatpush1.msra.mxu0 %v1766
        %1796 = vmatprep.subr.mxu0 0.0
        %1797 = vmatpush1.msra.mxu0 %v1767
        %1798 = vmatprep.subr.mxu0 0.0
        %1799 = vmatpush1.msra.mxu0 %v1768
        %1800 = vmatprep.subr.mxu0 0.0
        %1801 = vmatpush1.msra.mxu0 %v1769
        %1802 = vmatprep.subr.mxu0 0.0
        %1803 = vmatpush1.msra.mxu0 0.0
        %1804 = vmatprep.subr.mxu0 0.0
        %1805 = vmatpush1.msra.mxu0 0.0
        %1806 = vmatprep.subr.mxu0 0.0
        %1807 = vmatpush1.msra.mxu0 0.0
        %1808 = vmatprep.subr.mxu0 0.0
        %1809 = vmatpush1.msra.mxu0 0.0
        %1810 = vmatprep.subr.mxu0 0.0
        %1811 = vmatpush1.msra.mxu0 0.0
        %1812 = vmatprep.subr.mxu0 0.0
        %1813 = vmatpush1.msra.mxu0 0.0
        %1814 = vmatprep.subr.mxu0 0.0
        %1815 = vmatpush1.msra.mxu0 0.0
        %1816 = vmatprep.subr.mxu0 0.0
        %1817 = vmatpush1.msra.mxu0 0.0
        %1818 = vmatprep.subr.mxu0 0.0
        %1819 = vmatpush1.msra.mxu0 0.0
        %1820 = vmatprep.subr.mxu0 0.0
        %1821 = vmatpush1.msra.mxu0 0.0
        %1822 = vmatprep.subr.mxu0 0.0
        %1823 = vmatpush1.msra.mxu0 0.0
        %1824 = vmatprep.subr.mxu0 0.0
        %1825 = vmatpush1.msra.mxu0 0.0
        %1826 = vmatprep.subr.mxu0 0.0
        %1827 = vmatpush1.msra.mxu0 0.0
        %1828 = vmatprep.subr.mxu0 0.0
        %1829 = vmatpush1.msra.mxu0 0.0
        %1830 = vmatprep.subr.mxu0 0.0
        %1831 = vmatpush1.msra.mxu0 0.0
        %1832 = vmatprep.subr.mxu0 0.0
        %1833 = vmatpush1.msra.mxu0 0.0
        %1834 = vmatprep.mubr.f32.mxu0 0.0
        %1835 = vmatmul.mubr.f32.gmra.mrb[0].mxu0 %v1748
        %v1836 = vpop.f32.mrb[0].mxu0
        %v1837 = vadd.f32 0.0, %v1836
        %v1838 = vpop.f32.mrb[0].mxu0
        %1839 = vmatprep.mubr.f32.mxu0 0.0
        %1840 = vmatmul.mubr.f32.gmra.mrb[0].mxu0 %v1749
        %v1841 = vpop.f32.mrb[0].mxu0
        %v1842 = vadd.f32 0.0, %v1841
        %v1843 = vpop.f32.mrb[0].mxu0
        %1844 = vmatprep.mubr.f32.mxu0 0.0
        %1845 = vmatmul.mubr.f32.gmra.mrb[0].mxu0 %v1750
        %v1846 = vpop.f32.mrb[0].mxu0
        %v1847 = vadd.f32 0.0, %v1846
        %v1848 = vpop.f32.mrb[0].mxu0
        %1849 = vmatprep.mubr.f32.mxu0 0.0
        %1850 = vmatmul.mubr.f32.gmra.mrb[0].mxu0 %v1751
        %v1851 = vpop.f32.mrb[0].mxu0
        %v1852 = vadd.f32 0.0, %v1851
        %v1853 = vpop.f32.mrb[0].mxu0
        %1854 = vmatprep.mubr.f32.mxu0 0.0
        %1855 = vmatmul.mubr.f32.gmra.mrb[0].mxu0 %v1752
        %v1856 = vpop.f32.mrb[0].mxu0
        %v1857 = vadd.f32 0.0, %v1856
        %v1858 = vpop.f32.mrb[0].mxu0
        %1859 = vdwg.mxu0
        %v1860 = vadd.f32 %v1743, %v1837
        %v1861 = vadd.f32 %v1744, %v1842
        %v1862 = vadd.f32 %v1745, %v1847
        %v1863 = vadd.f32 %v1746, %v1852
        %v1864 = vadd.f32 %v1747, %v1857
        %v1865 = vld [vmem:[#allocation2 + $0xc] sm:$0xff]
        %v1866 = vld [vmem:[#allocation2 + $0x14] sm:$0xff]
        %v1867 = vld [vmem:[#allocation2 + $0x1c] sm:$0xff]
        %v1868 = vld [vmem:[#allocation2 + $0x24] sm:$0xff]
        %v1869 = vld [vmem:[#allocation2 + $0x2c] sm:$0x3f]
        %s1870 = scalar_lea.vmem [#allocation8], 640
        %v1871 = vld [vmem:[%s1870] sm:$0xff]
        %v1872 = vld [vmem:[%s1870 + $0x8] sm:$0xff]
        %v1873 = vld [vmem:[%s1870 + $0x10] sm:$0xff]
        %v1874 = vld [vmem:[%s1870 + $0x18] sm:$0xff]
        %v1875 = vld [vmem:[%s1870 + $0x20] sm:$0xff]
        %v1876 = vld [vmem:[%s1870 + $0x28] sm:$0xff]
        %v1877 = vld [vmem:[%s1870 + $0x30] sm:$0xff]
        %v1878 = vld [vmem:[%s1870 + $0x38] sm:$0xff]
        %v1879 = vld [vmem:[%s1870 + $0x40] sm:$0xff]
        %v1880 = vld [vmem:[%s1870 + $0x48] sm:$0xff]
        %v1881 = vld [vmem:[%s1870 + $0x50] sm:$0xff]
        %v1882 = vld [vmem:[%s1870 + $0x58] sm:$0xff]
        %v1883 = vld [vmem:[%s1870 + $0x60] sm:$0xff]
        %v1884 = vld [vmem:[%s1870 + $0x68] sm:$0xff]
        %v1885 = vld [vmem:[%s1870 + $0x70] sm:$0xff]
        %v1886 = vld [vmem:[%s1870 + $0x78] sm:$0xff]
        %1887 = vmatprep.subr.mxu0 0.0
        %1888 = vmatpush1.msra.mxu0 %v1871
        %1889 = vmatprep.subr.mxu0 0.0
        %1890 = vmatpush1.msra.mxu0 %v1872
        %1891 = vmatprep.subr.mxu0 0.0
        %1892 = vmatpush1.msra.mxu0 %v1873
        %1893 = vmatprep.subr.mxu0 0.0
        %1894 = vmatpush1.msra.mxu0 %v1874
        %1895 = vmatprep.subr.mxu0 0.0
        %1896 = vmatpush1.msra.mxu0 %v1875
        %1897 = vmatprep.subr.mxu0 0.0
        %1898 = vmatpush1.msra.mxu0 %v1876
        %1899 = vmatprep.subr.mxu0 0.0
        %1900 = vmatpush1.msra.mxu0 %v1877
        %1901 = vmatprep.subr.mxu0 0.0
        %1902 = vmatpush1.msra.mxu0 %v1878
        %1903 = vmatprep.subr.mxu0 0.0
        %1904 = vmatpush1.msra.mxu0 %v1879
        %1905 = vmatprep.subr.mxu0 0.0
        %1906 = vmatpush1.msra.mxu0 %v1880
        %1907 = vmatprep.subr.mxu0 0.0
        %1908 = vmatpush1.msra.mxu0 %v1881
        %1909 = vmatprep.subr.mxu0 0.0
        %1910 = vmatpush1.msra.mxu0 %v1882
        %1911 = vmatprep.subr.mxu0 0.0
        %1912 = vmatpush1.msra.mxu0 %v1883
        %1913 = vmatprep.subr.mxu0 0.0
        %1914 = vmatpush1.msra.mxu0 %v1884
        %1915 = vmatprep.subr.mxu0 0.0
        %1916 = vmatpush1.msra.mxu0 %v1885
        %1917 = vmatprep.subr.mxu0 0.0
        %1918 = vmatpush1.msra.mxu0 %v1886
        %1919 = vmatprep.subr.mxu0 0.0
        %1920 = vmatpush1.msra.mxu0 0.0
        %1921 = vmatprep.subr.mxu0 0.0
        %1922 = vmatpush1.msra.mxu0 0.0
        %1923 = vmatprep.subr.mxu0 0.0
        %1924 = vmatpush1.msra.mxu0 0.0
        %1925 = vmatprep.subr.mxu0 0.0
        %1926 = vmatpush1.msra.mxu0 0.0
        %1927 = vmatprep.subr.mxu0 0.0
        %1928 = vmatpush1.msra.mxu0 0.0
        %1929 = vmatprep.subr.mxu0 0.0
        %1930 = vmatpush1.msra.mxu0 0.0
        %1931 = vmatprep.subr.mxu0 0.0
        %1932 = vmatpush1.msra.mxu0 0.0
        %1933 = vmatprep.subr.mxu0 0.0
        %1934 = vmatpush1.msra.mxu0 0.0
        %1935 = vmatprep.subr.mxu0 0.0
        %1936 = vmatpush1.msra.mxu0 0.0
        %1937 = vmatprep.subr.mxu0 0.0
        %1938 = vmatpush1.msra.mxu0 0.0
        %1939 = vmatprep.subr.mxu0 0.0
        %1940 = vmatpush1.msra.mxu0 0.0
        %1941 = vmatprep.subr.mxu0 0.0
        %1942 = vmatpush1.msra.mxu0 0.0
        %1943 = vmatprep.subr.mxu0 0.0
        %1944 = vmatpush1.msra.mxu0 0.0
        %1945 = vmatprep.subr.mxu0 0.0
        %1946 = vmatpush1.msra.mxu0 0.0
        %1947 = vmatprep.subr.mxu0 0.0
        %1948 = vmatpush1.msra.mxu0 0.0
        %1949 = vmatprep.subr.mxu0 0.0
        %1950 = vmatpush1.msra.mxu0 0.0
        %1951 = vmatprep.mubr.f32.mxu0 0.0
        %1952 = vmatmul.mubr.f32.gmra.mrb[0].mxu0 %v1865
        %v1953 = vpop.f32.mrb[0].mxu0
        %v1954 = vadd.f32 0.0, %v1953
        %v1955 = vpop.f32.mrb[0].mxu0
        %1956 = vmatprep.mubr.f32.mxu0 0.0
        %1957 = vmatmul.mubr.f32.gmra.mrb[0].mxu0 %v1866
        %v1958 = vpop.f32.mrb[0].mxu0
        %v1959 = vadd.f32 0.0, %v1958
        %v1960 = vpop.f32.mrb[0].mxu0
        %1961 = vmatprep.mubr.f32.mxu0 0.0
        %1962 = vmatmul.mubr.f32.gmra.mrb[0].mxu0 %v1867
        %v1963 = vpop.f32.mrb[0].mxu0
        %v1964 = vadd.f32 0.0, %v1963
        %v1965 = vpop.f32.mrb[0].mxu0
        %1966 = vmatprep.mubr.f32.mxu0 0.0
        %1967 = vmatmul.mubr.f32.gmra.mrb[0].mxu0 %v1868
        %v1968 = vpop.f32.mrb[0].mxu0
        %v1969 = vadd.f32 0.0, %v1968
        %v1970 = vpop.f32.mrb[0].mxu0
        %1971 = vmatprep.mubr.f32.mxu0 0.0
        %1972 = vmatmul.mubr.f32.gmra.mrb[0].mxu0 %v1869
        %v1973 = vpop.f32.mrb[0].mxu0
        %v1974 = vadd.f32 0.0, %v1973
        %v1975 = vpop.f32.mrb[0].mxu0
        %1976 = vdwg.mxu0
        %v1977 = vadd.f32 %v1860, %v1954
        %v1978 = vadd.f32 %v1861, %v1959
        %v1979 = vadd.f32 %v1862, %v1964
        %v1980 = vadd.f32 %v1863, %v1969
        %v1981 = vadd.f32 %v1864, %v1974
        %v1982 = vld [vmem:[#allocation2 + $0x14] sm:$0xff]
        %v1983 = vld [vmem:[#allocation2 + $0x1c] sm:$0xff]
        %v1984 = vld [vmem:[#allocation2 + $0x24] sm:$0xff]
        %v1985 = vld [vmem:[#allocation2 + $0x2c] sm:$0xff]
        %v1986 = vld [vmem:[#allocation2 + $0x34] sm:$0x3f]
        %s1987 = scalar_lea.vmem [#allocation8], 768
        %v1988 = vld [vmem:[%s1987] sm:$0xff]
        %v1989 = vld [vmem:[%s1987 + $0x8] sm:$0xff]
        %v1990 = vld [vmem:[%s1987 + $0x10] sm:$0xff]
        %v1991 = vld [vmem:[%s1987 + $0x18] sm:$0xff]
        %v1992 = vld [vmem:[%s1987 + $0x20] sm:$0xff]
        %v1993 = vld [vmem:[%s1987 + $0x28] sm:$0xff]
        %v1994 = vld [vmem:[%s1987 + $0x30] sm:$0xff]
        %v1995 = vld [vmem:[%s1987 + $0x38] sm:$0xff]
        %v1996 = vld [vmem:[%s1987 + $0x40] sm:$0xff]
        %v1997 = vld [vmem:[%s1987 + $0x48] sm:$0xff]
        %v1998 = vld [vmem:[%s1987 + $0x50] sm:$0xff]
        %v1999 = vld [vmem:[%s1987 + $0x58] sm:$0xff]
        %v2000 = vld [vmem:[%s1987 + $0x60] sm:$0xff]
        %v2001 = vld [vmem:[%s1987 + $0x68] sm:$0xff]
        %v2002 = vld [vmem:[%s1987 + $0x70] sm:$0xff]
        %v2003 = vld [vmem:[%s1987 + $0x78] sm:$0xff]
        %2004 = vmatprep.subr.mxu0 0.0
        %2005 = vmatpush1.msra.mxu0 %v1988
        %2006 = vmatprep.subr.mxu0 0.0
        %2007 = vmatpush1.msra.mxu0 %v1989
        %2008 = vmatprep.subr.mxu0 0.0
        %2009 = vmatpush1.msra.mxu0 %v1990
        %2010 = vmatprep.subr.mxu0 0.0
        %2011 = vmatpush1.msra.mxu0 %v1991
        %2012 = vmatprep.subr.mxu0 0.0
        %2013 = vmatpush1.msra.mxu0 %v1992
        %2014 = vmatprep.subr.mxu0 0.0
        %2015 = vmatpush1.msra.mxu0 %v1993
        %2016 = vmatprep.subr.mxu0 0.0
        %2017 = vmatpush1.msra.mxu0 %v1994
        %2018 = vmatprep.subr.mxu0 0.0
        %2019 = vmatpush1.msra.mxu0 %v1995
        %2020 = vmatprep.subr.mxu0 0.0
        %2021 = vmatpush1.msra.mxu0 %v1996
        %2022 = vmatprep.subr.mxu0 0.0
        %2023 = vmatpush1.msra.mxu0 %v1997
        %2024 = vmatprep.subr.mxu0 0.0
        %2025 = vmatpush1.msra.mxu0 %v1998
        %2026 = vmatprep.subr.mxu0 0.0
        %2027 = vmatpush1.msra.mxu0 %v1999
        %2028 = vmatprep.subr.mxu0 0.0
        %2029 = vmatpush1.msra.mxu0 %v2000
        %2030 = vmatprep.subr.mxu0 0.0
        %2031 = vmatpush1.msra.mxu0 %v2001
        %2032 = vmatprep.subr.mxu0 0.0
        %2033 = vmatpush1.msra.mxu0 %v2002
        %2034 = vmatprep.subr.mxu0 0.0
        %2035 = vmatpush1.msra.mxu0 %v2003
        %2036 = vmatprep.subr.mxu0 0.0
        %2037 = vmatpush1.msra.mxu0 0.0
        %2038 = vmatprep.subr.mxu0 0.0
        %2039 = vmatpush1.msra.mxu0 0.0
        %2040 = vmatprep.subr.mxu0 0.0
        %2041 = vmatpush1.msra.mxu0 0.0
        %2042 = vmatprep.subr.mxu0 0.0
        %2043 = vmatpush1.msra.mxu0 0.0
        %2044 = vmatprep.subr.mxu0 0.0
        %2045 = vmatpush1.msra.mxu0 0.0
        %2046 = vmatprep.subr.mxu0 0.0
        %2047 = vmatpush1.msra.mxu0 0.0
        %2048 = vmatprep.subr.mxu0 0.0
        %2049 = vmatpush1.msra.mxu0 0.0
        %2050 = vmatprep.subr.mxu0 0.0
        %2051 = vmatpush1.msra.mxu0 0.0
        %2052 = vmatprep.subr.mxu0 0.0
        %2053 = vmatpush1.msra.mxu0 0.0
        %2054 = vmatprep.subr.mxu0 0.0
        %2055 = vmatpush1.msra.mxu0 0.0
        %2056 = vmatprep.subr.mxu0 0.0
        %2057 = vmatpush1.msra.mxu0 0.0
        %2058 = vmatprep.subr.mxu0 0.0
        %2059 = vmatpush1.msra.mxu0 0.0
        %2060 = vmatprep.subr.mxu0 0.0
        %2061 = vmatpush1.msra.mxu0 0.0
        %2062 = vmatprep.subr.mxu0 0.0
        %2063 = vmatpush1.msra.mxu0 0.0
        %2064 = vmatprep.subr.mxu0 0.0
        %2065 = vmatpush1.msra.mxu0 0.0
        %2066 = vmatprep.subr.mxu0 0.0
        %2067 = vmatpush1.msra.mxu0 0.0
        %2068 = vmatprep.mubr.f32.mxu0 0.0
        %2069 = vmatmul.mubr.f32.gmra.mrb[0].mxu0 %v1982
        %v2070 = vpop.f32.mrb[0].mxu0
        %v2071 = vadd.f32 0.0, %v2070
        %v2072 = vpop.f32.mrb[0].mxu0
        %2073 = vmatprep.mubr.f32.mxu0 0.0
        %2074 = vmatmul.mubr.f32.gmra.mrb[0].mxu0 %v1983
        %v2075 = vpop.f32.mrb[0].mxu0
        %v2076 = vadd.f32 0.0, %v2075
        %v2077 = vpop.f32.mrb[0].mxu0
        %2078 = vmatprep.mubr.f32.mxu0 0.0
        %2079 = vmatmul.mubr.f32.gmra.mrb[0].mxu0 %v1984
        %v2080 = vpop.f32.mrb[0].mxu0
        %v2081 = vadd.f32 0.0, %v2080
        %v2082 = vpop.f32.mrb[0].mxu0
        %2083 = vmatprep.mubr.f32.mxu0 0.0
        %2084 = vmatmul.mubr.f32.gmra.mrb[0].mxu0 %v1985
        %v2085 = vpop.f32.mrb[0].mxu0
        %v2086 = vadd.f32 0.0, %v2085
        %v2087 = vpop.f32.mrb[0].mxu0
        %2088 = vmatprep.mubr.f32.mxu0 0.0
        %2089 = vmatmul.mubr.f32.gmra.mrb[0].mxu0 %v1986
        %v2090 = vpop.f32.mrb[0].mxu0
        %v2091 = vadd.f32 0.0, %v2090
        %v2092 = vpop.f32.mrb[0].mxu0
        %2093 = vdwg.mxu0
        %v2094 = vadd.f32 %v1977, %v2071
        %v2095 = vadd.f32 %v1978, %v2076
        %v2096 = vadd.f32 %v1979, %v2081
        %v2097 = vadd.f32 %v1980, %v2086
        %v2098 = vadd.f32 %v1981, %v2091
        %v2099 = vld [vmem:[#allocation2 + $0x15] sm:$0xff]
        %v2100 = vld [vmem:[#allocation2 + $0x1d] sm:$0xff]
        %v2101 = vld [vmem:[#allocation2 + $0x25] sm:$0xff]
        %v2102 = vld [vmem:[#allocation2 + $0x2d] sm:$0xff]
        %v2103 = vld [vmem:[#allocation2 + $0x35] sm:$0x3f]
        %s2104 = scalar_lea.vmem [#allocation8], 896
        %v2105 = vld [vmem:[%s2104] sm:$0xff]
        %v2106 = vld [vmem:[%s2104 + $0x8] sm:$0xff]
        %v2107 = vld [vmem:[%s2104 + $0x10] sm:$0xff]
        %v2108 = vld [vmem:[%s2104 + $0x18] sm:$0xff]
        %v2109 = vld [vmem:[%s2104 + $0x20] sm:$0xff]
        %v2110 = vld [vmem:[%s2104 + $0x28] sm:$0xff]
        %v2111 = vld [vmem:[%s2104 + $0x30] sm:$0xff]
        %v2112 = vld [vmem:[%s2104 + $0x38] sm:$0xff]
        %v2113 = vld [vmem:[%s2104 + $0x40] sm:$0xff]
        %v2114 = vld [vmem:[%s2104 + $0x48] sm:$0xff]
        %v2115 = vld [vmem:[%s2104 + $0x50] sm:$0xff]
        %v2116 = vld [vmem:[%s2104 + $0x58] sm:$0xff]
        %v2117 = vld [vmem:[%s2104 + $0x60] sm:$0xff]
        %v2118 = vld [vmem:[%s2104 + $0x68] sm:$0xff]
        %v2119 = vld [vmem:[%s2104 + $0x70] sm:$0xff]
        %v2120 = vld [vmem:[%s2104 + $0x78] sm:$0xff]
        %2121 = vmatprep.subr.mxu0 0.0
        %2122 = vmatpush1.msra.mxu0 %v2105
        %2123 = vmatprep.subr.mxu0 0.0
        %2124 = vmatpush1.msra.mxu0 %v2106
        %2125 = vmatprep.subr.mxu0 0.0
        %2126 = vmatpush1.msra.mxu0 %v2107
        %2127 = vmatprep.subr.mxu0 0.0
        %2128 = vmatpush1.msra.mxu0 %v2108
        %2129 = vmatprep.subr.mxu0 0.0
        %2130 = vmatpush1.msra.mxu0 %v2109
        %2131 = vmatprep.subr.mxu0 0.0
        %2132 = vmatpush1.msra.mxu0 %v2110
        %2133 = vmatprep.subr.mxu0 0.0
        %2134 = vmatpush1.msra.mxu0 %v2111
        %2135 = vmatprep.subr.mxu0 0.0
        %2136 = vmatpush1.msra.mxu0 %v2112
        %2137 = vmatprep.subr.mxu0 0.0
        %2138 = vmatpush1.msra.mxu0 %v2113
        %2139 = vmatprep.subr.mxu0 0.0
        %2140 = vmatpush1.msra.mxu0 %v2114
        %2141 = vmatprep.subr.mxu0 0.0
        %2142 = vmatpush1.msra.mxu0 %v2115
        %2143 = vmatprep.subr.mxu0 0.0
        %2144 = vmatpush1.msra.mxu0 %v2116
        %2145 = vmatprep.subr.mxu0 0.0
        %2146 = vmatpush1.msra.mxu0 %v2117
        %2147 = vmatprep.subr.mxu0 0.0
        %2148 = vmatpush1.msra.mxu0 %v2118
        %2149 = vmatprep.subr.mxu0 0.0
        %2150 = vmatpush1.msra.mxu0 %v2119
        %2151 = vmatprep.subr.mxu0 0.0
        %2152 = vmatpush1.msra.mxu0 %v2120
        %2153 = vmatprep.subr.mxu0 0.0
        %2154 = vmatpush1.msra.mxu0 0.0
        %2155 = vmatprep.subr.mxu0 0.0
        %2156 = vmatpush1.msra.mxu0 0.0
        %2157 = vmatprep.subr.mxu0 0.0
        %2158 = vmatpush1.msra.mxu0 0.0
        %2159 = vmatprep.subr.mxu0 0.0
        %2160 = vmatpush1.msra.mxu0 0.0
        %2161 = vmatprep.subr.mxu0 0.0
        %2162 = vmatpush1.msra.mxu0 0.0
        %2163 = vmatprep.subr.mxu0 0.0
        %2164 = vmatpush1.msra.mxu0 0.0
        %2165 = vmatprep.subr.mxu0 0.0
        %2166 = vmatpush1.msra.mxu0 0.0
        %2167 = vmatprep.subr.mxu0 0.0
        %2168 = vmatpush1.msra.mxu0 0.0
        %2169 = vmatprep.subr.mxu0 0.0
        %2170 = vmatpush1.msra.mxu0 0.0
        %2171 = vmatprep.subr.mxu0 0.0
        %2172 = vmatpush1.msra.mxu0 0.0
        %2173 = vmatprep.subr.mxu0 0.0
        %2174 = vmatpush1.msra.mxu0 0.0
        %2175 = vmatprep.subr.mxu0 0.0
        %2176 = vmatpush1.msra.mxu0 0.0
        %2177 = vmatprep.subr.mxu0 0.0
        %2178 = vmatpush1.msra.mxu0 0.0
        %2179 = vmatprep.subr.mxu0 0.0
        %2180 = vmatpush1.msra.mxu0 0.0
        %2181 = vmatprep.subr.mxu0 0.0
        %2182 = vmatpush1.msra.mxu0 0.0
        %2183 = vmatprep.subr.mxu0 0.0
        %2184 = vmatpush1.msra.mxu0 0.0
        %2185 = vmatprep.mubr.f32.mxu0 0.0
        %2186 = vmatmul.mubr.f32.gmra.mrb[0].mxu0 %v2099
        %v2187 = vpop.f32.mrb[0].mxu0
        %v2188 = vadd.f32 0.0, %v2187
        %v2189 = vpop.f32.mrb[0].mxu0
        %2190 = vmatprep.mubr.f32.mxu0 0.0
        %2191 = vmatmul.mubr.f32.gmra.mrb[0].mxu0 %v2100
        %v2192 = vpop.f32.mrb[0].mxu0
        %v2193 = vadd.f32 0.0, %v2192
        %v2194 = vpop.f32.mrb[0].mxu0
        %2195 = vmatprep.mubr.f32.mxu0 0.0
        %2196 = vmatmul.mubr.f32.gmra.mrb[0].mxu0 %v2101
        %v2197 = vpop.f32.mrb[0].mxu0
        %v2198 = vadd.f32 0.0, %v2197
        %v2199 = vpop.f32.mrb[0].mxu0
        %2200 = vmatprep.mubr.f32.mxu0 0.0
        %2201 = vmatmul.mubr.f32.gmra.mrb[0].mxu0 %v2102
        %v2202 = vpop.f32.mrb[0].mxu0
        %v2203 = vadd.f32 0.0, %v2202
        %v2204 = vpop.f32.mrb[0].mxu0
        %2205 = vmatprep.mubr.f32.mxu0 0.0
        %2206 = vmatmul.mubr.f32.gmra.mrb[0].mxu0 %v2103
        %v2207 = vpop.f32.mrb[0].mxu0
        %v2208 = vadd.f32 0.0, %v2207
        %v2209 = vpop.f32.mrb[0].mxu0
        %2210 = vdwg.mxu0
        %v2211 = vadd.f32 %v2094, %v2188
        %v2212 = vadd.f32 %v2095, %v2193
        %v2213 = vadd.f32 %v2096, %v2198
        %v2214 = vadd.f32 %v2097, %v2203
        %v2215 = vadd.f32 %v2098, %v2208
        %v2216 = vld [vmem:[#allocation2 + $0x16] sm:$0xff]
        %v2217 = vld [vmem:[#allocation2 + $0x1e] sm:$0xff]
        %v2218 = vld [vmem:[#allocation2 + $0x26] sm:$0xff]
        %v2219 = vld [vmem:[#allocation2 + $0x2e] sm:$0xff]
        %v2220 = vld [vmem:[#allocation2 + $0x36] sm:$0x3f]
        %s2221 = scalar_lea.vmem [#allocation8], 1024
        %v2222 = vld [vmem:[%s2221] sm:$0xff]
        %v2223 = vld [vmem:[%s2221 + $0x8] sm:$0xff]
        %v2224 = vld [vmem:[%s2221 + $0x10] sm:$0xff]
        %v2225 = vld [vmem:[%s2221 + $0x18] sm:$0xff]
        %v2226 = vld [vmem:[%s2221 + $0x20] sm:$0xff]
        %v2227 = vld [vmem:[%s2221 + $0x28] sm:$0xff]
        %v2228 = vld [vmem:[%s2221 + $0x30] sm:$0xff]
        %v2229 = vld [vmem:[%s2221 + $0x38] sm:$0xff]
        %v2230 = vld [vmem:[%s2221 + $0x40] sm:$0xff]
        %v2231 = vld [vmem:[%s2221 + $0x48] sm:$0xff]
        %v2232 = vld [vmem:[%s2221 + $0x50] sm:$0xff]
        %v2233 = vld [vmem:[%s2221 + $0x58] sm:$0xff]
        %v2234 = vld [vmem:[%s2221 + $0x60] sm:$0xff]
        %v2235 = vld [vmem:[%s2221 + $0x68] sm:$0xff]
        %v2236 = vld [vmem:[%s2221 + $0x70] sm:$0xff]
        %v2237 = vld [vmem:[%s2221 + $0x78] sm:$0xff]
        %2238 = vmatprep.subr.mxu0 0.0
        %2239 = vmatpush1.msra.mxu0 %v2222
        %2240 = vmatprep.subr.mxu0 0.0
        %2241 = vmatpush1.msra.mxu0 %v2223
        %2242 = vmatprep.subr.mxu0 0.0
        %2243 = vmatpush1.msra.mxu0 %v2224
        %2244 = vmatprep.subr.mxu0 0.0
        %2245 = vmatpush1.msra.mxu0 %v2225
        %2246 = vmatprep.subr.mxu0 0.0
        %2247 = vmatpush1.msra.mxu0 %v2226
        %2248 = vmatprep.subr.mxu0 0.0
        %2249 = vmatpush1.msra.mxu0 %v2227
        %2250 = vmatprep.subr.mxu0 0.0
        %2251 = vmatpush1.msra.mxu0 %v2228
        %2252 = vmatprep.subr.mxu0 0.0
        %2253 = vmatpush1.msra.mxu0 %v2229
        %2254 = vmatprep.subr.mxu0 0.0
        %2255 = vmatpush1.msra.mxu0 %v2230
        %2256 = vmatprep.subr.mxu0 0.0
        %2257 = vmatpush1.msra.mxu0 %v2231
        %2258 = vmatprep.subr.mxu0 0.0
        %2259 = vmatpush1.msra.mxu0 %v2232
        %2260 = vmatprep.subr.mxu0 0.0
        %2261 = vmatpush1.msra.mxu0 %v2233
        %2262 = vmatprep.subr.mxu0 0.0
        %2263 = vmatpush1.msra.mxu0 %v2234
        %2264 = vmatprep.subr.mxu0 0.0
        %2265 = vmatpush1.msra.mxu0 %v2235
        %2266 = vmatprep.subr.mxu0 0.0
        %2267 = vmatpush1.msra.mxu0 %v2236
        %2268 = vmatprep.subr.mxu0 0.0
        %2269 = vmatpush1.msra.mxu0 %v2237
        %2270 = vmatprep.subr.mxu0 0.0
        %2271 = vmatpush1.msra.mxu0 0.0
        %2272 = vmatprep.subr.mxu0 0.0
        %2273 = vmatpush1.msra.mxu0 0.0
        %2274 = vmatprep.subr.mxu0 0.0
        %2275 = vmatpush1.msra.mxu0 0.0
        %2276 = vmatprep.subr.mxu0 0.0
        %2277 = vmatpush1.msra.mxu0 0.0
        %2278 = vmatprep.subr.mxu0 0.0
        %2279 = vmatpush1.msra.mxu0 0.0
        %2280 = vmatprep.subr.mxu0 0.0
        %2281 = vmatpush1.msra.mxu0 0.0
        %2282 = vmatprep.subr.mxu0 0.0
        %2283 = vmatpush1.msra.mxu0 0.0
        %2284 = vmatprep.subr.mxu0 0.0
        %2285 = vmatpush1.msra.mxu0 0.0
        %2286 = vmatprep.subr.mxu0 0.0
        %2287 = vmatpush1.msra.mxu0 0.0
        %2288 = vmatprep.subr.mxu0 0.0
        %2289 = vmatpush1.msra.mxu0 0.0
        %2290 = vmatprep.subr.mxu0 0.0
        %2291 = vmatpush1.msra.mxu0 0.0
        %2292 = vmatprep.subr.mxu0 0.0
        %2293 = vmatpush1.msra.mxu0 0.0
        %2294 = vmatprep.subr.mxu0 0.0
        %2295 = vmatpush1.msra.mxu0 0.0
        %2296 = vmatprep.subr.mxu0 0.0
        %2297 = vmatpush1.msra.mxu0 0.0
        %2298 = vmatprep.subr.mxu0 0.0
        %2299 = vmatpush1.msra.mxu0 0.0
        %2300 = vmatprep.subr.mxu0 0.0
        %2301 = vmatpush1.msra.mxu0 0.0
        %2302 = vmatprep.mubr.f32.mxu0 0.0
        %2303 = vmatmul.mubr.f32.gmra.mrb[0].mxu0 %v2216
        %v2304 = vpop.f32.mrb[0].mxu0
        %v2305 = vadd.f32 0.0, %v2304
        %v2306 = vpop.f32.mrb[0].mxu0
        %2307 = vmatprep.mubr.f32.mxu0 0.0
        %2308 = vmatmul.mubr.f32.gmra.mrb[0].mxu0 %v2217
        %v2309 = vpop.f32.mrb[0].mxu0
        %v2310 = vadd.f32 0.0, %v2309
        %v2311 = vpop.f32.mrb[0].mxu0
        %2312 = vmatprep.mubr.f32.mxu0 0.0
        %2313 = vmatmul.mubr.f32.gmra.mrb[0].mxu0 %v2218
        %v2314 = vpop.f32.mrb[0].mxu0
        %v2315 = vadd.f32 0.0, %v2314
        %v2316 = vpop.f32.mrb[0].mxu0
        %2317 = vmatprep.mubr.f32.mxu0 0.0
        %2318 = vmatmul.mubr.f32.gmra.mrb[0].mxu0 %v2219
        %v2319 = vpop.f32.mrb[0].mxu0
        %v2320 = vadd.f32 0.0, %v2319
        %v2321 = vpop.f32.mrb[0].mxu0
        %2322 = vmatprep.mubr.f32.mxu0 0.0
        %2323 = vmatmul.mubr.f32.gmra.mrb[0].mxu0 %v2220
        %v2324 = vpop.f32.mrb[0].mxu0
        %v2325 = vadd.f32 0.0, %v2324
        %v2326 = vpop.f32.mrb[0].mxu0
        %2327 = vdwg.mxu0
        %v2328 = vadd.f32 %v2211, %v2305
        %v2329 = vadd.f32 %v2212, %v2310
        %v2330 = vadd.f32 %v2213, %v2315
        %v2331 = vadd.f32 %v2214, %v2320
        %v2332 = vadd.f32 %v2215, %v2325
        %v2333 = vld [vmem:[%s187] sm:$0xff]
        %v2334 = vadd.f32 %v2333, %v2328
        %2335 = vst [vmem:[%s217] sm:$0xff] %v2334
        %v2336 = vld [vmem:[%s228] sm:$0xff]
        %vm2339 = vcmask 1045504
        %v2340 = vrot.slane %v2329, 2
        %v2341 = vrot.slane %v2330, 2
        %v2342 = vsel %vm2339, %v2340, %v2341
        %v2344 = vadd.f32 %v2336, %v2342
        %s2345 = scalar_lea.vmem %s217, 8 [#allocation9]
        %2346 = vst [vmem:[%s2345] sm:$0xff] %v2344
        %v2347 = vld [vmem:[%s231] sm:$0xff]
        %vm2349 = vcmask 1043456
        %v2350 = vrot.slane %v2330, 4
        %v2351 = vrot.slane %v2331, 4
        %v2352 = vsel %vm2349, %v2350, %v2351
        %v2354 = vadd.f32 %v2347, %v2352
        %s2355 = scalar_lea.vmem %s217, 16 [#allocation9]
        %2356 = vst [vmem:[%s2355] sm:$0xff] %v2354
        %v2357 = vld [vmem:[%s234] sm:$0xff]
        %vm2359 = vcmask 1041408
        %v2360 = vrot.slane %v2331, 6
        %v2361 = vrot.slane %v2332, 6
        %v2362 = vsel %vm2359, %v2360, %v2361
        %v2364 = vadd.f32 %v2357, %v2362
        %s2365 = scalar_lea.vmem %s217, 24 [#allocation9]
        %2366 = vst [vmem:[%s2365] sm:$0xff] %v2364
        %s2367 = sand.u32 %s97, 1
        %s2368 = scalar_lea.sflag [#allocation5], %s2367
        %s2369 = sand.u32 %s97, 1
        %s2370 = smul.addr %s2369, 32
        %s2371 = scalar_lea.vmem [#allocation9], %s2370
        // Predicated region
        $region45: #{tpu_custom_call.1} parent=31 // pred_check
          %p2372 = pneg %p107
        $region46: #{tpu_custom_call.1} parent=31 // pred_check_branch
          %2374 = sbr.rel (%p2372) target = $region48
        $region47: #{tpu_custom_call.1} parent=31 // pred_region
          %s2376 = ssub.s32 512, 512
          %2377 = vsyncadd %s2368, %s2376
          %s2378 = smul.addr %s21, 4
          %s2379 = smul.addr %s2378, 128
          %s2380 = scalar_lea.hbm %s3, %s2379
          %s2381 = sshll.u32 %s2371, 4
          %s2382 = int_to_ptr.vmem [resolvable:$true] %s2381
          %2387 = dma.vmem_to_hbm [thread:$0]  %s2382, 512, %s2380, %s2368, 128, 128, 8
        $region48: #{tpu_custom_call.1} parent=31 // pred_fallthru
          _
      $region32: #{tpu_custom_call.1} parent=5 // pred_fallthru
        _
      %p2388 = scmp.le.s32.totalorder 2, %s16
      // Predicated region
      $region49: #{tpu_custom_call.1} parent=5 // pred_check
        %p2389 = pneg %p2388
      $region50: #{tpu_custom_call.1} parent=5 // pred_check_branch
        %2391 = sbr.rel (%p2389) target = $region52
      $region51: #{tpu_custom_call.1} parent=5 // pred_region
        %s2392 = ssub.s32 %s16, 2
        // Predicated region
        $region53: #{tpu_custom_call.1} parent=51 // pred_check
          %p2393 = pneg %p113
        $region54: #{tpu_custom_call.1} parent=51 // pred_check_branch
          %2395 = sbr.rel (%p2393) target = $region56
        $region55: #{tpu_custom_call.1} parent=51 // pred_region
          %s2396 = sand.u32 %s98, 1
          %s2397 = scalar_lea.sflag [#allocation5], %s2396
          %s2398 = sand.u32 %s98, 1
          %s2399 = smul.addr %s2398, 32
          %s2400 = scalar_lea.vmem [#allocation9], %s2399
          %2401 = dma.done %s2397, 512
        $region56: #{tpu_custom_call.1} parent=51 // pred_fallthru
          _
      $region52: #{tpu_custom_call.1} parent=5 // pred_fallthru
        _
    $region6: #{tpu_custom_call.1} parent=1 // loop_footer
      %s20 = sadd.s32 1, %s16
    $region7: #{tpu_custom_call.1} parent=1 // loop_footer_branch
      %15 = sbr.rel target = $region3
    $region8: #{tpu_custom_call.1} parent=1 // loop_exit
      _
    %2402 = vsyncpa [#allocation4], 1
    %s2403 = scalar_lea.sflag [#allocation4], 1
    %2404 = vsyncpa %s2403, 1
    %2405 = vsyncpa [#allocation7], 1
    %2406 = vsyncpa [#allocation5], 1
    %s2407 = scalar_lea.sflag [#allocation5], 1
    %2408 = vsyncpa %s2407, 1

</llo_original>
